<compile_context>
chip_gen: v6e
topology: v6e:2x2x1
jax: 0.10.0
libtpu: 0.0.40
codegen_flags: <defaults>
</compile_context>

<pallas_src>
import functools

import jax
import jax.numpy as jnp
from jax.experimental import pallas as pl
from jax.experimental.pallas import tpu as pltpu


def _head_kernel(hs_ref, mask_ref, den_ref, w1_ref, b1_ref, w2_ref, b2_ref, w3_ref, b3_ref,
                 out_ref, acc_ref):
    """Grid (batch tiles, seq tiles). The seq axis is a reduction into acc_ref (f32)."""
    s = pl.program_id(1)

    @pl.when(s == 0)
    def _init():
        acc_ref[...] = jnp.zeros_like(acc_ref)

    # Masked partial sum: cast the hs tile to f32 first (v5e's VPU has no bf16 path),
    # multiply by the {0,1} mask broadcast over H, reduce over the tile's sequence axis.
    hs = hs_ref[...].astype(jnp.float32)                      # (tb, ts, H)
    m = mask_ref[...]                                         # (tb, ts) f32 in {0,1}
    acc_ref[...] += jnp.sum(hs * m[:, :, None], axis=1)       # (tb, H) f32

    @pl.when(s == pl.num_programs(1) - 1)
    def _finalize():
        # mean_pooled = sum(hs * mask) / sum(mask); denominator precomputed in the wrapper.
        pooled = acc_ref[...] / den_ref[...]                  # (tb, H) f32; 0/0 -> NaN (as torch)

        # regression_head: Linear(H,2048) -> ReLU -> Linear(2048,512) -> ReLU
        #                  -> Linear(512,1) -> Sigmoid ; then *5
        h1 = jnp.dot(pooled.astype(jnp.bfloat16), w1_ref[...],
                     preferred_element_type=jnp.float32) + b1_ref[...]
        h1 = jnp.maximum(h1, 0.0)                             # (tb, 2048) f32
        h2 = jnp.dot(h1.astype(jnp.bfloat16), w2_ref[...],
                     preferred_element_type=jnp.float32) + b2_ref[...]
        h2 = jnp.maximum(h2, 0.0)                             # (tb, 512) f32
        # Linear(512 -> 1) as a VPU multiply + lane reduce (avoids an N=1 MXU matmul).
        logits = jnp.sum(h2 * w3_ref[...], axis=-1, keepdims=True) + b3_ref[...]
        out_ref[...] = (jax.nn.sigmoid(logits) * 5.0).astype(out_ref.dtype)


def _tpu_vmem_capacity():
    try:
        return int(pltpu.get_tpu_info().vmem_capacity_bytes)
    except Exception:
        return 64 << 20          # conservative fallback (v7x per-core)


def _vmem_limit_bytes():
    """Scoped VMEM budget (~48 MiB on v7x, ~96 MiB on v5e/v6e)."""
    return min((_tpu_vmem_capacity() * 3) // 4, 100 << 20)


def _hs_tile_budget_bytes():
    """Per-buffer hidden-state tile budget (~32 MiB on 128 MiB v5e/v6e, ~16 MiB on 64 MiB v7x)."""
    return min(max(_tpu_vmem_capacity() // 4, 4 << 20), 32 << 20)


def _pick_tiles(B, S, H, hs_itemsize, budget_bytes):
    """Pick (tb, ts).

    ts is a multiple of 128 (keeps the 2-D mask block lane-aligned and >= the bf16 sublane
    minimum) or the full S; when the hidden-state tile would exceed the VMEM budget we shrink
    tb rather than ts. tb prefers >= 2 batch tiles so the 'parallel' axis spans both v7x TCs.
    """
    bt_cands = [t for t in (128, 64, 32, 16, 8) if B % t == 0]
    if not bt_cands:
        bt_cands = [B]                                        # ragged / tiny batch
    multi = [t for t in bt_cands if B // t >= 2]
    bt_cands = multi or bt_cands

    def seq_tile(tb):
        if S % 128 != 0:
            return S                                          # ragged sequence: single full tile
        per_pos = max(tb * H * hs_itemsize, 1)
        ts = max(128, (budget_bytes // per_pos) // 128 * 128)
        ts = min(ts, S)
        while S % ts != 0:
            ts -= 128
        return ts

    for tb in bt_cands:
        ts = seq_tile(tb)
        if tb * ts * H * hs_itemsize <= budget_bytes:
            return tb, ts
    tb = bt_cands[-1]
    return tb, seq_tile(tb)


def _as_dtype(x, dt):
    return x if x.dtype == dt else x.astype(dt)


def regression_head_pallas(last_hidden_state, attention_mask, head_params, *, tb=None, ts=None):
    """last_hidden_state: (B, S, H) (bf16 or f32); attention_mask: (B, S) -> (B, 1) f32."""
    B, S, H = last_hidden_state.shape
    w1, b1, w2, b2, w3, b3 = head_params
    # All of these are no-ops when params come from prepare_params() (one-time cast there).
    w1 = _as_dtype(w1, jnp.bfloat16)
    w2 = _as_dtype(w2, jnp.bfloat16)
    b1 = _as_dtype(b1.reshape(1, -1), jnp.float32)
    b2 = _as_dtype(b2.reshape(1, -1), jnp.float32)
    w3 = _as_dtype(w3.reshape(1, -1), jnp.float32)            # (1, 512) row for the lane reduce
    b3 = _as_dtype(b3.reshape(1, 1), jnp.float32)
    D1 = w1.shape[1]
    D2 = w2.shape[1]

    if tb is None or ts is None:
        auto_tb, auto_ts = _pick_tiles(B, S, H, last_hidden_state.dtype.itemsize,
                                       _hs_tile_budget_bytes())
        tb = auto_tb if tb is None else tb
        ts = auto_ts if ts is None else ts

    assert B % tb == 0 and S % ts == 0
    assert tb % 8 == 0 or tb == B, "batch tile must be a multiple of 8 or the full batch"
    assert ts % 128 == 0 or ts == S, "sequence tile must be a multiple of 128 or the full S"

    # Lane-dense 2-D mask; per-row denominator is only B scalars so compute it here.
    mask2d = attention_mask.astype(jnp.float32)               # (B, S)
    den = jnp.sum(mask2d, axis=1, keepdims=True)              # (B, 1); 0 -> NaN downstream

    grid = (B // tb, S // ts)
    const = lambda b, s: (0, 0)                               # weights/biases VMEM-resident

    grid_spec = pltpu.PrefetchScalarGridSpec(
        num_scalar_prefetch=0,
        grid=grid,
        in_specs=[
            pl.BlockSpec((tb, ts, H), lambda b, s: (b, s, 0)),   # hidden states (native dtype)
            pl.BlockSpec((tb, ts), lambda b, s: (b, s)),         # mask, 2-D lane-aligned
            pl.BlockSpec((tb, 1), lambda b, s: (b, 0)),          # per-row mask sum
            pl.BlockSpec((H, D1), const),                        # w1 (bf16, resident)
            pl.BlockSpec((1, D1), const),                        # b1 (f32)
            pl.BlockSpec((D1, D2), const),                       # w2 (bf16, resident)
            pl.BlockSpec((1, D2), const),                        # b2 (f32)
            pl.BlockSpec((1, D2), const),                        # w3 row (f32)
            pl.BlockSpec((1, 1), const),                         # b3 (f32)
        ],
        out_specs=pl.BlockSpec((tb, 1), lambda b, s: (b, 0)),
        scratch_shapes=[pltpu.VMEM((tb, H), jnp.float32)],       # masked-sum accumulator
    )

    return pl.pallas_call(
        _head_kernel,
        out_shape=jax.ShapeDtypeStruct((B, 1), jnp.float32),
        grid_spec=grid_spec,
        compiler_params=pltpu.CompilerParams(
            dimension_semantics=("parallel", "arbitrary"),
            vmem_limit_bytes=_vmem_limit_bytes(),
        ),
    )(last_hidden_state, mask2d, den, w1, b1, w2, b2, w3, b3)


def init_params(key, hidden_size, d1=2048, d2=512):
    """f32 master copy of the regression head: H -> 2048 -> 512 -> 1."""
    k1, k2, k3 = jax.random.split(key, 3)
    w1 = jax.random.normal(k1, (hidden_size, d1), jnp.float32) * (1.0 / jnp.sqrt(hidden_size))
    b1 = jnp.zeros((d1,), jnp.float32)
    w2 = jax.random.normal(k2, (d1, d2), jnp.float32) * (1.0 / jnp.sqrt(d1))
    b2 = jnp.zeros((d2,), jnp.float32)
    w3 = jax.random.normal(k3, (d2, 1), jnp.float32) * (1.0 / jnp.sqrt(d2))
    b3 = jnp.zeros((1,), jnp.float32)
    return (w1, b1, w2, b2, w3, b3)


def prepare_params(params):
    """One-time cast/reshape to kernel-ready dtypes/layouts (outside the per-call path)."""
    w1, b1, w2, b2, w3, b3 = params
    return (w1.astype(jnp.bfloat16),
            b1.reshape(1, -1).astype(jnp.float32),
            w2.astype(jnp.bfloat16),
            b2.reshape(1, -1).astype(jnp.float32),
            w3.reshape(1, -1).astype(jnp.float32),
            b3.reshape(1, 1).astype(jnp.float32))


def synthetic_backbone(input_ids, embed_table):
    """Stand-in for AutoModel(...).last_hidden_state: embedding lookup (plain-JAX glue)."""
    return embed_table[input_ids]                              # (B, S, H), dtype of embed_table


def forward(input_ids, attention_mask, embed_table, head_params, *, tb=None, ts=None):
    last_hidden_state = synthetic_backbone(input_ids, embed_table)     # (B, S, H)
    return regression_head_pallas(last_hidden_state, attention_mask, head_params, tb=tb, ts=ts)


if __name__ == "__main__":
    # Small shapes; S=256 with ts=128 exercises a 2-step sequence reduction.
    B, S, H, VOCAB = 2, 256, 32, 64

    root = jax.random.PRNGKey(0)
    k_ids, k_emb, k_head = jax.random.split(root, 3)

    input_ids = jax.random.randint(k_ids, (B, S), 0, VOCAB, dtype=jnp.int32)
    # row 0 fully attended, row 1 has 100 trailing padding tokens
    attention_mask = jnp.concatenate(
        [jnp.ones((1, S), jnp.int32),
         jnp.concatenate([jnp.ones((1, S - 100), jnp.int32),
                          jnp.zeros((1, 100), jnp.int32)], axis=1)], axis=0)

    # bf16 embedding table => the synthetic backbone emits bf16 hidden states directly
    embed_table = (jax.random.normal(k_emb, (VOCAB, H), jnp.float32) * 0.02).astype(jnp.bfloat16)
    params = prepare_params(init_params(k_head, H))   # cast/reshape once, outside per-call path

    fwd = jax.jit(functools.partial(forward, tb=B, ts=128))
    preds = jax.block_until_ready(fwd(input_ids, attention_mask, embed_table, params))

    # pure-JAX reference using the same mixed precision as the kernel
    hs = embed_table[input_ids].astype(jnp.float32)
    m = attention_mask.astype(jnp.float32)
    pooled = (hs * m[:, :, None]).sum(axis=1) / m.sum(axis=1, keepdims=True)
    w1, b1, w2, b2, w3, b3 = params
    h1 = jnp.maximum(jnp.dot(pooled.astype(jnp.bfloat16), w1,
                             preferred_element_type=jnp.float32) + b1, 0.0)
    h2 = jnp.maximum(jnp.dot(h1.astype(jnp.bfloat16), w2,
                             preferred_element_type=jnp.float32) + b2, 0.0)
    ref = jax.nn.sigmoid(jnp.sum(h2 * w3, axis=-1, keepdims=True) + b3) * 5.0

    assert preds.shape == (B, 1)
    assert jnp.allclose(preds, ref, atol=2e-3, rtol=2e-3)
    print("KERNEL_OK")
</pallas_src>

<mosaic_0001>
module attributes {stable_mosaic.version = 11 : i64} {
  func.func @_head_kernel(%arg0: i32, %arg1: i32, %arg2: memref<2x128x32xbf16, #tpu.memory_space<vmem>>, %arg3: memref<2x128xf32, #tpu.memory_space<vmem>>, %arg4: memref<2x1xf32, #tpu.memory_space<vmem>>, %arg5: memref<32x2048xbf16, #tpu.memory_space<vmem>>, %arg6: memref<1x2048xf32, #tpu.memory_space<vmem>>, %arg7: memref<2048x512xbf16, #tpu.memory_space<vmem>>, %arg8: memref<1x512xf32, #tpu.memory_space<vmem>>, %arg9: memref<1x512xf32, #tpu.memory_space<vmem>>, %arg10: memref<1x1xf32, #tpu.memory_space<vmem>>, %arg11: memref<2x1xf32, #tpu.memory_space<vmem>>, %arg12: memref<2x32xf32, #tpu.memory_space<vmem>>) attributes {dimension_semantics = [#tpu.dimension_semantics<parallel>, #tpu.dimension_semantics<arbitrary>], iteration_bounds = array<i64: 1, 2>, scalar_prefetch = 0 : i64, scratch_operands = 1 : i64, tpu.core_type = #tpu.core_type<tc>, window_params = [{transform_indices = @transform_0, window_bounds = array<i64: 2, 128, 32>}, {transform_indices = @transform_1, window_bounds = array<i64: 2, 128>}, {transform_indices = @transform_2, window_bounds = array<i64: 2, 1>}, {pipeline_mode = #tpu.pipeline_mode<synchronous>, transform_indices = @transform_3, window_bounds = array<i64: 32, 2048>}, {pipeline_mode = #tpu.pipeline_mode<synchronous>, transform_indices = @transform_4, window_bounds = array<i64: 1, 2048>}, {pipeline_mode = #tpu.pipeline_mode<synchronous>, transform_indices = @transform_5, window_bounds = array<i64: 2048, 512>}, {pipeline_mode = #tpu.pipeline_mode<synchronous>, transform_indices = @transform_6, window_bounds = array<i64: 1, 512>}, {pipeline_mode = #tpu.pipeline_mode<synchronous>, transform_indices = @transform_7, window_bounds = array<i64: 1, 512>}, {pipeline_mode = #tpu.pipeline_mode<synchronous>, transform_indices = @transform_8, window_bounds = array<i64: 1, 1>}, {transform_indices = @transform_9, window_bounds = array<i64: 2, 1>}]} {
    %c0_i32 = arith.constant 0 : i32
    %0 = arith.cmpi eq, %arg1, %c0_i32 : i32
    %1 = arith.extui %0 : i1 to i32
    %c0_i32_0 = arith.constant 0 : i32
    %2 = arith.cmpi ne, %1, %c0_i32_0 : i32
    scf.if %2 {
      %cst_10 = arith.constant 0.000000e+00 : f32
      %16 = vector.broadcast %cst_10 : f32 to vector<2x32xf32>
      %c0_11 = arith.constant 0 : index
      %c0_12 = arith.constant 0 : index
      %17 = vector.load %arg12[%c0_11, %c0_12] : memref<2x32xf32, #tpu.memory_space<vmem>>, vector<2x32xf32>
      tpu.vector_store %arg12[%c0_11, %c0_12], %16 {strides = array<i32>} : memref<2x32xf32, #tpu.memory_space<vmem>>, vector<2x32xf32>,
    } else {
    }
    %c0 = arith.constant 0 : index
    %c0_1 = arith.constant 0 : index
    %c0_2 = arith.constant 0 : index
    %3 = vector.load %arg2[%c0, %c0_1, %c0_2] : memref<2x128x32xbf16, #tpu.memory_space<vmem>>, vector<2x128x32xbf16>
    %4 = arith.extf %3 : vector<2x128x32xbf16> to vector<2x128x32xf32>
    %c0_3 = arith.constant 0 : index
    %c0_4 = arith.constant 0 : index
    %5 = vector.load %arg3[%c0_3, %c0_4] : memref<2x128xf32, #tpu.memory_space<vmem>>, vector<2x128xf32>
    %c0_5 = arith.constant 0 : index
    %c0_6 = arith.constant 0 : index
    %6 = vector.load %arg12[%c0_5, %c0_6] : memref<2x32xf32, #tpu.memory_space<vmem>>, vector<2x32xf32>
    %7 = vector.shape_cast %5 : vector<2x128xf32> to vector<2x128x1xf32>
    %8 = vector.broadcast %7 : vector<2x128x1xf32> to vector<2x128x32xf32>
    %9 = arith.mulf %4, %8 : vector<2x128x32xf32>
    %cst = arith.constant dense<0.000000e+00> : vector<2x32xf32>
    %10 = vector.multi_reduction <add>, %9, %cst [1] : vector<2x128x32xf32> to vector<2x32xf32>
    %11 = arith.addf %6, %10 : vector<2x32xf32>
    %c0_7 = arith.constant 0 : index
    %c0_8 = arith.constant 0 : index
    %12 = vector.load %arg12[%c0_7, %c0_8] : memref<2x32xf32, #tpu.memory_space<vmem>>, vector<2x32xf32>
    tpu.vector_store %arg12[%c0_7, %c0_8], %11 {strides = array<i32>} : memref<2x32xf32, #tpu.memory_space<vmem>>, vector<2x32xf32>,
    %c1_i32 = arith.constant 1 : i32
    %13 = arith.cmpi eq, %arg1, %c1_i32 : i32
    %14 = arith.extui %13 : i1 to i32
    %c0_i32_9 = arith.constant 0 : i32
    %15 = arith.cmpi ne, %14, %c0_i32_9 : i32
    scf.if %15 {
      %c0_10 = arith.constant 0 : index
      %c0_11 = arith.constant 0 : index
      %16 = vector.load %arg12[%c0_10, %c0_11] : memref<2x32xf32, #tpu.memory_space<vmem>>, vector<2x32xf32>
      %c0_12 = arith.constant 0 : index
      %c0_13 = arith.constant 0 : index
      %17 = vector.load %arg4[%c0_12, %c0_13] : memref<2x1xf32, #tpu.memory_space<vmem>>, vector<2x1xf32>
      %18 = vector.broadcast %17 : vector<2x1xf32> to vector<2x32xf32>
      %19 = arith.divf %16, %18 : vector<2x32xf32>
      %20 = arith.truncf %19 : vector<2x32xf32> to vector<2x32xbf16>
      %c0_14 = arith.constant 0 : index
      %c0_15 = arith.constant 0 : index
      %21 = vector.load %arg5[%c0_14, %c0_15] : memref<32x2048xbf16, #tpu.memory_space<vmem>>, vector<32x2048xbf16>
      %cst_16 = arith.constant dense<0.000000e+00> : vector<2x2048xf32>
      %22 = tpu.matmul %20, %21, %cst_16 {dimension_numbers = #tpu.dot_dimension_numbers<[1], [0], [0], [1], [0, 0, 1, 1], [], []>} : vector<2x32xbf16>, vector<32x2048xbf16>, vector<2x2048xf32> -> vector<2x2048xf32>
      %c0_17 = arith.constant 0 : index
      %c0_18 = arith.constant 0 : index
      %23 = vector.load %arg6[%c0_17, %c0_18] : memref<1x2048xf32, #tpu.memory_space<vmem>>, vector<1x2048xf32>
      %24 = vector.broadcast %23 : vector<1x2048xf32> to vector<2x2048xf32>
      %25 = arith.addf %22, %24 : vector<2x2048xf32>
      %cst_19 = arith.constant 0.000000e+00 : f32
      %26 = vector.broadcast %cst_19 : f32 to vector<2x2048xf32>
      %27 = arith.maximumf %25, %26 : vector<2x2048xf32>
      %28 = arith.truncf %27 : vector<2x2048xf32> to vector<2x2048xbf16>
      %c0_20 = arith.constant 0 : index
      %c0_21 = arith.constant 0 : index
      %29 = vector.load %arg7[%c0_20, %c0_21] : memref<2048x512xbf16, #tpu.memory_space<vmem>>, vector<2048x512xbf16>
      %cst_22 = arith.constant dense<0.000000e+00> : vector<2x512xf32>
      %30 = tpu.matmul %28, %29, %cst_22 {dimension_numbers = #tpu.dot_dimension_numbers<[1], [0], [0], [1], [0, 0, 1, 1], [], []>} : vector<2x2048xbf16>, vector<2048x512xbf16>, vector<2x512xf32> -> vector<2x512xf32>
      %c0_23 = arith.constant 0 : index
      %c0_24 = arith.constant 0 : index
      %31 = vector.load %arg8[%c0_23, %c0_24] : memref<1x512xf32, #tpu.memory_space<vmem>>, vector<1x512xf32>
      %32 = vector.broadcast %31 : vector<1x512xf32> to vector<2x512xf32>
      %33 = arith.addf %30, %32 : vector<2x512xf32>
      %cst_25 = arith.constant 0.000000e+00 : f32
      %34 = vector.broadcast %cst_25 : f32 to vector<2x512xf32>
      %35 = arith.maximumf %33, %34 : vector<2x512xf32>
      %c0_26 = arith.constant 0 : index
      %c0_27 = arith.constant 0 : index
      %36 = vector.load %arg9[%c0_26, %c0_27] : memref<1x512xf32, #tpu.memory_space<vmem>>, vector<1x512xf32>
      %37 = vector.broadcast %36 : vector<1x512xf32> to vector<2x512xf32>
      %38 = arith.mulf %35, %37 : vector<2x512xf32>
      %cst_28 = arith.constant dense<0.000000e+00> : vector<2xf32>
      %39 = vector.multi_reduction <add>, %38, %cst_28 [1] : vector<2x512xf32> to vector<2xf32>
      %40 = vector.shape_cast %39 : vector<2xf32> to vector<2x1xf32>
      %c0_29 = arith.constant 0 : index
      %c0_30 = arith.constant 0 : index
      %41 = vector.load %arg10[%c0_29, %c0_30] : memref<1x1xf32, #tpu.memory_space<vmem>>, vector<1x1xf32>
      %42 = vector.broadcast %41 : vector<1x1xf32> to vector<2x1xf32>
      %43 = arith.addf %40, %42 : vector<2x1xf32>
      %44 = arith.negf %43 : vector<2x1xf32>
      %45 = math.exp %44 : vector<2x1xf32>
      %cst_31 = arith.constant 1.000000e+00 : f32
      %46 = vector.broadcast %cst_31 : f32 to vector<2x1xf32>
      %47 = arith.addf %46, %45 : vector<2x1xf32>
      %48 = arith.divf %46, %47 : vector<2x1xf32>
      %cst_32 = arith.constant 5.000000e+00 : f32
      %49 = vector.broadcast %cst_32 : f32 to vector<2x1xf32>
      %50 = arith.mulf %48, %49 : vector<2x1xf32>
      %c0_33 = arith.constant 0 : index
      %c0_34 = arith.constant 0 : index
      %51 = vector.load %arg11[%c0_33, %c0_34] : memref<2x1xf32, #tpu.memory_space<vmem>>, vector<2x1xf32>
      tpu.vector_store %arg11[%c0_33, %c0_34], %50 {strides = array<i32>} : memref<2x1xf32, #tpu.memory_space<vmem>>, vector<2x1xf32>,
    } else {
    }
    return
  }
  func.func @transform_0(%arg0: i32, %arg1: i32) -> (i32, i32, i32) {
    %c0_i32 = arith.constant 0 : i32
    %c0_i32_0 = arith.constant 0 : i32
    return %arg0, %arg1, %c0_i32 : i32, i32, i32
  }
  func.func @transform_1(%arg0: i32, %arg1: i32) -> (i32, i32) {
    %c0_i32 = arith.constant 0 : i32
    return %arg0, %arg1 : i32, i32
  }
  func.func @transform_2(%arg0: i32, %arg1: i32) -> (i32, i32) {
    %c0_i32 = arith.constant 0 : i32
    %c0_i32_0 = arith.constant 0 : i32
    return %arg0, %c0_i32 : i32, i32
  }
  func.func @transform_3(%arg0: i32, %arg1: i32) -> (i32, i32) {
    %c0_i32 = arith.constant 0 : i32
    %c0_i32_0 = arith.constant 0 : i32
    %c0_i32_1 = arith.constant 0 : i32
    return %c0_i32, %c0_i32_0 : i32, i32
  }
  func.func @transform_4(%arg0: i32, %arg1: i32) -> (i32, i32) {
    %c0_i32 = arith.constant 0 : i32
    %c0_i32_0 = arith.constant 0 : i32
    %c0_i32_1 = arith.constant 0 : i32
    return %c0_i32, %c0_i32_0 : i32, i32
  }
  func.func @transform_5(%arg0: i32, %arg1: i32) -> (i32, i32) {
    %c0_i32 = arith.constant 0 : i32
    %c0_i32_0 = arith.constant 0 : i32
    %c0_i32_1 = arith.constant 0 : i32
    return %c0_i32, %c0_i32_0 : i32, i32
  }
  func.func @transform_6(%arg0: i32, %arg1: i32) -> (i32, i32) {
    %c0_i32 = arith.constant 0 : i32
    %c0_i32_0 = arith.constant 0 : i32
    %c0_i32_1 = arith.constant 0 : i32
    return %c0_i32, %c0_i32_0 : i32, i32
  }
  func.func @transform_7(%arg0: i32, %arg1: i32) -> (i32, i32) {
    %c0_i32 = arith.constant 0 : i32
    %c0_i32_0 = arith.constant 0 : i32
    %c0_i32_1 = arith.constant 0 : i32
    return %c0_i32, %c0_i32_0 : i32, i32
  }
  func.func @transform_8(%arg0: i32, %arg1: i32) -> (i32, i32) {
    %c0_i32 = arith.constant 0 : i32
    %c0_i32_0 = arith.constant 0 : i32
    %c0_i32_1 = arith.constant 0 : i32
    return %c0_i32, %c0_i32_0 : i32, i32
  }
  func.func @transform_9(%arg0: i32, %arg1: i32) -> (i32, i32) {
    %c0_i32 = arith.constant 0 : i32
    %c0_i32_0 = arith.constant 0 : i32
    return %arg0, %c0_i32 : i32, i32
  }
}

</mosaic_0001>

<llo_original>
// kernel: forward.1
$region0: #{forward.1}
  #allocation0 [shape = 'u32[]', space=smem, size = 0x4, offset = 0x4, fixed_abs, tag = 'smem constant byte address 0x4 - core index']
  #allocation1 [shape = 'u32[144,128]{1,0:T(1,128)}', space=vmem, size = 0x12000, scoped, tag = 'internal scratch']
  #allocation2 [shape = 'f32[2,32]{1,0:T(2,128)}', space=vmem, size = 0x400, scoped, tag = 'scratch operand']
  #allocation3 [shape = 'f32[1,1]{1,0:T(1,128)S(1)}', space=vmem, size = 0x200, scoped, tag = 'scoped memory for forward.1']
  %s0 = inlined_call_operand.vmem [shape: bf16[2,256,32], index: 0, kind: input, shape index: {}]
  %s1 = inlined_call_operand.vmem [shape: f32[2,256], index: 1, kind: input, shape index: {}]
  %s2 = inlined_call_operand.vmem [shape: f32[2,1], index: 2, kind: input, shape index: {}]
  %s3 = inlined_call_operand.hbm [shape: bf16[32,2048], index: 3, kind: input, shape index: {}]
  %s4 = inlined_call_operand.hbm [shape: f32[1,2048], index: 4, kind: input, shape index: {}]
  %s5 = inlined_call_operand.hbm [shape: bf16[2048,512], index: 5, kind: input, shape index: {}]
  %s6 = inlined_call_operand.hbm [shape: f32[1,512], index: 6, kind: input, shape index: {}]
  %s7 = inlined_call_operand.hbm [shape: f32[1,512], index: 7, kind: input, shape index: {}]
  %s8 = inlined_call_operand.<no memory space> [shape: f32[1,1], index: 8, kind: input, shape index: {}]
  %s9 = inlined_call_operand.vmem [shape: f32[2,1], index: 9, kind: output, shape index: {}]
  %s10 = sld [smem:[#allocation0]]
  $region138: #{forward.1} parent=0
    _
  %s12 = ssub.s32 1, %s10
  %s13 = scalar_select 0, %s12, %s10
  %v14 = vstv %s8
  %15 = vst [vmem:[#allocation3] sm:$0x1] %v14
  $region1: #{forward.1} parent=0
    #allocation4 [shape = 'u8[131072]{0}', space=vmem, size = 0x20000, scoped, tag = 'input window, operand 0']
    #allocation5 [shape = 'u8[131072]{0}', space=vmem, size = 0x20000, scoped, tag = 'input window, operand 3, single buffered']
    #allocation6 [shape = 's32[2]{0}', space=sflag, size = 0x8, scoped, tag = 'scoped memory for forward.1']
    #allocation7 [shape = 'u8[8192]{0}', space=vmem, size = 0x2000, scoped, tag = 'input window, operand 4, single buffered']
    #allocation8 [shape = 's32[1]{0}', space=sflag, size = 0x4, scoped, tag = 'scoped memory for forward.1']
    #allocation9 [shape = 'u8[2097152]{0}', space=vmem, size = 0x200000, scoped, tag = 'input window, operand 5, single buffered']
    #allocation10 [shape = 'u8[2048]{0}', space=vmem, size = 0x800, scoped, tag = 'input window, operand 6, single buffered']
    #allocation11 [shape = 's32[1]{0}', space=sflag, size = 0x4, scoped, tag = 'scoped memory for forward.1']
    #allocation12 [shape = 'u8[2048]{0}', space=vmem, size = 0x800, scoped, tag = 'input window, operand 7, single buffered']
    %16 = vsyncpa [#allocation6], 0
    %17 = vsyncpa [#allocation8], 0
    %18 = vsyncpa [#allocation11], 0
    loop: start=0, step=1, limit=4
    $region2: #{forward.1} parent=1 // loop_pre_header
      _
    $region3: #{forward.1} parent=1 // loop_header
      %s20 = sphi 0, %s24
      %p21 = scmp.ge.s32.totalorder %s20, 4
      %s27 = sphi 0, %s39
      %s28 = sphi 0, %s35
      %s29 = sphi 0, %s27
      %s30 = sphi 0, %s28
      %s31 = sphi 0, %s29
      %s32 = sphi 0, %s30
      %s44 = sphi 0, %s46
      %s47 = sphi 0, %s44
      %s48 = sphi 0, %s47
      %s64 = sphi 0, %s48
      %s72 = sphi 0, %s74
      %s75 = sphi 0, %s72
      %s76 = sphi 0, %s75
      %s92 = sphi 0, %s76
      %s98 = sphi 0, %s100
      %s101 = sphi 0, %s98
      %s102 = sphi 0, %s101
      %s118 = sphi 0, %s102
      %s122 = sphi 0, %s122
      %s124 = sphi 0, %s122
      %s125 = sphi 0, %s124
      %s139 = sphi 0, %s125
      %s143 = sphi 0, %s143
      %s145 = sphi 0, %s143
      %s146 = sphi 0, %s145
      %s160 = sphi 0, %s146
      %s164 = sphi 0, %s164
      %s166 = sphi 0, %s164
      %s167 = sphi 0, %s166
      %s181 = sphi 0, %s167
      %s185 = sphi 0, %s185
      %s187 = sphi 0, %s185
      %s188 = sphi 0, %s187
      %s202 = sphi 0, %s188
      %s206 = sphi 0, %s206
      %s208 = sphi 0, %s206
      %s209 = sphi 0, %s208
      %s223 = sphi 0, %s209
      %s227 = sphi 0, %s227
      %s229 = sphi 0, %s227
      %s230 = sphi 0, %s229
      %s244 = sphi 0, %s230
      %s250 = sphi 0, %s252
      %s253 = sphi 0, %s250
      %s254 = sphi 0, %s253
      %s270 = sphi 0, %s254
    $region4: #{forward.1} parent=1 // loop_header_branch
      %23 = sbr.rel (%p21) target = $region8
    $region5: #{forward.1} parent=1 // loop_body
      %s25 = ssub.s32 %s20, 1
      %s26 = ssub.s32 %s20, 2
      %s33 = sadd.s32 1, %s28
      %p34 = scmp.ge.s32.totalorder %s33, 2
      %s35 = scalar_select %p34, 0, %s33
      %s36 = sadd.s32 1, %s27
      %s37 = scalar_select %p34, %s36, %s27
      %p38 = scmp.ge.s32.totalorder %s37, 1
      %s39 = scalar_select %p38, 0, %s37
      %s40 = ssub.s32 %s27, %s39
      %s41 = ssub.s32 %s28, %s35
      %s42 = sor.u32 %s40, %s41
      %p43 = scmp.eq.s32.totalorder %s42, 0
      %s45 = sadd.s32 %s44, 1
      %s46 = scalar_select %p43, %s44, %s45
      %p49 = pneg %p43
      %p50 = scmp.eq.s32.totalorder %s20, 1
      %p51 = por %p49, %p50
      %p52 = scmp.ne.s32.totalorder %s44, %s47
      %p53 = scmp.eq.s32.totalorder %s20, 0
      %p54 = por %p52, %p53
      %p55 = scmp.ne.s32.totalorder %s44, %s47
      %p56 = scmp.eq.s32.totalorder %s25, 1
      %p57 = por %p55, %p56
      %p58 = scmp.ne.s32.totalorder %s47, %s48
      %p59 = scmp.eq.s32.totalorder %s25, 0
      %p60 = por %p58, %p59
      %p61 = scmp.ne.s32.totalorder %s47, %s48
      %p62 = scmp.eq.s32.totalorder %s26, 1
      %p63 = por %p61, %p62
      %p65 = scmp.ne.s32.totalorder %s48, %s64
      %p66 = scmp.eq.s32.totalorder %s26, 0
      %p67 = por %p65, %p66
      %s68 = ssub.s32 %s27, %s39
      %s69 = ssub.s32 %s28, %s35
      %s70 = sor.u32 %s68, %s69
      %p71 = scmp.eq.s32.totalorder %s70, 0
      %s73 = sadd.s32 %s72, 1
      %s74 = scalar_select %p71, %s72, %s73
      %p77 = pneg %p71
      %p78 = scmp.eq.s32.totalorder %s20, 1
      %p79 = por %p77, %p78
      %p80 = scmp.ne.s32.totalorder %s72, %s75
      %p81 = scmp.eq.s32.totalorder %s20, 0
      %p82 = por %p80, %p81
      %p83 = scmp.ne.s32.totalorder %s72, %s75
      %p84 = scmp.eq.s32.totalorder %s25, 1
      %p85 = por %p83, %p84
      %p86 = scmp.ne.s32.totalorder %s75, %s76
      %p87 = scmp.eq.s32.totalorder %s25, 0
      %p88 = por %p86, %p87
      %p89 = scmp.ne.s32.totalorder %s75, %s76
      %p90 = scmp.eq.s32.totalorder %s26, 1
      %p91 = por %p89, %p90
      %p93 = scmp.ne.s32.totalorder %s76, %s92
      %p94 = scmp.eq.s32.totalorder %s26, 0
      %p95 = por %p93, %p94
      %s96 = ssub.s32 %s27, %s39
      %p97 = scmp.eq.s32.totalorder %s96, 0
      %s99 = sadd.s32 %s98, 1
      %s100 = scalar_select %p97, %s98, %s99
      %p103 = pneg %p97
      %p104 = scmp.eq.s32.totalorder %s20, 1
      %p105 = por %p103, %p104
      %p106 = scmp.ne.s32.totalorder %s98, %s101
      %p107 = scmp.eq.s32.totalorder %s20, 0
      %p108 = por %p106, %p107
      %p109 = scmp.ne.s32.totalorder %s98, %s101
      %p110 = scmp.eq.s32.totalorder %s25, 1
      %p111 = por %p109, %p110
      %p112 = scmp.ne.s32.totalorder %s101, %s102
      %p113 = scmp.eq.s32.totalorder %s25, 0
      %p114 = por %p112, %p113
      %p115 = scmp.ne.s32.totalorder %s101, %s102
      %p116 = scmp.eq.s32.totalorder %s26, 1
      %p117 = por %p115, %p116
      %p119 = scmp.ne.s32.totalorder %s102, %s118
      %p120 = scmp.eq.s32.totalorder %s26, 0
      %p121 = por %p119, %p120
      %s123 = sadd.s32 %s122, 1
      %p126 = scmp.eq.s32.totalorder %s20, 1
      %p127 = scmp.ne.s32.totalorder %s122, %s124
      %p128 = scmp.eq.s32.totalorder %s20, 0
      %p129 = por %p127, %p128
      %p130 = scmp.ne.s32.totalorder %s122, %s124
      %p131 = scmp.eq.s32.totalorder %s25, 1
      %p132 = por %p130, %p131
      %p133 = scmp.ne.s32.totalorder %s124, %s125
      %p134 = scmp.eq.s32.totalorder %s25, 0
      %p135 = por %p133, %p134
      %p136 = scmp.ne.s32.totalorder %s124, %s125
      %p137 = scmp.eq.s32.totalorder %s26, 1
      %p138 = por %p136, %p137
      %p140 = scmp.ne.s32.totalorder %s125, %s139
      %p141 = scmp.eq.s32.totalorder %s26, 0
      %p142 = por %p140, %p141
      %s144 = sadd.s32 %s143, 1
      %p147 = scmp.eq.s32.totalorder %s20, 1
      %p148 = scmp.ne.s32.totalorder %s143, %s145
      %p149 = scmp.eq.s32.totalorder %s20, 0
      %p150 = por %p148, %p149
      %p151 = scmp.ne.s32.totalorder %s143, %s145
      %p152 = scmp.eq.s32.totalorder %s25, 1
      %p153 = por %p151, %p152
      %p154 = scmp.ne.s32.totalorder %s145, %s146
      %p155 = scmp.eq.s32.totalorder %s25, 0
      %p156 = por %p154, %p155
      %p157 = scmp.ne.s32.totalorder %s145, %s146
      %p158 = scmp.eq.s32.totalorder %s26, 1
      %p159 = por %p157, %p158
      %p161 = scmp.ne.s32.totalorder %s146, %s160
      %p162 = scmp.eq.s32.totalorder %s26, 0
      %p163 = por %p161, %p162
      %s165 = sadd.s32 %s164, 1
      %p168 = scmp.eq.s32.totalorder %s20, 1
      %p169 = scmp.ne.s32.totalorder %s164, %s166
      %p170 = scmp.eq.s32.totalorder %s20, 0
      %p171 = por %p169, %p170
      %p172 = scmp.ne.s32.totalorder %s164, %s166
      %p173 = scmp.eq.s32.totalorder %s25, 1
      %p174 = por %p172, %p173
      %p175 = scmp.ne.s32.totalorder %s166, %s167
      %p176 = scmp.eq.s32.totalorder %s25, 0
      %p177 = por %p175, %p176
      %p178 = scmp.ne.s32.totalorder %s166, %s167
      %p179 = scmp.eq.s32.totalorder %s26, 1
      %p180 = por %p178, %p179
      %p182 = scmp.ne.s32.totalorder %s167, %s181
      %p183 = scmp.eq.s32.totalorder %s26, 0
      %p184 = por %p182, %p183
      %s186 = sadd.s32 %s185, 1
      %p189 = scmp.eq.s32.totalorder %s20, 1
      %p190 = scmp.ne.s32.totalorder %s185, %s187
      %p191 = scmp.eq.s32.totalorder %s20, 0
      %p192 = por %p190, %p191
      %p193 = scmp.ne.s32.totalorder %s185, %s187
      %p194 = scmp.eq.s32.totalorder %s25, 1
      %p195 = por %p193, %p194
      %p196 = scmp.ne.s32.totalorder %s187, %s188
      %p197 = scmp.eq.s32.totalorder %s25, 0
      %p198 = por %p196, %p197
      %p199 = scmp.ne.s32.totalorder %s187, %s188
      %p200 = scmp.eq.s32.totalorder %s26, 1
      %p201 = por %p199, %p200
      %p203 = scmp.ne.s32.totalorder %s188, %s202
      %p204 = scmp.eq.s32.totalorder %s26, 0
      %p205 = por %p203, %p204
      %s207 = sadd.s32 %s206, 1
      %p210 = scmp.eq.s32.totalorder %s20, 1
      %p211 = scmp.ne.s32.totalorder %s206, %s208
      %p212 = scmp.eq.s32.totalorder %s20, 0
      %p213 = por %p211, %p212
      %p214 = scmp.ne.s32.totalorder %s206, %s208
      %p215 = scmp.eq.s32.totalorder %s25, 1
      %p216 = por %p214, %p215
      %p217 = scmp.ne.s32.totalorder %s208, %s209
      %p218 = scmp.eq.s32.totalorder %s25, 0
      %p219 = por %p217, %p218
      %p220 = scmp.ne.s32.totalorder %s208, %s209
      %p221 = scmp.eq.s32.totalorder %s26, 1
      %p222 = por %p220, %p221
      %p224 = scmp.ne.s32.totalorder %s209, %s223
      %p225 = scmp.eq.s32.totalorder %s26, 0
      %p226 = por %p224, %p225
      %s228 = sadd.s32 %s227, 1
      %p231 = scmp.eq.s32.totalorder %s20, 1
      %p232 = scmp.ne.s32.totalorder %s227, %s229
      %p233 = scmp.eq.s32.totalorder %s20, 0
      %p234 = por %p232, %p233
      %p235 = scmp.ne.s32.totalorder %s227, %s229
      %p236 = scmp.eq.s32.totalorder %s25, 1
      %p237 = por %p235, %p236
      %p238 = scmp.ne.s32.totalorder %s229, %s230
      %p239 = scmp.eq.s32.totalorder %s25, 0
      %p240 = por %p238, %p239
      %p241 = scmp.ne.s32.totalorder %s229, %s230
      %p242 = scmp.eq.s32.totalorder %s26, 1
      %p243 = por %p241, %p242
      %p245 = scmp.ne.s32.totalorder %s230, %s244
      %p246 = scmp.eq.s32.totalorder %s26, 0
      %p247 = por %p245, %p246
      %s248 = ssub.s32 %s27, %s39
      %p249 = scmp.eq.s32.totalorder %s248, 0
      %s251 = sadd.s32 %s250, 1
      %s252 = scalar_select %p249, %s250, %s251
      %p255 = pneg %p249
      %p256 = scmp.eq.s32.totalorder %s20, 1
      %p257 = por %p255, %p256
      %p258 = scmp.ne.s32.totalorder %s250, %s253
      %p259 = scmp.eq.s32.totalorder %s20, 0
      %p260 = por %p258, %p259
      %p261 = scmp.ne.s32.totalorder %s250, %s253
      %p262 = scmp.eq.s32.totalorder %s25, 1
      %p263 = por %p261, %p262
      %p264 = scmp.ne.s32.totalorder %s253, %s254
      %p265 = scmp.eq.s32.totalorder %s25, 0
      %p266 = por %p264, %p265
      %p267 = scmp.ne.s32.totalorder %s253, %s254
      %p268 = scmp.eq.s32.totalorder %s26, 1
      %p269 = por %p267, %p268
      %p271 = scmp.ne.s32.totalorder %s254, %s270
      %p272 = scmp.eq.s32.totalorder %s26, 0
      %p273 = por %p271, %p272
      %p274 = scmp.le.s32.totalorder 1, %s20
      %p275 = scmp.lt.s32.totalorder %s20, 3
      %p276 = pnand %p274, %p275
      %p277 = pneg %p276
      // Predicated region
      $region9: #{forward.1} parent=5 // pred_check
        _
      $region10: #{forward.1} parent=5 // pred_check_branch
        %279 = sbr.rel (%p276) target = $region12
      $region11: #{forward.1} parent=5 // pred_region
        %s280 = ssub.s32 %s20, 1
        // Predicated region
        $region13: #{forward.1} parent=11 // pred_check
          %p281 = pneg %p114
        $region14: #{forward.1} parent=11 // pred_check_branch
          %283 = sbr.rel (%p281) target = $region16
        $region15: #{forward.1} parent=11 // pred_region
          %p284 = scmp.lt.s32.totalorder %s29, 0
          %s285 = scalar_select %p284, %s29, 0
          %s286 = smul.addr %s285, 2
          %s287 = scalar_lea.vmem %s2, %s286
        $region16: #{forward.1} parent=11 // pred_fallthru
          _
        // Predicated region
        $region17: #{forward.1} parent=11 // pred_check
          %p288 = pneg %p135
        $region18: #{forward.1} parent=11 // pred_check_branch
          %290 = sbr.rel (%p288) target = $region20
        $region19: #{forward.1} parent=11 // pred_region
          %s292 = ssub.s32 4096, 4096
          %293 = vsyncadd [#allocation6], %s292
          %s294 = sshll.u32 [#allocation5], 4
          %s295 = int_to_ptr.vmem [resolvable:$true] %s294
          %300 = dma.hbm_to_vmem [thread:$0]  %s3, 4096, %s295, [#allocation6], 1024, 1024, 64
        $region20: #{forward.1} parent=11 // pred_fallthru
          _
        // Predicated region
        $region21: #{forward.1} parent=11 // pred_check
          %p301 = pneg %p156
        $region22: #{forward.1} parent=11 // pred_check_branch
          %303 = sbr.rel (%p301) target = $region24
        $region23: #{forward.1} parent=11 // pred_region
          %s305 = ssub.s32 256, 256
          %306 = vsyncadd [#allocation8], %s305
          %s308 = sshll.u32 [#allocation7], 4
          %s309 = int_to_ptr.vmem [resolvable:$true] %s308
          %311 = dma.hbm_to_vmem [thread:$0]  %s4, 256, %s309, [#allocation8]
        $region24: #{forward.1} parent=11 // pred_fallthru
          _
        // Predicated region
        $region25: #{forward.1} parent=11 // pred_check
          %p312 = pneg %p177
        $region26: #{forward.1} parent=11 // pred_check_branch
          %314 = sbr.rel (%p312) target = $region28
        $region27: #{forward.1} parent=11 // pred_region
          %s316 = ssub.s32 65536, 65536
          %317 = vsyncadd [#allocation8], %s316
          %s318 = sshll.u32 [#allocation9], 4
          %s319 = int_to_ptr.vmem [resolvable:$true] %s318
          %324 = dma.hbm_to_vmem [thread:$0]  %s5, 65536, %s319, [#allocation8], 256, 256, 16
        $region28: #{forward.1} parent=11 // pred_fallthru
          _
        // Predicated region
        $region29: #{forward.1} parent=11 // pred_check
          %p325 = pneg %p198
        $region30: #{forward.1} parent=11 // pred_check_branch
          %327 = sbr.rel (%p325) target = $region32
        $region31: #{forward.1} parent=11 // pred_region
          %s329 = ssub.s32 64, 64
          %330 = vsyncadd [#allocation11], %s329
          %s332 = sshll.u32 [#allocation10], 4
          %s333 = int_to_ptr.vmem [resolvable:$true] %s332
          %335 = dma.hbm_to_vmem [thread:$0]  %s6, 64, %s333, [#allocation11]
        $region32: #{forward.1} parent=11 // pred_fallthru
          _
        // Predicated region
        $region33: #{forward.1} parent=11 // pred_check
          %p336 = pneg %p219
        $region34: #{forward.1} parent=11 // pred_check_branch
          %338 = sbr.rel (%p336) target = $region36
        $region35: #{forward.1} parent=11 // pred_region
          %s340 = ssub.s32 64, 64
          %341 = vsyncadd [#allocation11], %s340
          %s343 = sshll.u32 [#allocation12], 4
          %s344 = int_to_ptr.vmem [resolvable:$true] %s343
          %346 = dma.hbm_to_vmem [thread:$0]  %s7, 64, %s344, [#allocation11]
        $region36: #{forward.1} parent=11 // pred_fallthru
          _
        // Predicated region
        $region37: #{forward.1} parent=11 // pred_check
          %p347 = pneg %p240
        $region38: #{forward.1} parent=11 // pred_check_branch
          %349 = sbr.rel (%p347) target = $region40
        $region39: #{forward.1} parent=11 // pred_region
          _
        $region40: #{forward.1} parent=11 // pred_fallthru
          _
      $region12: #{forward.1} parent=5 // pred_fallthru
        _
      %p350 = scmp.lt.s32.totalorder %s20, 2
      // Predicated region
      $region41: #{forward.1} parent=5 // pred_check
        %p351 = pneg %p350
      $region42: #{forward.1} parent=5 // pred_check_branch
        %353 = sbr.rel (%p351) target = $region44
      $region43: #{forward.1} parent=5 // pred_region
        // Predicated region
        $region45: #{forward.1} parent=43 // pred_check
          %p354 = pneg %p54
        $region46: #{forward.1} parent=43 // pred_check_branch
          %356 = sbr.rel (%p354) target = $region48
        $region47: #{forward.1} parent=43 // pred_region
          %s357 = sand.u32 %s44, 1
          %s358 = sand.u32 %s44, 1
          %s359 = smul.addr %s358, 128
          %s360 = scalar_lea.vmem [#allocation4], %s359
          %s361 = smul.u32 2, %s27
          %s362 = smul.u32 16, %s28
          %s363 = smul.addr %s361, 32
          %s364 = sadd.s32 %s362, %s363
          %s365 = smul.addr %s364, 4
          %s366 = scalar_lea.vmem %s0, %s365
          // Predicated region
          $region49: #{forward.1} parent=47 // pred_check
            _
          $region50: #{forward.1} parent=47 // pred_check_branch
            %368 = sbr.rel (0) target = $region52
          $region51: #{forward.1} parent=47 // pred_region
            // Predicated region
            $region53: #{forward.1} parent=51 // pred_check
              _
            $region54: #{forward.1} parent=51 // pred_check_branch
              %370 = sbr.rel target = $region56
            $region55: #{forward.1} parent=51 // pred_region
              // Predicated region
              $region68: #{forward.1} parent=55 // pred_check
                _
              $region69: #{forward.1} parent=55 // pred_check_branch
                %448 = sbr.rel (0) target = $region71
              $region70: #{forward.1} parent=55 // pred_region
                loop: start=0, step=1, limit=1
                $region72: #{forward.1} parent=70 // loop_pre_header
                  _
                $region73: #{forward.1} parent=70 // loop_header
                  %s450 = sphi 0, %s454
                  %p451 = scmp.ge.s32.totalorder %s450, 1
                  %s455 = sphi %s366, %s366
                  %s456 = sphi %s360, %s360
                $region74: #{forward.1} parent=70 // loop_header_branch
                  %453 = sbr.rel (%p451) target = $region78
                $region75: #{forward.1} parent=70 // loop_body
                  _
                $region76: #{forward.1} parent=70 // loop_footer
                  %s454 = sadd.s32 1, %s450
                $region77: #{forward.1} parent=70 // loop_footer_branch
                  %449 = sbr.rel target = $region73
                $region78: #{forward.1} parent=70 // loop_exit
                  _
                %s458 = ssub.s32 16, 1
                loop: start=0, step=1, limit=1
                $region79: #{forward.1} parent=70 // loop_pre_header
                  _
                $region80: #{forward.1} parent=70 // loop_header
                  %s460 = sphi 0, %s464
                  %p461 = scmp.ge.s32.totalorder %s460, 1
                  %s465 = sphi %s366, %s366
                  %s466 = sphi %s360, %s360
                $region81: #{forward.1} parent=70 // loop_header_branch
                  %463 = sbr.rel (%p461) target = $region85
                $region82: #{forward.1} parent=70 // loop_body
                  %v467 = vld [vmem:[%s465] sm:%s458]
                  %468 = vst [vmem:[%s466] sm:%s458] %v467
                  %v469 = vld [vmem:[%s465 + $0x4] sm:%s458]
                  %470 = vst [vmem:[%s466 + $0x4] sm:%s458] %v469
                  %v471 = vld [vmem:[%s465 + $0x8] sm:%s458]
                  %472 = vst [vmem:[%s466 + $0x8] sm:%s458] %v471
                  %v473 = vld [vmem:[%s465 + $0xc] sm:%s458]
                  %474 = vst [vmem:[%s466 + $0xc] sm:%s458] %v473
                  %v475 = vld [vmem:[%s465 + $0x10] sm:%s458]
                  %476 = vst [vmem:[%s466 + $0x10] sm:%s458] %v475
                  %v477 = vld [vmem:[%s465 + $0x14] sm:%s458]
                  %478 = vst [vmem:[%s466 + $0x14] sm:%s458] %v477
                  %v479 = vld [vmem:[%s465 + $0x18] sm:%s458]
                  %480 = vst [vmem:[%s466 + $0x18] sm:%s458] %v479
                  %v481 = vld [vmem:[%s465 + $0x1c] sm:%s458]
                  %482 = vst [vmem:[%s466 + $0x1c] sm:%s458] %v481
                  %v483 = vld [vmem:[%s465 + $0x20] sm:%s458]
                  %484 = vst [vmem:[%s466 + $0x20] sm:%s458] %v483
                  %v485 = vld [vmem:[%s465 + $0x24] sm:%s458]
                  %486 = vst [vmem:[%s466 + $0x24] sm:%s458] %v485
                  %v487 = vld [vmem:[%s465 + $0x28] sm:%s458]
                  %488 = vst [vmem:[%s466 + $0x28] sm:%s458] %v487
                  %v489 = vld [vmem:[%s465 + $0x2c] sm:%s458]
                  %490 = vst [vmem:[%s466 + $0x2c] sm:%s458] %v489
                  %v491 = vld [vmem:[%s465 + $0x30] sm:%s458]
                  %492 = vst [vmem:[%s466 + $0x30] sm:%s458] %v491
                  %v493 = vld [vmem:[%s465 + $0x34] sm:%s458]
                  %494 = vst [vmem:[%s466 + $0x34] sm:%s458] %v493
                  %v495 = vld [vmem:[%s465 + $0x38] sm:%s458]
                  %496 = vst [vmem:[%s466 + $0x38] sm:%s458] %v495
                  %v497 = vld [vmem:[%s465 + $0x3c] sm:%s458]
                  %498 = vst [vmem:[%s466 + $0x3c] sm:%s458] %v497
                  %v499 = vld [vmem:[%s465 + $0x80] sm:%s458]
                  %500 = vst [vmem:[%s466 + $0x40] sm:%s458] %v499
                  %v501 = vld [vmem:[%s465 + $0x84] sm:%s458]
                  %502 = vst [vmem:[%s466 + $0x44] sm:%s458] %v501
                  %v503 = vld [vmem:[%s465 + $0x88] sm:%s458]
                  %504 = vst [vmem:[%s466 + $0x48] sm:%s458] %v503
                  %v505 = vld [vmem:[%s465 + $0x8c] sm:%s458]
                  %506 = vst [vmem:[%s466 + $0x4c] sm:%s458] %v505
                  %v507 = vld [vmem:[%s465 + $0x90] sm:%s458]
                  %508 = vst [vmem:[%s466 + $0x50] sm:%s458] %v507
                  %v509 = vld [vmem:[%s465 + $0x94] sm:%s458]
                  %510 = vst [vmem:[%s466 + $0x54] sm:%s458] %v509
                  %v511 = vld [vmem:[%s465 + $0x98] sm:%s458]
                  %512 = vst [vmem:[%s466 + $0x58] sm:%s458] %v511
                  %v513 = vld [vmem:[%s465 + $0x9c] sm:%s458]
                  %514 = vst [vmem:[%s466 + $0x5c] sm:%s458] %v513
                  %v515 = vld [vmem:[%s465 + $0xa0] sm:%s458]
                  %516 = vst [vmem:[%s466 + $0x60] sm:%s458] %v515
                  %v517 = vld [vmem:[%s465 + $0xa4] sm:%s458]
                  %518 = vst [vmem:[%s466 + $0x64] sm:%s458] %v517
                  %v519 = vld [vmem:[%s465 + $0xa8] sm:%s458]
                  %520 = vst [vmem:[%s466 + $0x68] sm:%s458] %v519
                  %v521 = vld [vmem:[%s465 + $0xac] sm:%s458]
                  %522 = vst [vmem:[%s466 + $0x6c] sm:%s458] %v521
                  %v523 = vld [vmem:[%s465 + $0xb0] sm:%s458]
                  %524 = vst [vmem:[%s466 + $0x70] sm:%s458] %v523
                  %v525 = vld [vmem:[%s465 + $0xb4] sm:%s458]
                  %526 = vst [vmem:[%s466 + $0x74] sm:%s458] %v525
                  %v527 = vld [vmem:[%s465 + $0xb8] sm:%s458]
                  %528 = vst [vmem:[%s466 + $0x78] sm:%s458] %v527
                  %v529 = vld [vmem:[%s465 + $0xbc] sm:%s458]
                  %530 = vst [vmem:[%s466 + $0x7c] sm:%s458] %v529
                $region83: #{forward.1} parent=70 // loop_footer
                  %s464 = sadd.s32 1, %s460
                $region84: #{forward.1} parent=70 // loop_footer_branch
                  %459 = sbr.rel target = $region80
                $region85: #{forward.1} parent=70 // loop_exit
                  _
              $region71: #{forward.1} parent=55 // pred_fallthru
                _
            $region56: #{forward.1} parent=51 // pred_fallthru
              _
            // Predicated region
            $region57: #{forward.1} parent=51 // pred_check
              _
            $region58: #{forward.1} parent=51 // pred_check_branch
              %372 = sbr.rel (0) target = $region60
            $region59: #{forward.1} parent=51 // pred_region
              %s374 = ssub.s32 16, 1
              loop: start=0, step=1, limit=1
              $region61: #{forward.1} parent=59 // loop_pre_header
                _
              $region62: #{forward.1} parent=59 // loop_header
                %s376 = sphi 0, %s380
                %p377 = scmp.ge.s32.totalorder %s376, 1
                %s381 = sphi %s366, %s366
                %s382 = sphi %s360, %s360
              $region63: #{forward.1} parent=59 // loop_header_branch
                %379 = sbr.rel (%p377) target = $region67
              $region64: #{forward.1} parent=59 // loop_body
                %v383 = vld [vmem:[%s381] sm:%s374]
                %384 = vst [vmem:[%s382] sm:%s374] %v383
                %v385 = vld [vmem:[%s381 + $0x4] sm:%s374]
                %386 = vst [vmem:[%s382 + $0x4] sm:%s374] %v385
                %v387 = vld [vmem:[%s381 + $0x8] sm:%s374]
                %388 = vst [vmem:[%s382 + $0x8] sm:%s374] %v387
                %v389 = vld [vmem:[%s381 + $0xc] sm:%s374]
                %390 = vst [vmem:[%s382 + $0xc] sm:%s374] %v389
                %v391 = vld [vmem:[%s381 + $0x10] sm:%s374]
                %392 = vst [vmem:[%s382 + $0x10] sm:%s374] %v391
                %v393 = vld [vmem:[%s381 + $0x14] sm:%s374]
                %394 = vst [vmem:[%s382 + $0x14] sm:%s374] %v393
                %v395 = vld [vmem:[%s381 + $0x18] sm:%s374]
                %396 = vst [vmem:[%s382 + $0x18] sm:%s374] %v395
                %v397 = vld [vmem:[%s381 + $0x1c] sm:%s374]
                %398 = vst [vmem:[%s382 + $0x1c] sm:%s374] %v397
                %v399 = vld [vmem:[%s381 + $0x20] sm:%s374]
                %400 = vst [vmem:[%s382 + $0x20] sm:%s374] %v399
                %v401 = vld [vmem:[%s381 + $0x24] sm:%s374]
                %402 = vst [vmem:[%s382 + $0x24] sm:%s374] %v401
                %v403 = vld [vmem:[%s381 + $0x28] sm:%s374]
                %404 = vst [vmem:[%s382 + $0x28] sm:%s374] %v403
                %v405 = vld [vmem:[%s381 + $0x2c] sm:%s374]
                %406 = vst [vmem:[%s382 + $0x2c] sm:%s374] %v405
                %v407 = vld [vmem:[%s381 + $0x30] sm:%s374]
                %408 = vst [vmem:[%s382 + $0x30] sm:%s374] %v407
                %v409 = vld [vmem:[%s381 + $0x34] sm:%s374]
                %410 = vst [vmem:[%s382 + $0x34] sm:%s374] %v409
                %v411 = vld [vmem:[%s381 + $0x38] sm:%s374]
                %412 = vst [vmem:[%s382 + $0x38] sm:%s374] %v411
                %v413 = vld [vmem:[%s381 + $0x3c] sm:%s374]
                %414 = vst [vmem:[%s382 + $0x3c] sm:%s374] %v413
                %v415 = vld [vmem:[%s381 + $0x80] sm:%s374]
                %416 = vst [vmem:[%s382 + $0x40] sm:%s374] %v415
                %v417 = vld [vmem:[%s381 + $0x84] sm:%s374]
                %418 = vst [vmem:[%s382 + $0x44] sm:%s374] %v417
                %v419 = vld [vmem:[%s381 + $0x88] sm:%s374]
                %420 = vst [vmem:[%s382 + $0x48] sm:%s374] %v419
                %v421 = vld [vmem:[%s381 + $0x8c] sm:%s374]
                %422 = vst [vmem:[%s382 + $0x4c] sm:%s374] %v421
                %v423 = vld [vmem:[%s381 + $0x90] sm:%s374]
                %424 = vst [vmem:[%s382 + $0x50] sm:%s374] %v423
                %v425 = vld [vmem:[%s381 + $0x94] sm:%s374]
                %426 = vst [vmem:[%s382 + $0x54] sm:%s374] %v425
                %v427 = vld [vmem:[%s381 + $0x98] sm:%s374]
                %428 = vst [vmem:[%s382 + $0x58] sm:%s374] %v427
                %v429 = vld [vmem:[%s381 + $0x9c] sm:%s374]
                %430 = vst [vmem:[%s382 + $0x5c] sm:%s374] %v429
                %v431 = vld [vmem:[%s381 + $0xa0] sm:%s374]
                %432 = vst [vmem:[%s382 + $0x60] sm:%s374] %v431
                %v433 = vld [vmem:[%s381 + $0xa4] sm:%s374]
                %434 = vst [vmem:[%s382 + $0x64] sm:%s374] %v433
                %v435 = vld [vmem:[%s381 + $0xa8] sm:%s374]
                %436 = vst [vmem:[%s382 + $0x68] sm:%s374] %v435
                %v437 = vld [vmem:[%s381 + $0xac] sm:%s374]
                %438 = vst [vmem:[%s382 + $0x6c] sm:%s374] %v437
                %v439 = vld [vmem:[%s381 + $0xb0] sm:%s374]
                %440 = vst [vmem:[%s382 + $0x70] sm:%s374] %v439
                %v441 = vld [vmem:[%s381 + $0xb4] sm:%s374]
                %442 = vst [vmem:[%s382 + $0x74] sm:%s374] %v441
                %v443 = vld [vmem:[%s381 + $0xb8] sm:%s374]
                %444 = vst [vmem:[%s382 + $0x78] sm:%s374] %v443
                %v445 = vld [vmem:[%s381 + $0xbc] sm:%s374]
                %446 = vst [vmem:[%s382 + $0x7c] sm:%s374] %v445
              $region65: #{forward.1} parent=59 // loop_footer
                %s380 = sadd.s32 1, %s376
              $region66: #{forward.1} parent=59 // loop_footer_branch
                %375 = sbr.rel target = $region62
              $region67: #{forward.1} parent=59 // loop_exit
                _
            $region60: #{forward.1} parent=51 // pred_fallthru
              _
          $region52: #{forward.1} parent=47 // pred_fallthru
            _
          %531 = vnop
        $region48: #{forward.1} parent=43 // pred_fallthru
          _
        // Predicated region
        $region86: #{forward.1} parent=43 // pred_check
          %p532 = pneg %p82
        $region87: #{forward.1} parent=43 // pred_check_branch
          %534 = sbr.rel (%p532) target = $region89
        $region88: #{forward.1} parent=43 // pred_region
          %p535 = scmp.lt.s32.totalorder %s27, 0
          %s536 = scalar_select %p535, %s27, 0
          %p537 = scmp.lt.s32.totalorder %s28, 1
          %s538 = scalar_select %p537, %s28, 1
          %s539 = smul.addr %s536, 2
          %s540 = sadd.s32 %s538, %s539
          %s541 = smul.addr %s540, 2
          %s542 = scalar_lea.vmem %s1, %s541
        $region89: #{forward.1} parent=43 // pred_fallthru
          _
      $region44: #{forward.1} parent=5 // pred_fallthru
        _
      %p543 = scmp.le.s32.totalorder 1, %s20
      %p544 = scmp.lt.s32.totalorder %s20, 3
      %p545 = pnand %p543, %p544
      %p546 = pneg %p545
      // Predicated region
      $region90: #{forward.1} parent=5 // pred_check
        _
      $region91: #{forward.1} parent=5 // pred_check_branch
        %548 = sbr.rel (%p545) target = $region93
      $region92: #{forward.1} parent=5 // pred_region
        %s549 = ssub.s32 %s20, 1
        %s550 = sand.u32 %s47, 1
        %s551 = sand.u32 %s47, 1
        %s552 = smul.addr %s551, 128
        %s553 = scalar_lea.vmem [#allocation4], %s552
        // Predicated region
        $region94: #{forward.1} parent=92 // pred_check
          %p554 = pneg %p60
        $region95: #{forward.1} parent=92 // pred_check_branch
          %556 = sbr.rel (%p554) target = $region97
        $region96: #{forward.1} parent=92 // pred_region
          _
        $region97: #{forward.1} parent=92 // pred_fallthru
          _
        // Predicated region
        $region98: #{forward.1} parent=92 // pred_check
          %p557 = pneg %p135
        $region99: #{forward.1} parent=92 // pred_check_branch
          %559 = sbr.rel (%p557) target = $region101
        $region100: #{forward.1} parent=92 // pred_region
          %560 = dma.done [#allocation6], 4096
        $region101: #{forward.1} parent=92 // pred_fallthru
          _
        // Predicated region
        $region102: #{forward.1} parent=92 // pred_check
          %p561 = pneg %p156
        $region103: #{forward.1} parent=92 // pred_check_branch
          %563 = sbr.rel (%p561) target = $region105
        $region104: #{forward.1} parent=92 // pred_region
          %564 = dma.done [#allocation8], 256
        $region105: #{forward.1} parent=92 // pred_fallthru
          _
        // Predicated region
        $region106: #{forward.1} parent=92 // pred_check
          %p565 = pneg %p177
        $region107: #{forward.1} parent=92 // pred_check_branch
          %567 = sbr.rel (%p565) target = $region109
        $region108: #{forward.1} parent=92 // pred_region
          %568 = dma.done [#allocation8], 65536
        $region109: #{forward.1} parent=92 // pred_fallthru
          _
        // Predicated region
        $region110: #{forward.1} parent=92 // pred_check
          %p569 = pneg %p198
        $region111: #{forward.1} parent=92 // pred_check_branch
          %571 = sbr.rel (%p569) target = $region113
        $region112: #{forward.1} parent=92 // pred_region
          %572 = dma.done [#allocation11], 64
        $region113: #{forward.1} parent=92 // pred_fallthru
          _
        // Predicated region
        $region114: #{forward.1} parent=92 // pred_check
          %p573 = pneg %p219
        $region115: #{forward.1} parent=92 // pred_check_branch
          %575 = sbr.rel (%p573) target = $region117
        $region116: #{forward.1} parent=92 // pred_region
          %576 = dma.done [#allocation11], 64
        $region117: #{forward.1} parent=92 // pred_fallthru
          _
        %s577 = sand.u32 %s47, 1
        %s578 = sand.u32 %s47, 1
        %s579 = smul.addr %s578, 128
        %s580 = scalar_lea.vmem [#allocation4], %s579
        %p581 = pneg %p60
        %p582 = pneg %p57
        %p583 = scmp.lt.s32.totalorder %s29, 0
        %s584 = scalar_select %p583, %s29, 0
        %p585 = scmp.lt.s32.totalorder %s30, 1
        %s586 = scalar_select %p585, %s30, 1
        %s587 = smul.addr %s584, 2
        %s588 = sadd.s32 %s586, %s587
        %s589 = smul.addr %s588, 2
        %s590 = scalar_lea.vmem %s1, %s589
        %p591 = pneg %p88
        %p592 = pneg %p85
        %p593 = scmp.lt.s32.totalorder %s29, 0
        %s594 = scalar_select %p593, %s29, 0
        %s595 = smul.addr %s594, 2
        %s596 = scalar_lea.vmem %s2, %s595
        %p597 = pneg %p114
        %p598 = pneg %p111
        %p599 = pneg %p135
        %p600 = pneg %p132
        %p601 = pneg %p156
        %p602 = pneg %p153
        %p603 = pneg %p177
        %p604 = pneg %p174
        %p605 = pneg %p198
        %p606 = pneg %p195
        %p607 = pneg %p219
        %p608 = pneg %p216
        %p609 = pneg %p240
        %p610 = pneg %p237
        %p611 = pneg %p266
        %p612 = pneg %p263
        %p613 = scmp.lt.s32.totalorder %s29, 0
        %s614 = scalar_select %p613, %s29, 0
        %s615 = smul.addr %s614, 2
        %s616 = scalar_lea.vmem %s9, %s615
        %s617 = smul.u32 2, %s29
        %s618 = smul.u32 16, %s30
        %p619 = scmp.lt.s32.totalorder %s29, 0
        %s620 = scalar_select %p619, %s29, 0
        %p621 = scmp.lt.s32.totalorder %s30, 1
        %s622 = scalar_select %p621, %s30, 1
        %s623 = smul.addr %s620, 2
        %s624 = sadd.s32 %s622, %s623
        %s625 = smul.addr %s624, 2
        %s626 = scalar_lea.vmem %s1, %s625
        %p627 = scmp.lt.s32.totalorder %s29, 0
        %s628 = scalar_select %p627, %s29, 0
        %s629 = smul.addr %s628, 2
        %s630 = scalar_lea.vmem %s2, %s629
        %p631 = scmp.lt.s32.totalorder %s29, 0
        %s632 = scalar_select %p631, %s29, 0
        %s633 = smul.addr %s632, 2
        %s634 = scalar_lea.vmem %s9, %s633
        %p636 = scmp.eq.s32.totalorder %s30, 0
        // Predicated region
        $region118: #{forward.1} parent=92 // pred_check
          %p637 = pneg %p636
        $region119: #{forward.1} parent=92 // pred_check_branch
          %639 = sbr.rel (%p637) target = $region121
        $region120: #{forward.1} parent=92 // pred_region
          %vm640 = vcmask 254976
          %641 = vst.msk [vmem:[#allocation2] sm:$0x3] %vm640, 0.0
        $region121: #{forward.1} parent=92 // pred_fallthru
          _
        %v642 = vld [vmem:[%s553] sm:$0xf]
        %v643 = vld [vmem:[%s553 + $0x4] sm:$0xf]
        %v644 = vld [vmem:[%s553 + $0x8] sm:$0xf]
        %v645 = vld [vmem:[%s553 + $0xc] sm:$0xf]
        %v646 = vld [vmem:[%s553 + $0x10] sm:$0xf]
        %v647 = vld [vmem:[%s553 + $0x14] sm:$0xf]
        %v648 = vld [vmem:[%s553 + $0x18] sm:$0xf]
        %v649 = vld [vmem:[%s553 + $0x1c] sm:$0xf]
        %v650 = vld [vmem:[%s553 + $0x20] sm:$0xf]
        %v651 = vld [vmem:[%s553 + $0x24] sm:$0xf]
        %v652 = vld [vmem:[%s553 + $0x28] sm:$0xf]
        %v653 = vld [vmem:[%s553 + $0x2c] sm:$0xf]
        %v654 = vld [vmem:[%s553 + $0x30] sm:$0xf]
        %v655 = vld [vmem:[%s553 + $0x34] sm:$0xf]
        %v656 = vld [vmem:[%s553 + $0x38] sm:$0xf]
        %v657 = vld [vmem:[%s553 + $0x3c] sm:$0xf]
        %v658 = vld [vmem:[%s553 + $0x40] sm:$0xf]
        %v659 = vld [vmem:[%s553 + $0x44] sm:$0xf]
        %v660 = vld [vmem:[%s553 + $0x48] sm:$0xf]
        %v661 = vld [vmem:[%s553 + $0x4c] sm:$0xf]
        %v662 = vld [vmem:[%s553 + $0x50] sm:$0xf]
        %v663 = vld [vmem:[%s553 + $0x54] sm:$0xf]
        %v664 = vld [vmem:[%s553 + $0x58] sm:$0xf]
        %v665 = vld [vmem:[%s553 + $0x5c] sm:$0xf]
        %v666 = vld [vmem:[%s553 + $0x60] sm:$0xf]
        %v667 = vld [vmem:[%s553 + $0x64] sm:$0xf]
        %v668 = vld [vmem:[%s553 + $0x68] sm:$0xf]
        %v669 = vld [vmem:[%s553 + $0x6c] sm:$0xf]
        %v670 = vld [vmem:[%s553 + $0x70] sm:$0xf]
        %v671 = vld [vmem:[%s553 + $0x74] sm:$0xf]
        %v672 = vld [vmem:[%s553 + $0x78] sm:$0xf]
        %v673 = vld [vmem:[%s553 + $0x7c] sm:$0xf]
        %v674 = vunpack.c.l.bf16 %v642
        %v675 = vunpack.c.l.bf16 %v643
        %v676 = vunpack.c.l.bf16 %v644
        %v677 = vunpack.c.l.bf16 %v645
        %v678 = vunpack.c.l.bf16 %v646
        %v679 = vunpack.c.l.bf16 %v647
        %v680 = vunpack.c.l.bf16 %v648
        %v681 = vunpack.c.l.bf16 %v649
        %v682 = vunpack.c.l.bf16 %v650
        %v683 = vunpack.c.l.bf16 %v651
        %v684 = vunpack.c.l.bf16 %v652
        %v685 = vunpack.c.l.bf16 %v653
        %v686 = vunpack.c.l.bf16 %v654
        %v687 = vunpack.c.l.bf16 %v655
        %v688 = vunpack.c.l.bf16 %v656
        %v689 = vunpack.c.l.bf16 %v657
        %v690 = vunpack.c.l.bf16 %v658
        %v691 = vunpack.c.l.bf16 %v659
        %v692 = vunpack.c.l.bf16 %v660
        %v693 = vunpack.c.l.bf16 %v661
        %v694 = vunpack.c.l.bf16 %v662
        %v695 = vunpack.c.l.bf16 %v663
        %v696 = vunpack.c.l.bf16 %v664
        %v697 = vunpack.c.l.bf16 %v665
        %v698 = vunpack.c.l.bf16 %v666
        %v699 = vunpack.c.l.bf16 %v667
        %v700 = vunpack.c.l.bf16 %v668
        %v701 = vunpack.c.l.bf16 %v669
        %v702 = vunpack.c.l.bf16 %v670
        %v703 = vunpack.c.l.bf16 %v671
        %v704 = vunpack.c.l.bf16 %v672
        %v705 = vunpack.c.l.bf16 %v673
        %v706 = vld [vmem:[%s626] sm:$0x3]
        %v707 = vld [vmem:[#allocation2] sm:$0x3]
        %v708 = vlaneseq
        %v709 = vshrl.u32 %v708, 7
        %v710 = vsub.s32 0, %v709
        %v711 = vrot.slane %v706, %v710
        %713 = vbcast.lane.b32.xlu0 %v711, 256
        %v714 = vpop.permute.xlu0 %713
        %s716 = sor.u32 256, 8
        %717 = vbcast.lane.b32.xlu0 %v711, %s716
        %v718 = vpop.permute.xlu0 %717
        %s720 = sor.u32 256, 16
        %721 = vbcast.lane.b32.xlu0 %v711, %s720
        %v722 = vpop.permute.xlu0 %721
        %s724 = sor.u32 256, 24
        %725 = vbcast.lane.b32.xlu0 %v711, %s724
        %v726 = vpop.permute.xlu0 %725
        %s728 = sor.u32 256, 32
        %729 = vbcast.lane.b32.xlu0 %v711, %s728
        %v730 = vpop.permute.xlu0 %729
        %s732 = sor.u32 256, 40
        %733 = vbcast.lane.b32.xlu0 %v711, %s732
        %v734 = vpop.permute.xlu0 %733
        %s736 = sor.u32 256, 48
        %737 = vbcast.lane.b32.xlu0 %v711, %s736
        %v738 = vpop.permute.xlu0 %737
        %s740 = sor.u32 256, 56
        %741 = vbcast.lane.b32.xlu0 %v711, %s740
        %v742 = vpop.permute.xlu0 %741
        %s744 = sor.u32 256, 64
        %745 = vbcast.lane.b32.xlu0 %v711, %s744
        %v746 = vpop.permute.xlu0 %745
        %s748 = sor.u32 256, 72
        %749 = vbcast.lane.b32.xlu0 %v711, %s748
        %v750 = vpop.permute.xlu0 %749
        %s752 = sor.u32 256, 80
        %753 = vbcast.lane.b32.xlu0 %v711, %s752
        %v754 = vpop.permute.xlu0 %753
        %s756 = sor.u32 256, 88
        %757 = vbcast.lane.b32.xlu0 %v711, %s756
        %v758 = vpop.permute.xlu0 %757
        %s760 = sor.u32 256, 96
        %761 = vbcast.lane.b32.xlu0 %v711, %s760
        %v762 = vpop.permute.xlu0 %761
        %s764 = sor.u32 256, 104
        %765 = vbcast.lane.b32.xlu0 %v711, %s764
        %v766 = vpop.permute.xlu0 %765
        %s768 = sor.u32 256, 112
        %769 = vbcast.lane.b32.xlu0 %v711, %s768
        %v770 = vpop.permute.xlu0 %769
        %s772 = sor.u32 256, 120
        %773 = vbcast.lane.b32.xlu0 %v711, %s772
        %v774 = vpop.permute.xlu0 %773
        %v775 = vlaneseq
        %v776 = vshrl.u32 %v775, 7
        %v777 = vsub.s32 1, %v776
        %v778 = vrot.slane %v706, %v777
        %780 = vbcast.lane.b32.xlu0 %v778, 256
        %v781 = vpop.permute.xlu0 %780
        %s783 = sor.u32 256, 8
        %784 = vbcast.lane.b32.xlu0 %v778, %s783
        %v785 = vpop.permute.xlu0 %784
        %s787 = sor.u32 256, 16
        %788 = vbcast.lane.b32.xlu0 %v778, %s787
        %v789 = vpop.permute.xlu0 %788
        %s791 = sor.u32 256, 24
        %792 = vbcast.lane.b32.xlu0 %v778, %s791
        %v793 = vpop.permute.xlu0 %792
        %s795 = sor.u32 256, 32
        %796 = vbcast.lane.b32.xlu0 %v778, %s795
        %v797 = vpop.permute.xlu0 %796
        %s799 = sor.u32 256, 40
        %800 = vbcast.lane.b32.xlu0 %v778, %s799
        %v801 = vpop.permute.xlu0 %800
        %s803 = sor.u32 256, 48
        %804 = vbcast.lane.b32.xlu0 %v778, %s803
        %v805 = vpop.permute.xlu0 %804
        %s807 = sor.u32 256, 56
        %808 = vbcast.lane.b32.xlu0 %v778, %s807
        %v809 = vpop.permute.xlu0 %808
        %s811 = sor.u32 256, 64
        %812 = vbcast.lane.b32.xlu0 %v778, %s811
        %v813 = vpop.permute.xlu0 %812
        %s815 = sor.u32 256, 72
        %816 = vbcast.lane.b32.xlu0 %v778, %s815
        %v817 = vpop.permute.xlu0 %816
        %s819 = sor.u32 256, 80
        %820 = vbcast.lane.b32.xlu0 %v778, %s819
        %v821 = vpop.permute.xlu0 %820
        %s823 = sor.u32 256, 88
        %824 = vbcast.lane.b32.xlu0 %v778, %s823
        %v825 = vpop.permute.xlu0 %824
        %s827 = sor.u32 256, 96
        %828 = vbcast.lane.b32.xlu0 %v778, %s827
        %v829 = vpop.permute.xlu0 %828
        %s831 = sor.u32 256, 104
        %832 = vbcast.lane.b32.xlu0 %v778, %s831
        %v833 = vpop.permute.xlu0 %832
        %s835 = sor.u32 256, 112
        %836 = vbcast.lane.b32.xlu0 %v778, %s835
        %v837 = vpop.permute.xlu0 %836
        %s839 = sor.u32 256, 120
        %840 = vbcast.lane.b32.xlu0 %v778, %s839
        %v841 = vpop.permute.xlu0 %840
        %v842 = vmul.f32 %v674, %v714
        %v843 = vmul.f32 %v675, %v718
        %v844 = vmul.f32 %v676, %v722
        %v845 = vmul.f32 %v677, %v726
        %v846 = vmul.f32 %v678, %v730
        %v847 = vmul.f32 %v679, %v734
        %v848 = vmul.f32 %v680, %v738
        %v849 = vmul.f32 %v681, %v742
        %v850 = vmul.f32 %v682, %v746
        %v851 = vmul.f32 %v683, %v750
        %v852 = vmul.f32 %v684, %v754
        %v853 = vmul.f32 %v685, %v758
        %v854 = vmul.f32 %v686, %v762
        %v855 = vmul.f32 %v687, %v766
        %v856 = vmul.f32 %v688, %v770
        %v857 = vmul.f32 %v689, %v774
        %v858 = vmul.f32 %v690, %v781
        %v859 = vmul.f32 %v691, %v785
        %v860 = vmul.f32 %v692, %v789
        %v861 = vmul.f32 %v693, %v793
        %v862 = vmul.f32 %v694, %v797
        %v863 = vmul.f32 %v695, %v801
        %v864 = vmul.f32 %v696, %v805
        %v865 = vmul.f32 %v697, %v809
        %v866 = vmul.f32 %v698, %v813
        %v867 = vmul.f32 %v699, %v817
        %v868 = vmul.f32 %v700, %v821
        %v869 = vmul.f32 %v701, %v825
        %v870 = vmul.f32 %v702, %v829
        %v871 = vmul.f32 %v703, %v833
        %v872 = vmul.f32 %v704, %v837
        %v873 = vmul.f32 %v705, %v841
        %vm874 = vcmask 261120
        %v875 = vsel %vm874, %v842, 0.0
        %v876 = vsel %vm874, %v843, 0.0
        %v877 = vadd.f32 %v875, %v876
        %v878 = vsel %vm874, %v844, 0.0
        %v879 = vadd.f32 %v877, %v878
        %v880 = vsel %vm874, %v845, 0.0
        %v881 = vadd.f32 %v879, %v880
        %v882 = vsel %vm874, %v846, 0.0
        %v883 = vadd.f32 %v881, %v882
        %v884 = vsel %vm874, %v847, 0.0
        %v885 = vadd.f32 %v883, %v884
        %v886 = vsel %vm874, %v848, 0.0
        %v887 = vadd.f32 %v885, %v886
        %v888 = vsel %vm874, %v849, 0.0
        %v889 = vadd.f32 %v887, %v888
        %v890 = vsel %vm874, %v850, 0.0
        %v891 = vadd.f32 %v889, %v890
        %v892 = vsel %vm874, %v851, 0.0
        %v893 = vadd.f32 %v891, %v892
        %v894 = vsel %vm874, %v852, 0.0
        %v895 = vadd.f32 %v893, %v894
        %v896 = vsel %vm874, %v853, 0.0
        %v897 = vadd.f32 %v895, %v896
        %v898 = vsel %vm874, %v854, 0.0
        %v899 = vadd.f32 %v897, %v898
        %v900 = vsel %vm874, %v855, 0.0
        %v901 = vadd.f32 %v899, %v900
        %v902 = vsel %vm874, %v856, 0.0
        %v903 = vadd.f32 %v901, %v902
        %v904 = vsel %vm874, %v857, 0.0
        %v905 = vadd.f32 %v903, %v904
        %v906 = vrot.slane %v905, 4
        %v907 = vadd.f32 %v905, %v906
        %v908 = vrot.slane %v907, 2
        %v909 = vadd.f32 %v907, %v908
        %v910 = vrot.slane %v909, 1
        %v911 = vadd.f32 %v909, %v910
        %v912 = vsel %vm874, %v858, 0.0
        %v913 = vsel %vm874, %v859, 0.0
        %v914 = vadd.f32 %v912, %v913
        %v915 = vsel %vm874, %v860, 0.0
        %v916 = vadd.f32 %v914, %v915
        %v917 = vsel %vm874, %v861, 0.0
        %v918 = vadd.f32 %v916, %v917
        %v919 = vsel %vm874, %v862, 0.0
        %v920 = vadd.f32 %v918, %v919
        %v921 = vsel %vm874, %v863, 0.0
        %v922 = vadd.f32 %v920, %v921
        %v923 = vsel %vm874, %v864, 0.0
        %v924 = vadd.f32 %v922, %v923
        %v925 = vsel %vm874, %v865, 0.0
        %v926 = vadd.f32 %v924, %v925
        %v927 = vsel %vm874, %v866, 0.0
        %v928 = vadd.f32 %v926, %v927
        %v929 = vsel %vm874, %v867, 0.0
        %v930 = vadd.f32 %v928, %v929
        %v931 = vsel %vm874, %v868, 0.0
        %v932 = vadd.f32 %v930, %v931
        %v933 = vsel %vm874, %v869, 0.0
        %v934 = vadd.f32 %v932, %v933
        %v935 = vsel %vm874, %v870, 0.0
        %v936 = vadd.f32 %v934, %v935
        %v937 = vsel %vm874, %v871, 0.0
        %v938 = vadd.f32 %v936, %v937
        %v939 = vsel %vm874, %v872, 0.0
        %v940 = vadd.f32 %v938, %v939
        %v941 = vsel %vm874, %v873, 0.0
        %v942 = vadd.f32 %v940, %v941
        %v943 = vrot.slane %v942, 4
        %v944 = vadd.f32 %v942, %v943
        %v945 = vrot.slane %v944, 2
        %v946 = vadd.f32 %v944, %v945
        %v947 = vrot.slane %v946, 1
        %v948 = vadd.f32 %v946, %v947
        %vm951 = vcmask 1041409
        %v952 = vsel %vm951, %v948, %v911
        %v954 = vadd.f32 %v707, %v952
        %vm955 = vcmask 254976
        %956 = vst.msk [vmem:[#allocation2] sm:$0x3] %vm955, %v954
        %p957 = scmp.eq.s32.totalorder %s30, 1
        // Predicated region
        $region122: #{forward.1} parent=92 // pred_check
          %p958 = pneg %p957
        $region123: #{forward.1} parent=92 // pred_check_branch
          %960 = sbr.rel (%p958) target = $region125
        $region124: #{forward.1} parent=92 // pred_region
          %v961 = vld [vmem:[#allocation2] sm:$0x3]
          %v962 = vld [vmem:[%s630] sm:$0x3]
          %964 = vset.pattern.permute.xlu0 0
          %965 = vperm.xlu0 %964, %v962
          %v966 = vpop.permute.xlu0 %965
          %v968 = vrcp.pop %v966
          %v969 = vmul.f32 %v961, %v968
          %v970 = vpack.c.bf16 %v969, %v969
          %v971 = vld [vmem:[#allocation5] sm:$0xff]
          %v972 = vld [vmem:[#allocation5 + $0x8] sm:$0xff]
          %v973 = vld [vmem:[#allocation5 + $0x10] sm:$0xff]
          %v974 = vld [vmem:[#allocation5 + $0x18] sm:$0xff]
          %v975 = vld [vmem:[#allocation5 + $0x20] sm:$0xff]
          %v976 = vld [vmem:[#allocation5 + $0x28] sm:$0xff]
          %v977 = vld [vmem:[#allocation5 + $0x30] sm:$0xff]
          %v978 = vld [vmem:[#allocation5 + $0x38] sm:$0xff]
          %v979 = vld [vmem:[#allocation5 + $0x40] sm:$0xff]
          %v980 = vld [vmem:[#allocation5 + $0x48] sm:$0xff]
          %v981 = vld [vmem:[#allocation5 + $0x50] sm:$0xff]
          %v982 = vld [vmem:[#allocation5 + $0x58] sm:$0xff]
          %v983 = vld [vmem:[#allocation5 + $0x60] sm:$0xff]
          %v984 = vld [vmem:[#allocation5 + $0x68] sm:$0xff]
          %v985 = vld [vmem:[#allocation5 + $0x70] sm:$0xff]
          %v986 = vld [vmem:[#allocation5 + $0x78] sm:$0xff]
          %v987 = vld [vmem:[#allocation5 + $0x80] sm:$0xff]
          %v988 = vld [vmem:[#allocation5 + $0x88] sm:$0xff]
          %v989 = vld [vmem:[#allocation5 + $0x90] sm:$0xff]
          %v990 = vld [vmem:[#allocation5 + $0x98] sm:$0xff]
          %v991 = vld [vmem:[#allocation5 + $0xa0] sm:$0xff]
          %v992 = vld [vmem:[#allocation5 + $0xa8] sm:$0xff]
          %v993 = vld [vmem:[#allocation5 + $0xb0] sm:$0xff]
          %v994 = vld [vmem:[#allocation5 + $0xb8] sm:$0xff]
          %v995 = vld [vmem:[#allocation5 + $0xc0] sm:$0xff]
          %v996 = vld [vmem:[#allocation5 + $0xc8] sm:$0xff]
          %v997 = vld [vmem:[#allocation5 + $0xd0] sm:$0xff]
          %v998 = vld [vmem:[#allocation5 + $0xd8] sm:$0xff]
          %v999 = vld [vmem:[#allocation5 + $0xe0] sm:$0xff]
          %v1000 = vld [vmem:[#allocation5 + $0xe8] sm:$0xff]
          %v1001 = vld [vmem:[#allocation5 + $0xf0] sm:$0xff]
          %v1002 = vld [vmem:[#allocation5 + $0xf8] sm:$0xff]
          %v1003 = vld [vmem:[#allocation7] sm:$0xff]
          %v1004 = vld [vmem:[#allocation7 + $0x8] sm:$0xff]
          %v1007 = vlaneseq
          %v1008 = vshrl.u32 %v1007, 7
          %v1009 = vsub.s32 0, %v1008
          %v1010 = vrot.slane %v1003, %v1009
          %v1011 = vlaneseq
          %v1012 = vshrl.u32 %v1011, 7
          %v1013 = vsub.s32 1, %v1012
          %v1014 = vrot.slane %v1003, %v1013
          %v1015 = vlaneseq
          %v1016 = vshrl.u32 %v1015, 7
          %v1017 = vsub.s32 2, %v1016
          %v1018 = vrot.slane %v1003, %v1017
          %v1019 = vlaneseq
          %v1020 = vshrl.u32 %v1019, 7
          %v1021 = vsub.s32 3, %v1020
          %v1022 = vrot.slane %v1003, %v1021
          %v1023 = vlaneseq
          %v1024 = vshrl.u32 %v1023, 7
          %v1025 = vsub.s32 4, %v1024
          %v1026 = vrot.slane %v1003, %v1025
          %v1027 = vlaneseq
          %v1028 = vshrl.u32 %v1027, 7
          %v1029 = vsub.s32 5, %v1028
          %v1030 = vrot.slane %v1003, %v1029
          %v1031 = vlaneseq
          %v1032 = vshrl.u32 %v1031, 7
          %v1033 = vsub.s32 6, %v1032
          %v1034 = vrot.slane %v1003, %v1033
          %v1035 = vlaneseq
          %v1036 = vshrl.u32 %v1035, 7
          %v1037 = vsub.s32 7, %v1036
          %v1038 = vrot.slane %v1003, %v1037
          %v1039 = vlaneseq
          %v1040 = vshrl.u32 %v1039, 7
          %v1041 = vsub.s32 0, %v1040
          %v1042 = vrot.slane %v1004, %v1041
          %v1043 = vlaneseq
          %v1044 = vshrl.u32 %v1043, 7
          %v1045 = vsub.s32 1, %v1044
          %v1046 = vrot.slane %v1004, %v1045
          %v1047 = vlaneseq
          %v1048 = vshrl.u32 %v1047, 7
          %v1049 = vsub.s32 2, %v1048
          %v1050 = vrot.slane %v1004, %v1049
          %v1051 = vlaneseq
          %v1052 = vshrl.u32 %v1051, 7
          %v1053 = vsub.s32 3, %v1052
          %v1054 = vrot.slane %v1004, %v1053
          %v1055 = vlaneseq
          %v1056 = vshrl.u32 %v1055, 7
          %v1057 = vsub.s32 4, %v1056
          %v1058 = vrot.slane %v1004, %v1057
          %v1059 = vlaneseq
          %v1060 = vshrl.u32 %v1059, 7
          %v1061 = vsub.s32 5, %v1060
          %v1062 = vrot.slane %v1004, %v1061
          %v1063 = vlaneseq
          %v1064 = vshrl.u32 %v1063, 7
          %v1065 = vsub.s32 6, %v1064
          %v1066 = vrot.slane %v1004, %v1065
          %v1067 = vlaneseq
          %v1068 = vshrl.u32 %v1067, 7
          %v1069 = vsub.s32 7, %v1068
          %v1070 = vrot.slane %v1004, %v1069
          %v1119 = vunpack.c.l.b16 %v971
          %v1120 = vunpack.c.h.b16 %v971
          %v1121 = vunpack.c.l.b16 %v972
          %v1122 = vunpack.c.h.b16 %v972
          %v1123 = vunpack.c.l.b16 %v973
          %v1124 = vunpack.c.h.b16 %v973
          %v1125 = vunpack.c.l.b16 %v974
          %v1126 = vunpack.c.h.b16 %v974
          %v1127 = vunpack.c.l.b16 %v975
          %v1128 = vunpack.c.h.b16 %v975
          %v1129 = vunpack.c.l.b16 %v976
          %v1130 = vunpack.c.h.b16 %v976
          %v1131 = vunpack.c.l.b16 %v977
          %v1132 = vunpack.c.h.b16 %v977
          %v1133 = vunpack.c.l.b16 %v978
          %v1134 = vunpack.c.h.b16 %v978
          %v1135 = vunpack.c.l.b16 %v979
          %v1136 = vunpack.c.h.b16 %v979
          %v1137 = vunpack.c.l.b16 %v980
          %v1138 = vunpack.c.h.b16 %v980
          %v1139 = vunpack.c.l.b16 %v981
          %v1140 = vunpack.c.h.b16 %v981
          %v1141 = vunpack.c.l.b16 %v982
          %v1142 = vunpack.c.h.b16 %v982
          %v1143 = vunpack.c.l.b16 %v983
          %v1144 = vunpack.c.h.b16 %v983
          %v1145 = vunpack.c.l.b16 %v984
          %v1146 = vunpack.c.h.b16 %v984
          %v1147 = vunpack.c.l.b16 %v985
          %v1148 = vunpack.c.h.b16 %v985
          %v1149 = vunpack.c.l.b16 %v986
          %v1150 = vunpack.c.h.b16 %v986
          %v1151 = vunpack.c.l.b16 %v987
          %v1152 = vunpack.c.h.b16 %v987
          %v1153 = vunpack.c.l.b16 %v988
          %v1154 = vunpack.c.h.b16 %v988
          %v1155 = vunpack.c.l.b16 %v989
          %v1156 = vunpack.c.h.b16 %v989
          %v1157 = vunpack.c.l.b16 %v990
          %v1158 = vunpack.c.h.b16 %v990
          %v1159 = vunpack.c.l.b16 %v991
          %v1160 = vunpack.c.h.b16 %v991
          %v1161 = vunpack.c.l.b16 %v992
          %v1162 = vunpack.c.h.b16 %v992
          %v1163 = vunpack.c.l.b16 %v993
          %v1164 = vunpack.c.h.b16 %v993
          %v1165 = vunpack.c.l.b16 %v994
          %v1166 = vunpack.c.h.b16 %v994
          %v1167 = vunpack.c.l.b16 %v995
          %v1168 = vunpack.c.h.b16 %v995
          %v1169 = vunpack.c.l.b16 %v996
          %v1170 = vunpack.c.h.b16 %v996
          %v1171 = vunpack.c.l.b16 %v997
          %v1172 = vunpack.c.h.b16 %v997
          %v1173 = vunpack.c.l.b16 %v998
          %v1174 = vunpack.c.h.b16 %v998
          %v1175 = vunpack.c.l.b16 %v999
          %v1176 = vunpack.c.h.b16 %v999
          %v1177 = vunpack.c.l.b16 %v1000
          %v1178 = vunpack.c.h.b16 %v1000
          %v1179 = vunpack.c.l.b16 %v1001
          %v1180 = vunpack.c.h.b16 %v1001
          %v1181 = vunpack.c.l.b16 %v1002
          %v1182 = vunpack.c.h.b16 %v1002
          %v1183 = vpack.c.b16 %v1135, %v1119
          %v1184 = vpack.c.b16 %v1136, %v1120
          %v1185 = vpack.c.b16 %v1137, %v1121
          %v1186 = vpack.c.b16 %v1138, %v1122
          %v1187 = vpack.c.b16 %v1139, %v1123
          %v1188 = vpack.c.b16 %v1140, %v1124
          %v1189 = vpack.c.b16 %v1141, %v1125
          %v1190 = vpack.c.b16 %v1142, %v1126
          %v1191 = vpack.c.b16 %v1143, %v1127
          %v1192 = vpack.c.b16 %v1144, %v1128
          %v1193 = vpack.c.b16 %v1145, %v1129
          %v1194 = vpack.c.b16 %v1146, %v1130
          %v1195 = vpack.c.b16 %v1147, %v1131
          %v1196 = vpack.c.b16 %v1148, %v1132
          %v1197 = vpack.c.b16 %v1149, %v1133
          %v1198 = vpack.c.b16 %v1150, %v1134
          %v1199 = vpack.c.b16 %v1167, %v1151
          %v1200 = vpack.c.b16 %v1168, %v1152
          %v1201 = vpack.c.b16 %v1169, %v1153
          %v1202 = vpack.c.b16 %v1170, %v1154
          %v1203 = vpack.c.b16 %v1171, %v1155
          %v1204 = vpack.c.b16 %v1172, %v1156
          %v1205 = vpack.c.b16 %v1173, %v1157
          %v1206 = vpack.c.b16 %v1174, %v1158
          %v1207 = vpack.c.b16 %v1175, %v1159
          %v1208 = vpack.c.b16 %v1176, %v1160
          %v1209 = vpack.c.b16 %v1177, %v1161
          %v1210 = vpack.c.b16 %v1178, %v1162
          %v1211 = vpack.c.b16 %v1179, %v1163
          %v1212 = vpack.c.b16 %v1180, %v1164
          %v1213 = vpack.c.b16 %v1181, %v1165
          %v1214 = vpack.c.b16 %v1182, %v1166
          %v1248 = vsel %vm874, %v970, 0
          %1250 = vmatprep.subr.bf16.mxu0 0
          %1251 = vmatpush1.bf16.msra.mxu0 0
          %1252 = vmatprep.subr.bf16.mxu0 0
          %1253 = vmatpush1.bf16.msra.mxu0 0
          %1254 = vmatprep.subr.bf16.mxu0 0
          %1255 = vmatpush1.bf16.msra.mxu0 0
          %1256 = vmatprep.subr.bf16.mxu0 0
          %1257 = vmatpush1.bf16.msra.mxu0 0
          %1258 = vmatprep.subr.bf16.mxu0 0
          %1259 = vmatpush1.bf16.msra.mxu0 0
          %1260 = vmatprep.subr.bf16.mxu0 0
          %1261 = vmatpush1.bf16.msra.mxu0 0
          %1262 = vmatprep.subr.bf16.mxu0 %v1200
          %1263 = vmatpush1.bf16.msra.mxu0 %v1199
          %1264 = vmatprep.subr.bf16.mxu0 %v1184
          %1265 = vmatpush1.bf16.msra.mxu0 %v1183
          %1266 = vmatprep.subr.bf16.mxu0 0
          %1267 = vmatpush2.bf16.msra.mxu0 0
          %1268 = vmatprep.subr.bf16.mxu0 0
          %1269 = vmatpush2.bf16.msra.mxu0 0
          %1270 = vmatprep.subr.bf16.mxu0 0
          %1271 = vmatpush2.bf16.msra.mxu0 0
          %1272 = vmatprep.subr.bf16.mxu0 0
          %1273 = vmatpush2.bf16.msra.mxu0 0
          %1274 = vmatprep.subr.bf16.mxu0 0
          %1275 = vmatpush2.bf16.msra.mxu0 0
          %1276 = vmatprep.subr.bf16.mxu0 0
          %1277 = vmatpush2.bf16.msra.mxu0 0
          %1278 = vmatprep.subr.bf16.mxu0 0
          %1279 = vmatpush2.bf16.msra.mxu0 0
          %1280 = vmatprep.subr.bf16.mxu0 0
          %1281 = vmatpush2.bf16.msra.mxu0 0
          %1282 = vmatprep.mubr.bf16.mxu0 0
          %1283 = vmatmul.mubr.bf16.gmra.mxu0 %v1248
          %v1284 = vpop.f32.mrf.mxu0
          %v1285 = vadd.f32 %v1010, %v1284
          %v1286 = vpop.f32.mrf.mxu0
          %v1287 = vadd.f32 %v1014, %v1286
          %v1288 = vpop.f32.mrf.mxu0
          %v1289 = vpop.f32.mrf.mxu0
          %1290 = vdwg.mxu0
          %1291 = vmatprep.subr.bf16.mxu0 0
          %1292 = vmatpush1.bf16.msra.mxu0 0
          %1293 = vmatprep.subr.bf16.mxu0 0
          %1294 = vmatpush1.bf16.msra.mxu0 0
          %1295 = vmatprep.subr.bf16.mxu0 0
          %1296 = vmatpush1.bf16.msra.mxu0 0
          %1297 = vmatprep.subr.bf16.mxu0 0
          %1298 = vmatpush1.bf16.msra.mxu0 0
          %1299 = vmatprep.subr.bf16.mxu0 0
          %1300 = vmatpush1.bf16.msra.mxu0 0
          %1301 = vmatprep.subr.bf16.mxu0 0
          %1302 = vmatpush1.bf16.msra.mxu0 0
          %1303 = vmatprep.subr.bf16.mxu0 %v1202
          %1304 = vmatpush1.bf16.msra.mxu0 %v1201
          %1305 = vmatprep.subr.bf16.mxu0 %v1186
          %1306 = vmatpush1.bf16.msra.mxu0 %v1185
          %1307 = vmatprep.subr.bf16.mxu0 0
          %1308 = vmatpush2.bf16.msra.mxu0 0
          %1309 = vmatprep.subr.bf16.mxu0 0
          %1310 = vmatpush2.bf16.msra.mxu0 0
          %1311 = vmatprep.subr.bf16.mxu0 0
          %1312 = vmatpush2.bf16.msra.mxu0 0
          %1313 = vmatprep.subr.bf16.mxu0 0
          %1314 = vmatpush2.bf16.msra.mxu0 0
          %1315 = vmatprep.subr.bf16.mxu0 0
          %1316 = vmatpush2.bf16.msra.mxu0 0
          %1317 = vmatprep.subr.bf16.mxu0 0
          %1318 = vmatpush2.bf16.msra.mxu0 0
          %1319 = vmatprep.subr.bf16.mxu0 0
          %1320 = vmatpush2.bf16.msra.mxu0 0
          %1321 = vmatprep.subr.bf16.mxu0 0
          %1322 = vmatpush2.bf16.msra.mxu0 0
          %1323 = vmatprep.mubr.bf16.mxu0 0
          %1324 = vmatmul.mubr.bf16.gmra.mxu0 %v1248
          %v1325 = vpop.f32.mrf.mxu0
          %v1326 = vadd.f32 %v1018, %v1325
          %v1327 = vpop.f32.mrf.mxu0
          %v1328 = vadd.f32 %v1022, %v1327
          %v1329 = vpop.f32.mrf.mxu0
          %v1330 = vpop.f32.mrf.mxu0
          %1331 = vdwg.mxu0
          %1332 = vmatprep.subr.bf16.mxu0 0
          %1333 = vmatpush1.bf16.msra.mxu0 0
          %1334 = vmatprep.subr.bf16.mxu0 0
          %1335 = vmatpush1.bf16.msra.mxu0 0
          %1336 = vmatprep.subr.bf16.mxu0 0
          %1337 = vmatpush1.bf16.msra.mxu0 0
          %1338 = vmatprep.subr.bf16.mxu0 0
          %1339 = vmatpush1.bf16.msra.mxu0 0
          %1340 = vmatprep.subr.bf16.mxu0 0
          %1341 = vmatpush1.bf16.msra.mxu0 0
          %1342 = vmatprep.subr.bf16.mxu0 0
          %1343 = vmatpush1.bf16.msra.mxu0 0
          %1344 = vmatprep.subr.bf16.mxu0 %v1204
          %1345 = vmatpush1.bf16.msra.mxu0 %v1203
          %1346 = vmatprep.subr.bf16.mxu0 %v1188
          %1347 = vmatpush1.bf16.msra.mxu0 %v1187
          %1348 = vmatprep.subr.bf16.mxu0 0
          %1349 = vmatpush2.bf16.msra.mxu0 0
          %1350 = vmatprep.subr.bf16.mxu0 0
          %1351 = vmatpush2.bf16.msra.mxu0 0
          %1352 = vmatprep.subr.bf16.mxu0 0
          %1353 = vmatpush2.bf16.msra.mxu0 0
          %1354 = vmatprep.subr.bf16.mxu0 0
          %1355 = vmatpush2.bf16.msra.mxu0 0
          %1356 = vmatprep.subr.bf16.mxu0 0
          %1357 = vmatpush2.bf16.msra.mxu0 0
          %1358 = vmatprep.subr.bf16.mxu0 0
          %1359 = vmatpush2.bf16.msra.mxu0 0
          %1360 = vmatprep.subr.bf16.mxu0 0
          %1361 = vmatpush2.bf16.msra.mxu0 0
          %1362 = vmatprep.subr.bf16.mxu0 0
          %1363 = vmatpush2.bf16.msra.mxu0 0
          %1364 = vmatprep.mubr.bf16.mxu0 0
          %1365 = vmatmul.mubr.bf16.gmra.mxu0 %v1248
          %v1366 = vpop.f32.mrf.mxu0
          %v1367 = vadd.f32 %v1026, %v1366
          %v1368 = vpop.f32.mrf.mxu0
          %v1369 = vadd.f32 %v1030, %v1368
          %v1370 = vpop.f32.mrf.mxu0
          %v1371 = vpop.f32.mrf.mxu0
          %1372 = vdwg.mxu0
          %1373 = vmatprep.subr.bf16.mxu0 0
          %1374 = vmatpush1.bf16.msra.mxu0 0
          %1375 = vmatprep.subr.bf16.mxu0 0
          %1376 = vmatpush1.bf16.msra.mxu0 0
          %1377 = vmatprep.subr.bf16.mxu0 0
          %1378 = vmatpush1.bf16.msra.mxu0 0
          %1379 = vmatprep.subr.bf16.mxu0 0
          %1380 = vmatpush1.bf16.msra.mxu0 0
          %1381 = vmatprep.subr.bf16.mxu0 0
          %1382 = vmatpush1.bf16.msra.mxu0 0
          %1383 = vmatprep.subr.bf16.mxu0 0
          %1384 = vmatpush1.bf16.msra.mxu0 0
          %1385 = vmatprep.subr.bf16.mxu0 %v1206
          %1386 = vmatpush1.bf16.msra.mxu0 %v1205
          %1387 = vmatprep.subr.bf16.mxu0 %v1190
          %1388 = vmatpush1.bf16.msra.mxu0 %v1189
          %1389 = vmatprep.subr.bf16.mxu0 0
          %1390 = vmatpush2.bf16.msra.mxu0 0
          %1391 = vmatprep.subr.bf16.mxu0 0
          %1392 = vmatpush2.bf16.msra.mxu0 0
          %1393 = vmatprep.subr.bf16.mxu0 0
          %1394 = vmatpush2.bf16.msra.mxu0 0
          %1395 = vmatprep.subr.bf16.mxu0 0
          %1396 = vmatpush2.bf16.msra.mxu0 0
          %1397 = vmatprep.subr.bf16.mxu0 0
          %1398 = vmatpush2.bf16.msra.mxu0 0
          %1399 = vmatprep.subr.bf16.mxu0 0
          %1400 = vmatpush2.bf16.msra.mxu0 0
          %1401 = vmatprep.subr.bf16.mxu0 0
          %1402 = vmatpush2.bf16.msra.mxu0 0
          %1403 = vmatprep.subr.bf16.mxu0 0
          %1404 = vmatpush2.bf16.msra.mxu0 0
          %1405 = vmatprep.mubr.bf16.mxu0 0
          %1406 = vmatmul.mubr.bf16.gmra.mxu0 %v1248
          %v1407 = vpop.f32.mrf.mxu0
          %v1408 = vadd.f32 %v1034, %v1407
          %v1409 = vpop.f32.mrf.mxu0
          %v1410 = vadd.f32 %v1038, %v1409
          %v1411 = vpop.f32.mrf.mxu0
          %v1412 = vpop.f32.mrf.mxu0
          %1413 = vdwg.mxu0
          %1414 = vmatprep.subr.bf16.mxu0 0
          %1415 = vmatpush1.bf16.msra.mxu0 0
          %1416 = vmatprep.subr.bf16.mxu0 0
          %1417 = vmatpush1.bf16.msra.mxu0 0
          %1418 = vmatprep.subr.bf16.mxu0 0
          %1419 = vmatpush1.bf16.msra.mxu0 0
          %1420 = vmatprep.subr.bf16.mxu0 0
          %1421 = vmatpush1.bf16.msra.mxu0 0
          %1422 = vmatprep.subr.bf16.mxu0 0
          %1423 = vmatpush1.bf16.msra.mxu0 0
          %1424 = vmatprep.subr.bf16.mxu0 0
          %1425 = vmatpush1.bf16.msra.mxu0 0
          %1426 = vmatprep.subr.bf16.mxu0 %v1208
          %1427 = vmatpush1.bf16.msra.mxu0 %v1207
          %1428 = vmatprep.subr.bf16.mxu0 %v1192
          %1429 = vmatpush1.bf16.msra.mxu0 %v1191
          %1430 = vmatprep.subr.bf16.mxu0 0
          %1431 = vmatpush2.bf16.msra.mxu0 0
          %1432 = vmatprep.subr.bf16.mxu0 0
          %1433 = vmatpush2.bf16.msra.mxu0 0
          %1434 = vmatprep.subr.bf16.mxu0 0
          %1435 = vmatpush2.bf16.msra.mxu0 0
          %1436 = vmatprep.subr.bf16.mxu0 0
          %1437 = vmatpush2.bf16.msra.mxu0 0
          %1438 = vmatprep.subr.bf16.mxu0 0
          %1439 = vmatpush2.bf16.msra.mxu0 0
          %1440 = vmatprep.subr.bf16.mxu0 0
          %1441 = vmatpush2.bf16.msra.mxu0 0
          %1442 = vmatprep.subr.bf16.mxu0 0
          %1443 = vmatpush2.bf16.msra.mxu0 0
          %1444 = vmatprep.subr.bf16.mxu0 0
          %1445 = vmatpush2.bf16.msra.mxu0 0
          %1446 = vmatprep.mubr.bf16.mxu0 0
          %1447 = vmatmul.mubr.bf16.gmra.mxu0 %v1248
          %v1448 = vpop.f32.mrf.mxu0
          %v1449 = vadd.f32 %v1042, %v1448
          %v1450 = vpop.f32.mrf.mxu0
          %v1451 = vadd.f32 %v1046, %v1450
          %v1452 = vpop.f32.mrf.mxu0
          %v1453 = vpop.f32.mrf.mxu0
          %1454 = vdwg.mxu0
          %1455 = vmatprep.subr.bf16.mxu0 0
          %1456 = vmatpush1.bf16.msra.mxu0 0
          %1457 = vmatprep.subr.bf16.mxu0 0
          %1458 = vmatpush1.bf16.msra.mxu0 0
          %1459 = vmatprep.subr.bf16.mxu0 0
          %1460 = vmatpush1.bf16.msra.mxu0 0
          %1461 = vmatprep.subr.bf16.mxu0 0
          %1462 = vmatpush1.bf16.msra.mxu0 0
          %1463 = vmatprep.subr.bf16.mxu0 0
          %1464 = vmatpush1.bf16.msra.mxu0 0
          %1465 = vmatprep.subr.bf16.mxu0 0
          %1466 = vmatpush1.bf16.msra.mxu0 0
          %1467 = vmatprep.subr.bf16.mxu0 %v1210
          %1468 = vmatpush1.bf16.msra.mxu0 %v1209
          %1469 = vmatprep.subr.bf16.mxu0 %v1194
          %1470 = vmatpush1.bf16.msra.mxu0 %v1193
          %1471 = vmatprep.subr.bf16.mxu0 0
          %1472 = vmatpush2.bf16.msra.mxu0 0
          %1473 = vmatprep.subr.bf16.mxu0 0
          %1474 = vmatpush2.bf16.msra.mxu0 0
          %1475 = vmatprep.subr.bf16.mxu0 0
          %1476 = vmatpush2.bf16.msra.mxu0 0
          %1477 = vmatprep.subr.bf16.mxu0 0
          %1478 = vmatpush2.bf16.msra.mxu0 0
          %1479 = vmatprep.subr.bf16.mxu0 0
          %1480 = vmatpush2.bf16.msra.mxu0 0
          %1481 = vmatprep.subr.bf16.mxu0 0
          %1482 = vmatpush2.bf16.msra.mxu0 0
          %1483 = vmatprep.subr.bf16.mxu0 0
          %1484 = vmatpush2.bf16.msra.mxu0 0
          %1485 = vmatprep.subr.bf16.mxu0 0
          %1486 = vmatpush2.bf16.msra.mxu0 0
          %1487 = vmatprep.mubr.bf16.mxu0 0
          %1488 = vmatmul.mubr.bf16.gmra.mxu0 %v1248
          %v1489 = vpop.f32.mrf.mxu0
          %v1490 = vadd.f32 %v1050, %v1489
          %v1491 = vpop.f32.mrf.mxu0
          %v1492 = vadd.f32 %v1054, %v1491
          %v1493 = vpop.f32.mrf.mxu0
          %v1494 = vpop.f32.mrf.mxu0
          %1495 = vdwg.mxu0
          %1496 = vmatprep.subr.bf16.mxu0 0
          %1497 = vmatpush1.bf16.msra.mxu0 0
          %1498 = vmatprep.subr.bf16.mxu0 0
          %1499 = vmatpush1.bf16.msra.mxu0 0
          %1500 = vmatprep.subr.bf16.mxu0 0
          %1501 = vmatpush1.bf16.msra.mxu0 0
          %1502 = vmatprep.subr.bf16.mxu0 0
          %1503 = vmatpush1.bf16.msra.mxu0 0
          %1504 = vmatprep.subr.bf16.mxu0 0
          %1505 = vmatpush1.bf16.msra.mxu0 0
          %1506 = vmatprep.subr.bf16.mxu0 0
          %1507 = vmatpush1.bf16.msra.mxu0 0
          %1508 = vmatprep.subr.bf16.mxu0 %v1212
          %1509 = vmatpush1.bf16.msra.mxu0 %v1211
          %1510 = vmatprep.subr.bf16.mxu0 %v1196
          %1511 = vmatpush1.bf16.msra.mxu0 %v1195
          %1512 = vmatprep.subr.bf16.mxu0 0
          %1513 = vmatpush2.bf16.msra.mxu0 0
          %1514 = vmatprep.subr.bf16.mxu0 0
          %1515 = vmatpush2.bf16.msra.mxu0 0
          %1516 = vmatprep.subr.bf16.mxu0 0
          %1517 = vmatpush2.bf16.msra.mxu0 0
          %1518 = vmatprep.subr.bf16.mxu0 0
          %1519 = vmatpush2.bf16.msra.mxu0 0
          %1520 = vmatprep.subr.bf16.mxu0 0
          %1521 = vmatpush2.bf16.msra.mxu0 0
          %1522 = vmatprep.subr.bf16.mxu0 0
          %1523 = vmatpush2.bf16.msra.mxu0 0
          %1524 = vmatprep.subr.bf16.mxu0 0
          %1525 = vmatpush2.bf16.msra.mxu0 0
          %1526 = vmatprep.subr.bf16.mxu0 0
          %1527 = vmatpush2.bf16.msra.mxu0 0
          %1528 = vmatprep.mubr.bf16.mxu0 0
          %1529 = vmatmul.mubr.bf16.gmra.mxu0 %v1248
          %v1530 = vpop.f32.mrf.mxu0
          %v1531 = vadd.f32 %v1058, %v1530
          %v1532 = vpop.f32.mrf.mxu0
          %v1533 = vadd.f32 %v1062, %v1532
          %v1534 = vpop.f32.mrf.mxu0
          %v1535 = vpop.f32.mrf.mxu0
          %1536 = vdwg.mxu0
          %1537 = vmatprep.subr.bf16.mxu0 0
          %1538 = vmatpush1.bf16.msra.mxu0 0
          %1539 = vmatprep.subr.bf16.mxu0 0
          %1540 = vmatpush1.bf16.msra.mxu0 0
          %1541 = vmatprep.subr.bf16.mxu0 0
          %1542 = vmatpush1.bf16.msra.mxu0 0
          %1543 = vmatprep.subr.bf16.mxu0 0
          %1544 = vmatpush1.bf16.msra.mxu0 0
          %1545 = vmatprep.subr.bf16.mxu0 0
          %1546 = vmatpush1.bf16.msra.mxu0 0
          %1547 = vmatprep.subr.bf16.mxu0 0
          %1548 = vmatpush1.bf16.msra.mxu0 0
          %1549 = vmatprep.subr.bf16.mxu0 %v1214
          %1550 = vmatpush1.bf16.msra.mxu0 %v1213
          %1551 = vmatprep.subr.bf16.mxu0 %v1198
          %1552 = vmatpush1.bf16.msra.mxu0 %v1197
          %1553 = vmatprep.subr.bf16.mxu0 0
          %1554 = vmatpush2.bf16.msra.mxu0 0
          %1555 = vmatprep.subr.bf16.mxu0 0
          %1556 = vmatpush2.bf16.msra.mxu0 0
          %1557 = vmatprep.subr.bf16.mxu0 0
          %1558 = vmatpush2.bf16.msra.mxu0 0
          %1559 = vmatprep.subr.bf16.mxu0 0
          %1560 = vmatpush2.bf16.msra.mxu0 0
          %1561 = vmatprep.subr.bf16.mxu0 0
          %1562 = vmatpush2.bf16.msra.mxu0 0
          %1563 = vmatprep.subr.bf16.mxu0 0
          %1564 = vmatpush2.bf16.msra.mxu0 0
          %1565 = vmatprep.subr.bf16.mxu0 0
          %1566 = vmatpush2.bf16.msra.mxu0 0
          %1567 = vmatprep.subr.bf16.mxu0 0
          %1568 = vmatpush2.bf16.msra.mxu0 0
          %1569 = vmatprep.mubr.bf16.mxu0 0
          %1570 = vmatmul.mubr.bf16.gmra.mxu0 %v1248
          %v1571 = vpop.f32.mrf.mxu0
          %v1572 = vadd.f32 %v1066, %v1571
          %v1573 = vpop.f32.mrf.mxu0
          %v1574 = vadd.f32 %v1070, %v1573
          %v1575 = vpop.f32.mrf.mxu0
          %v1576 = vpop.f32.mrf.mxu0
          %1577 = vdwg.mxu0
          %v1578 = vmax.f32 %v1285, 0.0
          %v1579 = vmax.f32 %v1287, 0.0
          %v1580 = vmax.f32 %v1326, 0.0
          %v1581 = vmax.f32 %v1328, 0.0
          %v1582 = vmax.f32 %v1367, 0.0
          %v1583 = vmax.f32 %v1369, 0.0
          %v1584 = vmax.f32 %v1408, 0.0
          %v1585 = vmax.f32 %v1410, 0.0
          %v1586 = vmax.f32 %v1449, 0.0
          %v1587 = vmax.f32 %v1451, 0.0
          %v1588 = vmax.f32 %v1490, 0.0
          %v1589 = vmax.f32 %v1492, 0.0
          %v1590 = vmax.f32 %v1531, 0.0
          %v1591 = vmax.f32 %v1533, 0.0
          %v1592 = vmax.f32 %v1572, 0.0
          %v1593 = vmax.f32 %v1574, 0.0
          %v1594 = vpack.c.bf16 %v1578, %v1578
          %v1595 = vpack.c.bf16 %v1579, %v1579
          %v1596 = vpack.c.bf16 %v1580, %v1580
          %v1597 = vpack.c.bf16 %v1581, %v1581
          %v1598 = vpack.c.bf16 %v1582, %v1582
          %v1599 = vpack.c.bf16 %v1583, %v1583
          %v1600 = vpack.c.bf16 %v1584, %v1584
          %v1601 = vpack.c.bf16 %v1585, %v1585
          %v1602 = vpack.c.bf16 %v1586, %v1586
          %v1603 = vpack.c.bf16 %v1587, %v1587
          %v1604 = vpack.c.bf16 %v1588, %v1588
          %v1605 = vpack.c.bf16 %v1589, %v1589
          %v1606 = vpack.c.bf16 %v1590, %v1590
          %v1607 = vpack.c.bf16 %v1591, %v1591
          %v1608 = vpack.c.bf16 %v1592, %v1592
          %v1609 = vpack.c.bf16 %v1593, %v1593
          %v1610 = vld [vmem:[#allocation9] sm:$0xff]
          %v1611 = vld [vmem:[#allocation9 + $0x8] sm:$0xff]
          %v1612 = vld [vmem:[#allocation9 + $0x10] sm:$0xff]
          %v1613 = vld [vmem:[#allocation9 + $0x18] sm:$0xff]
          %v1614 = vld [vmem:[#allocation9 + $0x20] sm:$0xff]
          %v1615 = vld [vmem:[#allocation9 + $0x28] sm:$0xff]
          %v1616 = vld [vmem:[#allocation9 + $0x30] sm:$0xff]
          %v1617 = vld [vmem:[#allocation9 + $0x38] sm:$0xff]
          %v1618 = vld [vmem:[#allocation9 + $0x40] sm:$0xff]
          %v1619 = vld [vmem:[#allocation9 + $0x48] sm:$0xff]
          %v1620 = vld [vmem:[#allocation9 + $0x50] sm:$0xff]
          %v1621 = vld [vmem:[#allocation9 + $0x58] sm:$0xff]
          %v1622 = vld [vmem:[#allocation9 + $0x60] sm:$0xff]
          %v1623 = vld [vmem:[#allocation9 + $0x68] sm:$0xff]
          %v1624 = vld [vmem:[#allocation9 + $0x70] sm:$0xff]
          %v1625 = vld [vmem:[#allocation9 + $0x78] sm:$0xff]
          %v1626 = vld [vmem:[#allocation9 + $0x80] sm:$0xff]
          %v1627 = vld [vmem:[#allocation9 + $0x88] sm:$0xff]
          %v1628 = vld [vmem:[#allocation9 + $0x90] sm:$0xff]
          %v1629 = vld [vmem:[#allocation9 + $0x98] sm:$0xff]
          %v1630 = vld [vmem:[#allocation9 + $0xa0] sm:$0xff]
          %v1631 = vld [vmem:[#allocation9 + $0xa8] sm:$0xff]
          %v1632 = vld [vmem:[#allocation9 + $0xb0] sm:$0xff]
          %v1633 = vld [vmem:[#allocation9 + $0xb8] sm:$0xff]
          %v1634 = vld [vmem:[#allocation9 + $0xc0] sm:$0xff]
          %v1635 = vld [vmem:[#allocation9 + $0xc8] sm:$0xff]
          %v1636 = vld [vmem:[#allocation9 + $0xd0] sm:$0xff]
          %v1637 = vld [vmem:[#allocation9 + $0xd8] sm:$0xff]
          %v1638 = vld [vmem:[#allocation9 + $0xe0] sm:$0xff]
          %v1639 = vld [vmem:[#allocation9 + $0xe8] sm:$0xff]
          %v1640 = vld [vmem:[#allocation9 + $0xf0] sm:$0xff]
          %v1641 = vld [vmem:[#allocation9 + $0xf8] sm:$0xff]
          %v1642 = vld [vmem:[#allocation9 + $0x100] sm:$0xff]
          %v1643 = vld [vmem:[#allocation9 + $0x108] sm:$0xff]
          %v1644 = vld [vmem:[#allocation9 + $0x110] sm:$0xff]
          %v1645 = vld [vmem:[#allocation9 + $0x118] sm:$0xff]
          %v1646 = vld [vmem:[#allocation9 + $0x120] sm:$0xff]
          %v1647 = vld [vmem:[#allocation9 + $0x128] sm:$0xff]
          %v1648 = vld [vmem:[#allocation9 + $0x130] sm:$0xff]
          %v1649 = vld [vmem:[#allocation9 + $0x138] sm:$0xff]
          %v1650 = vld [vmem:[#allocation9 + $0x140] sm:$0xff]
          %v1651 = vld [vmem:[#allocation9 + $0x148] sm:$0xff]
          %v1652 = vld [vmem:[#allocation9 + $0x150] sm:$0xff]
          %v1653 = vld [vmem:[#allocation9 + $0x158] sm:$0xff]
          %v1654 = vld [vmem:[#allocation9 + $0x160] sm:$0xff]
          %v1655 = vld [vmem:[#allocation9 + $0x168] sm:$0xff]
          %v1656 = vld [vmem:[#allocation9 + $0x170] sm:$0xff]
          %v1657 = vld [vmem:[#allocation9 + $0x178] sm:$0xff]
          %v1658 = vld [vmem:[#allocation9 + $0x180] sm:$0xff]
          %v1659 = vld [vmem:[#allocation9 + $0x188] sm:$0xff]
          %v1660 = vld [vmem:[#allocation9 + $0x190] sm:$0xff]
          %v1661 = vld [vmem:[#allocation9 + $0x198] sm:$0xff]
          %v1662 = vld [vmem:[#allocation9 + $0x1a0] sm:$0xff]
          %v1663 = vld [vmem:[#allocation9 + $0x1a8] sm:$0xff]
          %v1664 = vld [vmem:[#allocation9 + $0x1b0] sm:$0xff]
          %v1665 = vld [vmem:[#allocation9 + $0x1b8] sm:$0xff]
          %v1666 = vld [vmem:[#allocation9 + $0x1c0] sm:$0xff]
          %v1667 = vld [vmem:[#allocation9 + $0x1c8] sm:$0xff]
          %v1668 = vld [vmem:[#allocation9 + $0x1d0] sm:$0xff]
          %v1669 = vld [vmem:[#allocation9 + $0x1d8] sm:$0xff]
          %v1670 = vld [vmem:[#allocation9 + $0x1e0] sm:$0xff]
          %v1671 = vld [vmem:[#allocation9 + $0x1e8] sm:$0xff]
          %v1672 = vld [vmem:[#allocation9 + $0x1f0] sm:$0xff]
          %v1673 = vld [vmem:[#allocation9 + $0x1f8] sm:$0xff]
          %v1674 = vld [vmem:[#allocation9 + $0x200] sm:$0xff]
          %v1675 = vld [vmem:[#allocation9 + $0x208] sm:$0xff]
          %v1676 = vld [vmem:[#allocation9 + $0x210] sm:$0xff]
          %v1677 = vld [vmem:[#allocation9 + $0x218] sm:$0xff]
          %v1678 = vld [vmem:[#allocation9 + $0x220] sm:$0xff]
          %v1679 = vld [vmem:[#allocation9 + $0x228] sm:$0xff]
          %v1680 = vld [vmem:[#allocation9 + $0x230] sm:$0xff]
          %v1681 = vld [vmem:[#allocation9 + $0x238] sm:$0xff]
          %v1682 = vld [vmem:[#allocation9 + $0x240] sm:$0xff]
          %v1683 = vld [vmem:[#allocation9 + $0x248] sm:$0xff]
          %v1684 = vld [vmem:[#allocation9 + $0x250] sm:$0xff]
          %v1685 = vld [vmem:[#allocation9 + $0x258] sm:$0xff]
          %v1686 = vld [vmem:[#allocation9 + $0x260] sm:$0xff]
          %v1687 = vld [vmem:[#allocation9 + $0x268] sm:$0xff]
          %v1688 = vld [vmem:[#allocation9 + $0x270] sm:$0xff]
          %v1689 = vld [vmem:[#allocation9 + $0x278] sm:$0xff]
          %v1690 = vld [vmem:[#allocation9 + $0x280] sm:$0xff]
          %v1691 = vld [vmem:[#allocation9 + $0x288] sm:$0xff]
          %v1692 = vld [vmem:[#allocation9 + $0x290] sm:$0xff]
          %v1693 = vld [vmem:[#allocation9 + $0x298] sm:$0xff]
          %v1694 = vld [vmem:[#allocation9 + $0x2a0] sm:$0xff]
          %v1695 = vld [vmem:[#allocation9 + $0x2a8] sm:$0xff]
          %v1696 = vld [vmem:[#allocation9 + $0x2b0] sm:$0xff]
          %v1697 = vld [vmem:[#allocation9 + $0x2b8] sm:$0xff]
          %v1698 = vld [vmem:[#allocation9 + $0x2c0] sm:$0xff]
          %v1699 = vld [vmem:[#allocation9 + $0x2c8] sm:$0xff]
          %v1700 = vld [vmem:[#allocation9 + $0x2d0] sm:$0xff]
          %v1701 = vld [vmem:[#allocation9 + $0x2d8] sm:$0xff]
          %v1702 = vld [vmem:[#allocation9 + $0x2e0] sm:$0xff]
          %v1703 = vld [vmem:[#allocation9 + $0x2e8] sm:$0xff]
          %v1704 = vld [vmem:[#allocation9 + $0x2f0] sm:$0xff]
          %v1705 = vld [vmem:[#allocation9 + $0x2f8] sm:$0xff]
          %v1706 = vld [vmem:[#allocation9 + $0x300] sm:$0xff]
          %v1707 = vld [vmem:[#allocation9 + $0x308] sm:$0xff]
          %v1708 = vld [vmem:[#allocation9 + $0x310] sm:$0xff]
          %v1709 = vld [vmem:[#allocation9 + $0x318] sm:$0xff]
          %v1710 = vld [vmem:[#allocation9 + $0x320] sm:$0xff]
          %v1711 = vld [vmem:[#allocation9 + $0x328] sm:$0xff]
          %v1712 = vld [vmem:[#allocation9 + $0x330] sm:$0xff]
          %v1713 = vld [vmem:[#allocation9 + $0x338] sm:$0xff]
          %v1714 = vld [vmem:[#allocation9 + $0x340] sm:$0xff]
          %v1715 = vld [vmem:[#allocation9 + $0x348] sm:$0xff]
          %v1716 = vld [vmem:[#allocation9 + $0x350] sm:$0xff]
          %v1717 = vld [vmem:[#allocation9 + $0x358] sm:$0xff]
          %v1718 = vld [vmem:[#allocation9 + $0x360] sm:$0xff]
          %v1719 = vld [vmem:[#allocation9 + $0x368] sm:$0xff]
          %v1720 = vld [vmem:[#allocation9 + $0x370] sm:$0xff]
          %v1721 = vld [vmem:[#allocation9 + $0x378] sm:$0xff]
          %v1722 = vld [vmem:[#allocation9 + $0x380] sm:$0xff]
          %v1723 = vld [vmem:[#allocation9 + $0x388] sm:$0xff]
          %v1724 = vld [vmem:[#allocation9 + $0x390] sm:$0xff]
          %v1725 = vld [vmem:[#allocation9 + $0x398] sm:$0xff]
          %v1726 = vld [vmem:[#allocation9 + $0x3a0] sm:$0xff]
          %v1727 = vld [vmem:[#allocation9 + $0x3a8] sm:$0xff]
          %v1728 = vld [vmem:[#allocation9 + $0x3b0] sm:$0xff]
          %v1729 = vld [vmem:[#allocation9 + $0x3b8] sm:$0xff]
          %v1730 = vld [vmem:[#allocation9 + $0x3c0] sm:$0xff]
          %v1731 = vld [vmem:[#allocation9 + $0x3c8] sm:$0xff]
          %v1732 = vld [vmem:[#allocation9 + $0x3d0] sm:$0xff]
          %v1733 = vld [vmem:[#allocation9 + $0x3d8] sm:$0xff]
          %v1734 = vld [vmem:[#allocation9 + $0x3e0] sm:$0xff]
          %v1735 = vld [vmem:[#allocation9 + $0x3e8] sm:$0xff]
          %v1736 = vld [vmem:[#allocation9 + $0x3f0] sm:$0xff]
          %v1737 = vld [vmem:[#allocation9 + $0x3f8] sm:$0xff]
          %v1738 = vld [vmem:[#allocation9 + $0x400] sm:$0xff]
          %v1739 = vld [vmem:[#allocation9 + $0x408] sm:$0xff]
          %v1740 = vld [vmem:[#allocation9 + $0x410] sm:$0xff]
          %v1741 = vld [vmem:[#allocation9 + $0x418] sm:$0xff]
          %v1742 = vld [vmem:[#allocation9 + $0x420] sm:$0xff]
          %v1743 = vld [vmem:[#allocation9 + $0x428] sm:$0xff]
          %v1744 = vld [vmem:[#allocation9 + $0x430] sm:$0xff]
          %v1745 = vld [vmem:[#allocation9 + $0x438] sm:$0xff]
          %v1746 = vld [vmem:[#allocation9 + $0x440] sm:$0xff]
          %v1747 = vld [vmem:[#allocation9 + $0x448] sm:$0xff]
          %v1748 = vld [vmem:[#allocation9 + $0x450] sm:$0xff]
          %v1749 = vld [vmem:[#allocation9 + $0x458] sm:$0xff]
          %v1750 = vld [vmem:[#allocation9 + $0x460] sm:$0xff]
          %v1751 = vld [vmem:[#allocation9 + $0x468] sm:$0xff]
          %v1752 = vld [vmem:[#allocation9 + $0x470] sm:$0xff]
          %v1753 = vld [vmem:[#allocation9 + $0x478] sm:$0xff]
          %v1754 = vld [vmem:[#allocation9 + $0x480] sm:$0xff]
          %v1755 = vld [vmem:[#allocation9 + $0x488] sm:$0xff]
          %v1756 = vld [vmem:[#allocation9 + $0x490] sm:$0xff]
          %v1757 = vld [vmem:[#allocation9 + $0x498] sm:$0xff]
          %v1758 = vld [vmem:[#allocation9 + $0x4a0] sm:$0xff]
          %v1759 = vld [vmem:[#allocation9 + $0x4a8] sm:$0xff]
          %v1760 = vld [vmem:[#allocation9 + $0x4b0] sm:$0xff]
          %v1761 = vld [vmem:[#allocation9 + $0x4b8] sm:$0xff]
          %v1762 = vld [vmem:[#allocation9 + $0x4c0] sm:$0xff]
          %v1763 = vld [vmem:[#allocation9 + $0x4c8] sm:$0xff]
          %v1764 = vld [vmem:[#allocation9 + $0x4d0] sm:$0xff]
          %v1765 = vld [vmem:[#allocation9 + $0x4d8] sm:$0xff]
          %v1766 = vld [vmem:[#allocation9 + $0x4e0] sm:$0xff]
          %v1767 = vld [vmem:[#allocation9 + $0x4e8] sm:$0xff]
          %v1768 = vld [vmem:[#allocation9 + $0x4f0] sm:$0xff]
          %v1769 = vld [vmem:[#allocation9 + $0x4f8] sm:$0xff]
          %v1770 = vld [vmem:[#allocation9 + $0x500] sm:$0xff]
          %v1771 = vld [vmem:[#allocation9 + $0x508] sm:$0xff]
          %v1772 = vld [vmem:[#allocation9 + $0x510] sm:$0xff]
          %v1773 = vld [vmem:[#allocation9 + $0x518] sm:$0xff]
          %v1774 = vld [vmem:[#allocation9 + $0x520] sm:$0xff]
          %v1775 = vld [vmem:[#allocation9 + $0x528] sm:$0xff]
          %v1776 = vld [vmem:[#allocation9 + $0x530] sm:$0xff]
          %v1777 = vld [vmem:[#allocation9 + $0x538] sm:$0xff]
          %v1778 = vld [vmem:[#allocation9 + $0x540] sm:$0xff]
          %v1779 = vld [vmem:[#allocation9 + $0x548] sm:$0xff]
          %v1780 = vld [vmem:[#allocation9 + $0x550] sm:$0xff]
          %v1781 = vld [vmem:[#allocation9 + $0x558] sm:$0xff]
          %v1782 = vld [vmem:[#allocation9 + $0x560] sm:$0xff]
          %v1783 = vld [vmem:[#allocation9 + $0x568] sm:$0xff]
          %v1784 = vld [vmem:[#allocation9 + $0x570] sm:$0xff]
          %v1785 = vld [vmem:[#allocation9 + $0x578] sm:$0xff]
          %v1786 = vld [vmem:[#allocation9 + $0x580] sm:$0xff]
          %v1787 = vld [vmem:[#allocation9 + $0x588] sm:$0xff]
          %v1788 = vld [vmem:[#allocation9 + $0x590] sm:$0xff]
          %v1789 = vld [vmem:[#allocation9 + $0x598] sm:$0xff]
          %v1790 = vld [vmem:[#allocation9 + $0x5a0] sm:$0xff]
          %v1791 = vld [vmem:[#allocation9 + $0x5a8] sm:$0xff]
          %v1792 = vld [vmem:[#allocation9 + $0x5b0] sm:$0xff]
          %v1793 = vld [vmem:[#allocation9 + $0x5b8] sm:$0xff]
          %v1794 = vld [vmem:[#allocation9 + $0x5c0] sm:$0xff]
          %v1795 = vld [vmem:[#allocation9 + $0x5c8] sm:$0xff]
          %v1796 = vld [vmem:[#allocation9 + $0x5d0] sm:$0xff]
          %v1797 = vld [vmem:[#allocation9 + $0x5d8] sm:$0xff]
          %v1798 = vld [vmem:[#allocation9 + $0x5e0] sm:$0xff]
          %v1799 = vld [vmem:[#allocation9 + $0x5e8] sm:$0xff]
          %v1800 = vld [vmem:[#allocation9 + $0x5f0] sm:$0xff]
          %v1801 = vld [vmem:[#allocation9 + $0x5f8] sm:$0xff]
          %v1802 = vld [vmem:[#allocation9 + $0x600] sm:$0xff]
          %v1803 = vld [vmem:[#allocation9 + $0x608] sm:$0xff]
          %v1804 = vld [vmem:[#allocation9 + $0x610] sm:$0xff]
          %v1805 = vld [vmem:[#allocation9 + $0x618] sm:$0xff]
          %v1806 = vld [vmem:[#allocation9 + $0x620] sm:$0xff]
          %v1807 = vld [vmem:[#allocation9 + $0x628] sm:$0xff]
          %v1808 = vld [vmem:[#allocation9 + $0x630] sm:$0xff]
          %v1809 = vld [vmem:[#allocation9 + $0x638] sm:$0xff]
          %v1810 = vld [vmem:[#allocation9 + $0x640] sm:$0xff]
          %v1811 = vld [vmem:[#allocation9 + $0x648] sm:$0xff]
          %v1812 = vld [vmem:[#allocation9 + $0x650] sm:$0xff]
          %v1813 = vld [vmem:[#allocation9 + $0x658] sm:$0xff]
          %v1814 = vld [vmem:[#allocation9 + $0x660] sm:$0xff]
          %v1815 = vld [vmem:[#allocation9 + $0x668] sm:$0xff]
          %v1816 = vld [vmem:[#allocation9 + $0x670] sm:$0xff]
          %v1817 = vld [vmem:[#allocation9 + $0x678] sm:$0xff]
          %v1818 = vld [vmem:[#allocation9 + $0x680] sm:$0xff]
          %v1819 = vld [vmem:[#allocation9 + $0x688] sm:$0xff]
          %v1820 = vld [vmem:[#allocation9 + $0x690] sm:$0xff]
          %v1821 = vld [vmem:[#allocation9 + $0x698] sm:$0xff]
          %v1822 = vld [vmem:[#allocation9 + $0x6a0] sm:$0xff]
          %v1823 = vld [vmem:[#allocation9 + $0x6a8] sm:$0xff]
          %v1824 = vld [vmem:[#allocation9 + $0x6b0] sm:$0xff]
          %v1825 = vld [vmem:[#allocation9 + $0x6b8] sm:$0xff]
          %v1826 = vld [vmem:[#allocation9 + $0x6c0] sm:$0xff]
          %v1827 = vld [vmem:[#allocation9 + $0x6c8] sm:$0xff]
          %v1828 = vld [vmem:[#allocation9 + $0x6d0] sm:$0xff]
          %v1829 = vld [vmem:[#allocation9 + $0x6d8] sm:$0xff]
          %v1830 = vld [vmem:[#allocation9 + $0x6e0] sm:$0xff]
          %v1831 = vld [vmem:[#allocation9 + $0x6e8] sm:$0xff]
          %v1832 = vld [vmem:[#allocation9 + $0x6f0] sm:$0xff]
          %v1833 = vld [vmem:[#allocation9 + $0x6f8] sm:$0xff]
          %v1834 = vld [vmem:[#allocation9 + $0x700] sm:$0xff]
          %v1835 = vld [vmem:[#allocation9 + $0x708] sm:$0xff]
          %v1836 = vld [vmem:[#allocation9 + $0x710] sm:$0xff]
          %v1837 = vld [vmem:[#allocation9 + $0x718] sm:$0xff]
          %v1838 = vld [vmem:[#allocation9 + $0x720] sm:$0xff]
          %v1839 = vld [vmem:[#allocation9 + $0x728] sm:$0xff]
          %v1840 = vld [vmem:[#allocation9 + $0x730] sm:$0xff]
          %v1841 = vld [vmem:[#allocation9 + $0x738] sm:$0xff]
          %v1842 = vld [vmem:[#allocation9 + $0x740] sm:$0xff]
          %v1843 = vld [vmem:[#allocation9 + $0x748] sm:$0xff]
          %v1844 = vld [vmem:[#allocation9 + $0x750] sm:$0xff]
          %v1845 = vld [vmem:[#allocation9 + $0x758] sm:$0xff]
          %v1846 = vld [vmem:[#allocation9 + $0x760] sm:$0xff]
          %v1847 = vld [vmem:[#allocation9 + $0x768] sm:$0xff]
          %v1848 = vld [vmem:[#allocation9 + $0x770] sm:$0xff]
          %v1849 = vld [vmem:[#allocation9 + $0x778] sm:$0xff]
          %v1850 = vld [vmem:[#allocation9 + $0x780] sm:$0xff]
          %v1851 = vld [vmem:[#allocation9 + $0x788] sm:$0xff]
          %v1852 = vld [vmem:[#allocation9 + $0x790] sm:$0xff]
          %v1853 = vld [vmem:[#allocation9 + $0x798] sm:$0xff]
          %v1854 = vld [vmem:[#allocation9 + $0x7a0] sm:$0xff]
          %v1855 = vld [vmem:[#allocation9 + $0x7a8] sm:$0xff]
          %v1856 = vld [vmem:[#allocation9 + $0x7b0] sm:$0xff]
          %v1857 = vld [vmem:[#allocation9 + $0x7b8] sm:$0xff]
          %v1858 = vld [vmem:[#allocation9 + $0x7c0] sm:$0xff]
          %v1859 = vld [vmem:[#allocation9 + $0x7c8] sm:$0xff]
          %v1860 = vld [vmem:[#allocation9 + $0x7d0] sm:$0xff]
          %v1861 = vld [vmem:[#allocation9 + $0x7d8] sm:$0xff]
          %v1862 = vld [vmem:[#allocation9 + $0x7e0] sm:$0xff]
          %v1863 = vld [vmem:[#allocation9 + $0x7e8] sm:$0xff]
          %v1864 = vld [vmem:[#allocation9 + $0x7f0] sm:$0xff]
          %v1865 = vld [vmem:[#allocation9 + $0x7f8] sm:$0xff]
          %v1866 = vld [vmem:[#allocation9 + $0x800] sm:$0xff]
          %v1867 = vld [vmem:[#allocation9 + $0x808] sm:$0xff]
          %v1868 = vld [vmem:[#allocation9 + $0x810] sm:$0xff]
          %v1869 = vld [vmem:[#allocation9 + $0x818] sm:$0xff]
          %v1870 = vld [vmem:[#allocation9 + $0x820] sm:$0xff]
          %v1871 = vld [vmem:[#allocation9 + $0x828] sm:$0xff]
          %v1872 = vld [vmem:[#allocation9 + $0x830] sm:$0xff]
          %v1873 = vld [vmem:[#allocation9 + $0x838] sm:$0xff]
          %v1874 = vld [vmem:[#allocation9 + $0x840] sm:$0xff]
          %v1875 = vld [vmem:[#allocation9 + $0x848] sm:$0xff]
          %v1876 = vld [vmem:[#allocation9 + $0x850] sm:$0xff]
          %v1877 = vld [vmem:[#allocation9 + $0x858] sm:$0xff]
          %v1878 = vld [vmem:[#allocation9 + $0x860] sm:$0xff]
          %v1879 = vld [vmem:[#allocation9 + $0x868] sm:$0xff]
          %v1880 = vld [vmem:[#allocation9 + $0x870] sm:$0xff]
          %v1881 = vld [vmem:[#allocation9 + $0x878] sm:$0xff]
          %v1882 = vld [vmem:[#allocation9 + $0x880] sm:$0xff]
          %v1883 = vld [vmem:[#allocation9 + $0x888] sm:$0xff]
          %v1884 = vld [vmem:[#allocation9 + $0x890] sm:$0xff]
          %v1885 = vld [vmem:[#allocation9 + $0x898] sm:$0xff]
          %v1886 = vld [vmem:[#allocation9 + $0x8a0] sm:$0xff]
          %v1887 = vld [vmem:[#allocation9 + $0x8a8] sm:$0xff]
          %v1888 = vld [vmem:[#allocation9 + $0x8b0] sm:$0xff]
          %v1889 = vld [vmem:[#allocation9 + $0x8b8] sm:$0xff]
          %v1890 = vld [vmem:[#allocation9 + $0x8c0] sm:$0xff]
          %v1891 = vld [vmem:[#allocation9 + $0x8c8] sm:$0xff]
          %v1892 = vld [vmem:[#allocation9 + $0x8d0] sm:$0xff]
          %v1893 = vld [vmem:[#allocation9 + $0x8d8] sm:$0xff]
          %v1894 = vld [vmem:[#allocation9 + $0x8e0] sm:$0xff]
          %v1895 = vld [vmem:[#allocation9 + $0x8e8] sm:$0xff]
          %v1896 = vld [vmem:[#allocation9 + $0x8f0] sm:$0xff]
          %v1897 = vld [vmem:[#allocation9 + $0x8f8] sm:$0xff]
          %v1898 = vld [vmem:[#allocation9 + $0x900] sm:$0xff]
          %v1899 = vld [vmem:[#allocation9 + $0x908] sm:$0xff]
          %v1900 = vld [vmem:[#allocation9 + $0x910] sm:$0xff]
          %v1901 = vld [vmem:[#allocation9 + $0x918] sm:$0xff]
          %v1902 = vld [vmem:[#allocation9 + $0x920] sm:$0xff]
          %v1903 = vld [vmem:[#allocation9 + $0x928] sm:$0xff]
          %v1904 = vld [vmem:[#allocation9 + $0x930] sm:$0xff]
          %v1905 = vld [vmem:[#allocation9 + $0x938] sm:$0xff]
          %v1906 = vld [vmem:[#allocation9 + $0x940] sm:$0xff]
          %v1907 = vld [vmem:[#allocation9 + $0x948] sm:$0xff]
          %v1908 = vld [vmem:[#allocation9 + $0x950] sm:$0xff]
          %v1909 = vld [vmem:[#allocation9 + $0x958] sm:$0xff]
          %v1910 = vld [vmem:[#allocation9 + $0x960] sm:$0xff]
          %v1911 = vld [vmem:[#allocation9 + $0x968] sm:$0xff]
          %v1912 = vld [vmem:[#allocation9 + $0x970] sm:$0xff]
          %v1913 = vld [vmem:[#allocation9 + $0x978] sm:$0xff]
          %v1914 = vld [vmem:[#allocation9 + $0x980] sm:$0xff]
          %v1915 = vld [vmem:[#allocation9 + $0x988] sm:$0xff]
          %v1916 = vld [vmem:[#allocation9 + $0x990] sm:$0xff]
          %v1917 = vld [vmem:[#allocation9 + $0x998] sm:$0xff]
          %v1918 = vld [vmem:[#allocation9 + $0x9a0] sm:$0xff]
          %v1919 = vld [vmem:[#allocation9 + $0x9a8] sm:$0xff]
          %v1920 = vld [vmem:[#allocation9 + $0x9b0] sm:$0xff]
          %v1921 = vld [vmem:[#allocation9 + $0x9b8] sm:$0xff]
          %v1922 = vld [vmem:[#allocation9 + $0x9c0] sm:$0xff]
          %v1923 = vld [vmem:[#allocation9 + $0x9c8] sm:$0xff]
          %v1924 = vld [vmem:[#allocation9 + $0x9d0] sm:$0xff]
          %v1925 = vld [vmem:[#allocation9 + $0x9d8] sm:$0xff]
          %v1926 = vld [vmem:[#allocation9 + $0x9e0] sm:$0xff]
          %v1927 = vld [vmem:[#allocation9 + $0x9e8] sm:$0xff]
          %v1928 = vld [vmem:[#allocation9 + $0x9f0] sm:$0xff]
          %v1929 = vld [vmem:[#allocation9 + $0x9f8] sm:$0xff]
          %v1930 = vld [vmem:[#allocation9 + $0xa00] sm:$0xff]
          %v1931 = vld [vmem:[#allocation9 + $0xa08] sm:$0xff]
          %v1932 = vld [vmem:[#allocation9 + $0xa10] sm:$0xff]
          %v1933 = vld [vmem:[#allocation9 + $0xa18] sm:$0xff]
          %v1934 = vld [vmem:[#allocation9 + $0xa20] sm:$0xff]
          %v1935 = vld [vmem:[#allocation9 + $0xa28] sm:$0xff]
          %v1936 = vld [vmem:[#allocation9 + $0xa30] sm:$0xff]
          %v1937 = vld [vmem:[#allocation9 + $0xa38] sm:$0xff]
          %v1938 = vld [vmem:[#allocation9 + $0xa40] sm:$0xff]
          %v1939 = vld [vmem:[#allocation9 + $0xa48] sm:$0xff]
          %v1940 = vld [vmem:[#allocation9 + $0xa50] sm:$0xff]
          %v1941 = vld [vmem:[#allocation9 + $0xa58] sm:$0xff]
          %v1942 = vld [vmem:[#allocation9 + $0xa60] sm:$0xff]
          %v1943 = vld [vmem:[#allocation9 + $0xa68] sm:$0xff]
          %v1944 = vld [vmem:[#allocation9 + $0xa70] sm:$0xff]
          %v1945 = vld [vmem:[#allocation9 + $0xa78] sm:$0xff]
          %v1946 = vld [vmem:[#allocation9 + $0xa80] sm:$0xff]
          %v1947 = vld [vmem:[#allocation9 + $0xa88] sm:$0xff]
          %v1948 = vld [vmem:[#allocation9 + $0xa90] sm:$0xff]
          %v1949 = vld [vmem:[#allocation9 + $0xa98] sm:$0xff]
          %v1950 = vld [vmem:[#allocation9 + $0xaa0] sm:$0xff]
          %v1951 = vld [vmem:[#allocation9 + $0xaa8] sm:$0xff]
          %v1952 = vld [vmem:[#allocation9 + $0xab0] sm:$0xff]
          %v1953 = vld [vmem:[#allocation9 + $0xab8] sm:$0xff]
          %v1954 = vld [vmem:[#allocation9 + $0xac0] sm:$0xff]
          %v1955 = vld [vmem:[#allocation9 + $0xac8] sm:$0xff]
          %v1956 = vld [vmem:[#allocation9 + $0xad0] sm:$0xff]
          %v1957 = vld [vmem:[#allocation9 + $0xad8] sm:$0xff]
          %v1958 = vld [vmem:[#allocation9 + $0xae0] sm:$0xff]
          %v1959 = vld [vmem:[#allocation9 + $0xae8] sm:$0xff]
          %v1960 = vld [vmem:[#allocation9 + $0xaf0] sm:$0xff]
          %v1961 = vld [vmem:[#allocation9 + $0xaf8] sm:$0xff]
          %v1962 = vld [vmem:[#allocation9 + $0xb00] sm:$0xff]
          %v1963 = vld [vmem:[#allocation9 + $0xb08] sm:$0xff]
          %v1964 = vld [vmem:[#allocation9 + $0xb10] sm:$0xff]
          %v1965 = vld [vmem:[#allocation9 + $0xb18] sm:$0xff]
          %v1966 = vld [vmem:[#allocation9 + $0xb20] sm:$0xff]
          %v1967 = vld [vmem:[#allocation9 + $0xb28] sm:$0xff]
          %v1968 = vld [vmem:[#allocation9 + $0xb30] sm:$0xff]
          %v1969 = vld [vmem:[#allocation9 + $0xb38] sm:$0xff]
          %v1970 = vld [vmem:[#allocation9 + $0xb40] sm:$0xff]
          %v1971 = vld [vmem:[#allocation9 + $0xb48] sm:$0xff]
          %v1972 = vld [vmem:[#allocation9 + $0xb50] sm:$0xff]
          %v1973 = vld [vmem:[#allocation9 + $0xb58] sm:$0xff]
          %v1974 = vld [vmem:[#allocation9 + $0xb60] sm:$0xff]
          %v1975 = vld [vmem:[#allocation9 + $0xb68] sm:$0xff]
          %v1976 = vld [vmem:[#allocation9 + $0xb70] sm:$0xff]
          %v1977 = vld [vmem:[#allocation9 + $0xb78] sm:$0xff]
          %v1978 = vld [vmem:[#allocation9 + $0xb80] sm:$0xff]
          %v1979 = vld [vmem:[#allocation9 + $0xb88] sm:$0xff]
          %v1980 = vld [vmem:[#allocation9 + $0xb90] sm:$0xff]
          %v1981 = vld [vmem:[#allocation9 + $0xb98] sm:$0xff]
          %v1982 = vld [vmem:[#allocation9 + $0xba0] sm:$0xff]
          %v1983 = vld [vmem:[#allocation9 + $0xba8] sm:$0xff]
          %v1984 = vld [vmem:[#allocation9 + $0xbb0] sm:$0xff]
          %v1985 = vld [vmem:[#allocation9 + $0xbb8] sm:$0xff]
          %v1986 = vld [vmem:[#allocation9 + $0xbc0] sm:$0xff]
          %v1987 = vld [vmem:[#allocation9 + $0xbc8] sm:$0xff]
          %v1988 = vld [vmem:[#allocation9 + $0xbd0] sm:$0xff]
          %v1989 = vld [vmem:[#allocation9 + $0xbd8] sm:$0xff]
          %v1990 = vld [vmem:[#allocation9 + $0xbe0] sm:$0xff]
          %v1991 = vld [vmem:[#allocation9 + $0xbe8] sm:$0xff]
          %v1992 = vld [vmem:[#allocation9 + $0xbf0] sm:$0xff]
          %v1993 = vld [vmem:[#allocation9 + $0xbf8] sm:$0xff]
          %v1994 = vld [vmem:[#allocation9 + $0xc00] sm:$0xff]
          %v1995 = vld [vmem:[#allocation9 + $0xc08] sm:$0xff]
          %v1996 = vld [vmem:[#allocation9 + $0xc10] sm:$0xff]
          %v1997 = vld [vmem:[#allocation9 + $0xc18] sm:$0xff]
          %v1998 = vld [vmem:[#allocation9 + $0xc20] sm:$0xff]
          %v1999 = vld [vmem:[#allocation9 + $0xc28] sm:$0xff]
          %v2000 = vld [vmem:[#allocation9 + $0xc30] sm:$0xff]
          %v2001 = vld [vmem:[#allocation9 + $0xc38] sm:$0xff]
          %v2002 = vld [vmem:[#allocation9 + $0xc40] sm:$0xff]
          %v2003 = vld [vmem:[#allocation9 + $0xc48] sm:$0xff]
          %v2004 = vld [vmem:[#allocation9 + $0xc50] sm:$0xff]
          %v2005 = vld [vmem:[#allocation9 + $0xc58] sm:$0xff]
          %v2006 = vld [vmem:[#allocation9 + $0xc60] sm:$0xff]
          %v2007 = vld [vmem:[#allocation9 + $0xc68] sm:$0xff]
          %v2008 = vld [vmem:[#allocation9 + $0xc70] sm:$0xff]
          %v2009 = vld [vmem:[#allocation9 + $0xc78] sm:$0xff]
          %v2010 = vld [vmem:[#allocation9 + $0xc80] sm:$0xff]
          %v2011 = vld [vmem:[#allocation9 + $0xc88] sm:$0xff]
          %v2012 = vld [vmem:[#allocation9 + $0xc90] sm:$0xff]
          %v2013 = vld [vmem:[#allocation9 + $0xc98] sm:$0xff]
          %v2014 = vld [vmem:[#allocation9 + $0xca0] sm:$0xff]
          %v2015 = vld [vmem:[#allocation9 + $0xca8] sm:$0xff]
          %v2016 = vld [vmem:[#allocation9 + $0xcb0] sm:$0xff]
          %v2017 = vld [vmem:[#allocation9 + $0xcb8] sm:$0xff]
          %v2018 = vld [vmem:[#allocation9 + $0xcc0] sm:$0xff]
          %v2019 = vld [vmem:[#allocation9 + $0xcc8] sm:$0xff]
          %v2020 = vld [vmem:[#allocation9 + $0xcd0] sm:$0xff]
          %v2021 = vld [vmem:[#allocation9 + $0xcd8] sm:$0xff]
          %v2022 = vld [vmem:[#allocation9 + $0xce0] sm:$0xff]
          %v2023 = vld [vmem:[#allocation9 + $0xce8] sm:$0xff]
          %v2024 = vld [vmem:[#allocation9 + $0xcf0] sm:$0xff]
          %v2025 = vld [vmem:[#allocation9 + $0xcf8] sm:$0xff]
          %v2026 = vld [vmem:[#allocation9 + $0xd00] sm:$0xff]
          %v2027 = vld [vmem:[#allocation9 + $0xd08] sm:$0xff]
          %v2028 = vld [vmem:[#allocation9 + $0xd10] sm:$0xff]
          %v2029 = vld [vmem:[#allocation9 + $0xd18] sm:$0xff]
          %v2030 = vld [vmem:[#allocation9 + $0xd20] sm:$0xff]
          %v2031 = vld [vmem:[#allocation9 + $0xd28] sm:$0xff]
          %v2032 = vld [vmem:[#allocation9 + $0xd30] sm:$0xff]
          %v2033 = vld [vmem:[#allocation9 + $0xd38] sm:$0xff]
          %v2034 = vld [vmem:[#allocation9 + $0xd40] sm:$0xff]
          %v2035 = vld [vmem:[#allocation9 + $0xd48] sm:$0xff]
          %v2036 = vld [vmem:[#allocation9 + $0xd50] sm:$0xff]
          %v2037 = vld [vmem:[#allocation9 + $0xd58] sm:$0xff]
          %v2038 = vld [vmem:[#allocation9 + $0xd60] sm:$0xff]
          %v2039 = vld [vmem:[#allocation9 + $0xd68] sm:$0xff]
          %v2040 = vld [vmem:[#allocation9 + $0xd70] sm:$0xff]
          %v2041 = vld [vmem:[#allocation9 + $0xd78] sm:$0xff]
          %v2042 = vld [vmem:[#allocation9 + $0xd80] sm:$0xff]
          %v2043 = vld [vmem:[#allocation9 + $0xd88] sm:$0xff]
          %v2044 = vld [vmem:[#allocation9 + $0xd90] sm:$0xff]
          %v2045 = vld [vmem:[#allocation9 + $0xd98] sm:$0xff]
          %v2046 = vld [vmem:[#allocation9 + $0xda0] sm:$0xff]
          %v2047 = vld [vmem:[#allocation9 + $0xda8] sm:$0xff]
          %v2048 = vld [vmem:[#allocation9 + $0xdb0] sm:$0xff]
          %v2049 = vld [vmem:[#allocation9 + $0xdb8] sm:$0xff]
          %v2050 = vld [vmem:[#allocation9 + $0xdc0] sm:$0xff]
          %v2051 = vld [vmem:[#allocation9 + $0xdc8] sm:$0xff]
          %v2052 = vld [vmem:[#allocation9 + $0xdd0] sm:$0xff]
          %v2053 = vld [vmem:[#allocation9 + $0xdd8] sm:$0xff]
          %v2054 = vld [vmem:[#allocation9 + $0xde0] sm:$0xff]
          %v2055 = vld [vmem:[#allocation9 + $0xde8] sm:$0xff]
          %v2056 = vld [vmem:[#allocation9 + $0xdf0] sm:$0xff]
          %v2057 = vld [vmem:[#allocation9 + $0xdf8] sm:$0xff]
          %v2058 = vld [vmem:[#allocation9 + $0xe00] sm:$0xff]
          %v2059 = vld [vmem:[#allocation9 + $0xe08] sm:$0xff]
          %v2060 = vld [vmem:[#allocation9 + $0xe10] sm:$0xff]
          %v2061 = vld [vmem:[#allocation9 + $0xe18] sm:$0xff]
          %v2062 = vld [vmem:[#allocation9 + $0xe20] sm:$0xff]
          %v2063 = vld [vmem:[#allocation9 + $0xe28] sm:$0xff]
          %v2064 = vld [vmem:[#allocation9 + $0xe30] sm:$0xff]
          %v2065 = vld [vmem:[#allocation9 + $0xe38] sm:$0xff]
          %v2066 = vld [vmem:[#allocation9 + $0xe40] sm:$0xff]
          %v2067 = vld [vmem:[#allocation9 + $0xe48] sm:$0xff]
          %v2068 = vld [vmem:[#allocation9 + $0xe50] sm:$0xff]
          %v2069 = vld [vmem:[#allocation9 + $0xe58] sm:$0xff]
          %v2070 = vld [vmem:[#allocation9 + $0xe60] sm:$0xff]
          %v2071 = vld [vmem:[#allocation9 + $0xe68] sm:$0xff]
          %v2072 = vld [vmem:[#allocation9 + $0xe70] sm:$0xff]
          %v2073 = vld [vmem:[#allocation9 + $0xe78] sm:$0xff]
          %v2074 = vld [vmem:[#allocation9 + $0xe80] sm:$0xff]
          %v2075 = vld [vmem:[#allocation9 + $0xe88] sm:$0xff]
          %v2076 = vld [vmem:[#allocation9 + $0xe90] sm:$0xff]
          %v2077 = vld [vmem:[#allocation9 + $0xe98] sm:$0xff]
          %v2078 = vld [vmem:[#allocation9 + $0xea0] sm:$0xff]
          %v2079 = vld [vmem:[#allocation9 + $0xea8] sm:$0xff]
          %v2080 = vld [vmem:[#allocation9 + $0xeb0] sm:$0xff]
          %v2081 = vld [vmem:[#allocation9 + $0xeb8] sm:$0xff]
          %v2082 = vld [vmem:[#allocation9 + $0xec0] sm:$0xff]
          %v2083 = vld [vmem:[#allocation9 + $0xec8] sm:$0xff]
          %v2084 = vld [vmem:[#allocation9 + $0xed0] sm:$0xff]
          %v2085 = vld [vmem:[#allocation9 + $0xed8] sm:$0xff]
          %v2086 = vld [vmem:[#allocation9 + $0xee0] sm:$0xff]
          %v2087 = vld [vmem:[#allocation9 + $0xee8] sm:$0xff]
          %v2088 = vld [vmem:[#allocation9 + $0xef0] sm:$0xff]
          %v2089 = vld [vmem:[#allocation9 + $0xef8] sm:$0xff]
          %v2090 = vld [vmem:[#allocation9 + $0xf00] sm:$0xff]
          %v2091 = vld [vmem:[#allocation9 + $0xf08] sm:$0xff]
          %v2092 = vld [vmem:[#allocation9 + $0xf10] sm:$0xff]
          %v2093 = vld [vmem:[#allocation9 + $0xf18] sm:$0xff]
          %v2094 = vld [vmem:[#allocation9 + $0xf20] sm:$0xff]
          %v2095 = vld [vmem:[#allocation9 + $0xf28] sm:$0xff]
          %v2096 = vld [vmem:[#allocation9 + $0xf30] sm:$0xff]
          %v2097 = vld [vmem:[#allocation9 + $0xf38] sm:$0xff]
          %v2098 = vld [vmem:[#allocation9 + $0xf40] sm:$0xff]
          %v2099 = vld [vmem:[#allocation9 + $0xf48] sm:$0xff]
          %v2100 = vld [vmem:[#allocation9 + $0xf50] sm:$0xff]
          %v2101 = vld [vmem:[#allocation9 + $0xf58] sm:$0xff]
          %v2102 = vld [vmem:[#allocation9 + $0xf60] sm:$0xff]
          %v2103 = vld [vmem:[#allocation9 + $0xf68] sm:$0xff]
          %v2104 = vld [vmem:[#allocation9 + $0xf70] sm:$0xff]
          %v2105 = vld [vmem:[#allocation9 + $0xf78] sm:$0xff]
          %v2106 = vld [vmem:[#allocation9 + $0xf80] sm:$0xff]
          %v2107 = vld [vmem:[#allocation9 + $0xf88] sm:$0xff]
          %v2108 = vld [vmem:[#allocation9 + $0xf90] sm:$0xff]
          %v2109 = vld [vmem:[#allocation9 + $0xf98] sm:$0xff]
          %v2110 = vld [vmem:[#allocation9 + $0xfa0] sm:$0xff]
          %v2111 = vld [vmem:[#allocation9 + $0xfa8] sm:$0xff]
          %v2112 = vld [vmem:[#allocation9 + $0xfb0] sm:$0xff]
          %v2113 = vld [vmem:[#allocation9 + $0xfb8] sm:$0xff]
          %v2114 = vld [vmem:[#allocation9 + $0xfc0] sm:$0xff]
          %v2115 = vld [vmem:[#allocation9 + $0xfc8] sm:$0xff]
          %v2116 = vld [vmem:[#allocation9 + $0xfd0] sm:$0xff]
          %v2117 = vld [vmem:[#allocation9 + $0xfd8] sm:$0xff]
          %v2118 = vld [vmem:[#allocation9 + $0xfe0] sm:$0xff]
          %v2119 = vld [vmem:[#allocation9 + $0xfe8] sm:$0xff]
          %v2120 = vld [vmem:[#allocation9 + $0xff0] sm:$0xff]
          %v2121 = vld [vmem:[#allocation9 + $0xff8] sm:$0xff]
          %v2122 = vld [vmem:[#allocation10] sm:$0xf]
          %v2124 = vlaneseq
          %v2125 = vshrl.u32 %v2124, 7
          %v2126 = vsub.s32 0, %v2125
          %v2127 = vrot.slane %v2122, %v2126
          %v2128 = vlaneseq
          %v2129 = vshrl.u32 %v2128, 7
          %v2130 = vsub.s32 1, %v2129
          %v2131 = vrot.slane %v2122, %v2130
          %v2132 = vlaneseq
          %v2133 = vshrl.u32 %v2132, 7
          %v2134 = vsub.s32 2, %v2133
          %v2135 = vrot.slane %v2122, %v2134
          %v2136 = vlaneseq
          %v2137 = vshrl.u32 %v2136, 7
          %v2138 = vsub.s32 3, %v2137
          %v2139 = vrot.slane %v2122, %v2138
          %v2656 = vunpack.c.l.b16 %v1610
          %v2657 = vunpack.c.h.b16 %v1610
          %v2658 = vunpack.c.l.b16 %v1611
          %v2659 = vunpack.c.h.b16 %v1611
          %v2660 = vunpack.c.l.b16 %v1612
          %v2661 = vunpack.c.h.b16 %v1612
          %v2662 = vunpack.c.l.b16 %v1613
          %v2663 = vunpack.c.h.b16 %v1613
          %v2664 = vunpack.c.l.b16 %v1614
          %v2665 = vunpack.c.h.b16 %v1614
          %v2666 = vunpack.c.l.b16 %v1615
          %v2667 = vunpack.c.h.b16 %v1615
          %v2668 = vunpack.c.l.b16 %v1616
          %v2669 = vunpack.c.h.b16 %v1616
          %v2670 = vunpack.c.l.b16 %v1617
          %v2671 = vunpack.c.h.b16 %v1617
          %v2672 = vunpack.c.l.b16 %v1618
          %v2673 = vunpack.c.h.b16 %v1618
          %v2674 = vunpack.c.l.b16 %v1619
          %v2675 = vunpack.c.h.b16 %v1619
          %v2676 = vunpack.c.l.b16 %v1620
          %v2677 = vunpack.c.h.b16 %v1620
          %v2678 = vunpack.c.l.b16 %v1621
          %v2679 = vunpack.c.h.b16 %v1621
          %v2680 = vunpack.c.l.b16 %v1622
          %v2681 = vunpack.c.h.b16 %v1622
          %v2682 = vunpack.c.l.b16 %v1623
          %v2683 = vunpack.c.h.b16 %v1623
          %v2684 = vunpack.c.l.b16 %v1624
          %v2685 = vunpack.c.h.b16 %v1624
          %v2686 = vunpack.c.l.b16 %v1625
          %v2687 = vunpack.c.h.b16 %v1625
          %v2688 = vunpack.c.l.b16 %v1626
          %v2689 = vunpack.c.h.b16 %v1626
          %v2690 = vunpack.c.l.b16 %v1627
          %v2691 = vunpack.c.h.b16 %v1627
          %v2692 = vunpack.c.l.b16 %v1628
          %v2693 = vunpack.c.h.b16 %v1628
          %v2694 = vunpack.c.l.b16 %v1629
          %v2695 = vunpack.c.h.b16 %v1629
          %v2696 = vunpack.c.l.b16 %v1630
          %v2697 = vunpack.c.h.b16 %v1630
          %v2698 = vunpack.c.l.b16 %v1631
          %v2699 = vunpack.c.h.b16 %v1631
          %v2700 = vunpack.c.l.b16 %v1632
          %v2701 = vunpack.c.h.b16 %v1632
          %v2702 = vunpack.c.l.b16 %v1633
          %v2703 = vunpack.c.h.b16 %v1633
          %v2704 = vunpack.c.l.b16 %v1634
          %v2705 = vunpack.c.h.b16 %v1634
          %v2706 = vunpack.c.l.b16 %v1635
          %v2707 = vunpack.c.h.b16 %v1635
          %v2708 = vunpack.c.l.b16 %v1636
          %v2709 = vunpack.c.h.b16 %v1636
          %v2710 = vunpack.c.l.b16 %v1637
          %v2711 = vunpack.c.h.b16 %v1637
          %v2712 = vunpack.c.l.b16 %v1638
          %v2713 = vunpack.c.h.b16 %v1638
          %v2714 = vunpack.c.l.b16 %v1639
          %v2715 = vunpack.c.h.b16 %v1639
          %v2716 = vunpack.c.l.b16 %v1640
          %v2717 = vunpack.c.h.b16 %v1640
          %v2718 = vunpack.c.l.b16 %v1641
          %v2719 = vunpack.c.h.b16 %v1641
          %v2720 = vunpack.c.l.b16 %v1642
          %v2721 = vunpack.c.h.b16 %v1642
          %v2722 = vunpack.c.l.b16 %v1643
          %v2723 = vunpack.c.h.b16 %v1643
          %v2724 = vunpack.c.l.b16 %v1644
          %v2725 = vunpack.c.h.b16 %v1644
          %v2726 = vunpack.c.l.b16 %v1645
          %v2727 = vunpack.c.h.b16 %v1645
          %v2728 = vunpack.c.l.b16 %v1646
          %v2729 = vunpack.c.h.b16 %v1646
          %v2730 = vunpack.c.l.b16 %v1647
          %v2731 = vunpack.c.h.b16 %v1647
          %v2732 = vunpack.c.l.b16 %v1648
          %v2733 = vunpack.c.h.b16 %v1648
          %v2734 = vunpack.c.l.b16 %v1649
          %v2735 = vunpack.c.h.b16 %v1649
          %v2736 = vunpack.c.l.b16 %v1650
          %v2737 = vunpack.c.h.b16 %v1650
          %v2738 = vunpack.c.l.b16 %v1651
          %v2739 = vunpack.c.h.b16 %v1651
          %v2740 = vunpack.c.l.b16 %v1652
          %v2741 = vunpack.c.h.b16 %v1652
          %v2742 = vunpack.c.l.b16 %v1653
          %v2743 = vunpack.c.h.b16 %v1653
          %v2744 = vunpack.c.l.b16 %v1654
          %v2745 = vunpack.c.h.b16 %v1654
          %v2746 = vunpack.c.l.b16 %v1655
          %v2747 = vunpack.c.h.b16 %v1655
          %v2748 = vunpack.c.l.b16 %v1656
          %v2749 = vunpack.c.h.b16 %v1656
          %v2750 = vunpack.c.l.b16 %v1657
          %v2751 = vunpack.c.h.b16 %v1657
          %v2752 = vunpack.c.l.b16 %v1658
          %v2753 = vunpack.c.h.b16 %v1658
          %v2754 = vunpack.c.l.b16 %v1659
          %v2755 = vunpack.c.h.b16 %v1659
          %v2756 = vunpack.c.l.b16 %v1660
          %v2757 = vunpack.c.h.b16 %v1660
          %v2758 = vunpack.c.l.b16 %v1661
          %v2759 = vunpack.c.h.b16 %v1661
          %v2760 = vunpack.c.l.b16 %v1662
          %v2761 = vunpack.c.h.b16 %v1662
          %v2762 = vunpack.c.l.b16 %v1663
          %v2763 = vunpack.c.h.b16 %v1663
          %v2764 = vunpack.c.l.b16 %v1664
          %v2765 = vunpack.c.h.b16 %v1664
          %v2766 = vunpack.c.l.b16 %v1665
          %v2767 = vunpack.c.h.b16 %v1665
          %v2768 = vunpack.c.l.b16 %v1666
          %v2769 = vunpack.c.h.b16 %v1666
          %v2770 = vunpack.c.l.b16 %v1667
          %v2771 = vunpack.c.h.b16 %v1667
          %v2772 = vunpack.c.l.b16 %v1668
          %v2773 = vunpack.c.h.b16 %v1668
          %v2774 = vunpack.c.l.b16 %v1669
          %v2775 = vunpack.c.h.b16 %v1669
          %v2776 = vunpack.c.l.b16 %v1670
          %v2777 = vunpack.c.h.b16 %v1670
          %v2778 = vunpack.c.l.b16 %v1671
          %v2779 = vunpack.c.h.b16 %v1671
          %v2780 = vunpack.c.l.b16 %v1672
          %v2781 = vunpack.c.h.b16 %v1672
          %v2782 = vunpack.c.l.b16 %v1673
          %v2783 = vunpack.c.h.b16 %v1673
          %v2784 = vunpack.c.l.b16 %v1674
          %v2785 = vunpack.c.h.b16 %v1674
          %v2786 = vunpack.c.l.b16 %v1675
          %v2787 = vunpack.c.h.b16 %v1675
          %v2788 = vunpack.c.l.b16 %v1676
          %v2789 = vunpack.c.h.b16 %v1676
          %v2790 = vunpack.c.l.b16 %v1677
          %v2791 = vunpack.c.h.b16 %v1677
          %v2792 = vunpack.c.l.b16 %v1678
          %v2793 = vunpack.c.h.b16 %v1678
          %v2794 = vunpack.c.l.b16 %v1679
          %v2795 = vunpack.c.h.b16 %v1679
          %v2796 = vunpack.c.l.b16 %v1680
          %v2797 = vunpack.c.h.b16 %v1680
          %v2798 = vunpack.c.l.b16 %v1681
          %v2799 = vunpack.c.h.b16 %v1681
          %v2800 = vunpack.c.l.b16 %v1682
          %v2801 = vunpack.c.h.b16 %v1682
          %v2802 = vunpack.c.l.b16 %v1683
          %v2803 = vunpack.c.h.b16 %v1683
          %v2804 = vunpack.c.l.b16 %v1684
          %v2805 = vunpack.c.h.b16 %v1684
          %v2806 = vunpack.c.l.b16 %v1685
          %v2807 = vunpack.c.h.b16 %v1685
          %v2808 = vunpack.c.l.b16 %v1686
          %v2809 = vunpack.c.h.b16 %v1686
          %v2810 = vunpack.c.l.b16 %v1687
          %v2811 = vunpack.c.h.b16 %v1687
          %v2812 = vunpack.c.l.b16 %v1688
          %v2813 = vunpack.c.h.b16 %v1688
          %v2814 = vunpack.c.l.b16 %v1689
          %v2815 = vunpack.c.h.b16 %v1689
          %v2816 = vunpack.c.l.b16 %v1690
          %v2817 = vunpack.c.h.b16 %v1690
          %v2818 = vunpack.c.l.b16 %v1691
          %v2819 = vunpack.c.h.b16 %v1691
          %v2820 = vunpack.c.l.b16 %v1692
          %v2821 = vunpack.c.h.b16 %v1692
          %v2822 = vunpack.c.l.b16 %v1693
          %v2823 = vunpack.c.h.b16 %v1693
          %v2824 = vunpack.c.l.b16 %v1694
          %v2825 = vunpack.c.h.b16 %v1694
          %v2826 = vunpack.c.l.b16 %v1695
          %v2827 = vunpack.c.h.b16 %v1695
          %v2828 = vunpack.c.l.b16 %v1696
          %v2829 = vunpack.c.h.b16 %v1696
          %v2830 = vunpack.c.l.b16 %v1697
          %v2831 = vunpack.c.h.b16 %v1697
          %v2832 = vunpack.c.l.b16 %v1698
          %v2833 = vunpack.c.h.b16 %v1698
          %v2834 = vunpack.c.l.b16 %v1699
          %v2835 = vunpack.c.h.b16 %v1699
          %v2836 = vunpack.c.l.b16 %v1700
          %v2837 = vunpack.c.h.b16 %v1700
          %v2838 = vunpack.c.l.b16 %v1701
          %v2839 = vunpack.c.h.b16 %v1701
          %v2840 = vunpack.c.l.b16 %v1702
          %v2841 = vunpack.c.h.b16 %v1702
          %v2842 = vunpack.c.l.b16 %v1703
          %v2843 = vunpack.c.h.b16 %v1703
          %v2844 = vunpack.c.l.b16 %v1704
          %v2845 = vunpack.c.h.b16 %v1704
          %v2846 = vunpack.c.l.b16 %v1705
          %v2847 = vunpack.c.h.b16 %v1705
          %v2848 = vunpack.c.l.b16 %v1706
          %v2849 = vunpack.c.h.b16 %v1706
          %v2850 = vunpack.c.l.b16 %v1707
          %v2851 = vunpack.c.h.b16 %v1707
          %v2852 = vunpack.c.l.b16 %v1708
          %v2853 = vunpack.c.h.b16 %v1708
          %v2854 = vunpack.c.l.b16 %v1709
          %v2855 = vunpack.c.h.b16 %v1709
          %v2856 = vunpack.c.l.b16 %v1710
          %v2857 = vunpack.c.h.b16 %v1710
          %v2858 = vunpack.c.l.b16 %v1711
          %v2859 = vunpack.c.h.b16 %v1711
          %v2860 = vunpack.c.l.b16 %v1712
          %v2861 = vunpack.c.h.b16 %v1712
          %v2862 = vunpack.c.l.b16 %v1713
          %v2863 = vunpack.c.h.b16 %v1713
          %v2864 = vunpack.c.l.b16 %v1714
          %v2865 = vunpack.c.h.b16 %v1714
          %v2866 = vunpack.c.l.b16 %v1715
          %v2867 = vunpack.c.h.b16 %v1715
          %v2868 = vunpack.c.l.b16 %v1716
          %v2869 = vunpack.c.h.b16 %v1716
          %v2870 = vunpack.c.l.b16 %v1717
          %v2871 = vunpack.c.h.b16 %v1717
          %v2872 = vunpack.c.l.b16 %v1718
          %v2873 = vunpack.c.h.b16 %v1718
          %v2874 = vunpack.c.l.b16 %v1719
          %v2875 = vunpack.c.h.b16 %v1719
          %v2876 = vunpack.c.l.b16 %v1720
          %v2877 = vunpack.c.h.b16 %v1720
          %v2878 = vunpack.c.l.b16 %v1721
          %v2879 = vunpack.c.h.b16 %v1721
          %v2880 = vunpack.c.l.b16 %v1722
          %v2881 = vunpack.c.h.b16 %v1722
          %v2882 = vunpack.c.l.b16 %v1723
          %v2883 = vunpack.c.h.b16 %v1723
          %v2884 = vunpack.c.l.b16 %v1724
          %v2885 = vunpack.c.h.b16 %v1724
          %v2886 = vunpack.c.l.b16 %v1725
          %v2887 = vunpack.c.h.b16 %v1725
          %v2888 = vunpack.c.l.b16 %v1726
          %v2889 = vunpack.c.h.b16 %v1726
          %v2890 = vunpack.c.l.b16 %v1727
          %v2891 = vunpack.c.h.b16 %v1727
          %v2892 = vunpack.c.l.b16 %v1728
          %v2893 = vunpack.c.h.b16 %v1728
          %v2894 = vunpack.c.l.b16 %v1729
          %v2895 = vunpack.c.h.b16 %v1729
          %v2896 = vunpack.c.l.b16 %v1730
          %v2897 = vunpack.c.h.b16 %v1730
          %v2898 = vunpack.c.l.b16 %v1731
          %v2899 = vunpack.c.h.b16 %v1731
          %v2900 = vunpack.c.l.b16 %v1732
          %v2901 = vunpack.c.h.b16 %v1732
          %v2902 = vunpack.c.l.b16 %v1733
          %v2903 = vunpack.c.h.b16 %v1733
          %v2904 = vunpack.c.l.b16 %v1734
          %v2905 = vunpack.c.h.b16 %v1734
          %v2906 = vunpack.c.l.b16 %v1735
          %v2907 = vunpack.c.h.b16 %v1735
          %v2908 = vunpack.c.l.b16 %v1736
          %v2909 = vunpack.c.h.b16 %v1736
          %v2910 = vunpack.c.l.b16 %v1737
          %v2911 = vunpack.c.h.b16 %v1737
          %v2912 = vunpack.c.l.b16 %v1738
          %v2913 = vunpack.c.h.b16 %v1738
          %v2914 = vunpack.c.l.b16 %v1739
          %v2915 = vunpack.c.h.b16 %v1739
          %v2916 = vunpack.c.l.b16 %v1740
          %v2917 = vunpack.c.h.b16 %v1740
          %v2918 = vunpack.c.l.b16 %v1741
          %v2919 = vunpack.c.h.b16 %v1741
          %v2920 = vunpack.c.l.b16 %v1742
          %v2921 = vunpack.c.h.b16 %v1742
          %v2922 = vunpack.c.l.b16 %v1743
          %v2923 = vunpack.c.h.b16 %v1743
          %v2924 = vunpack.c.l.b16 %v1744
          %v2925 = vunpack.c.h.b16 %v1744
          %v2926 = vunpack.c.l.b16 %v1745
          %v2927 = vunpack.c.h.b16 %v1745
          %v2928 = vunpack.c.l.b16 %v1746
          %v2929 = vunpack.c.h.b16 %v1746
          %v2930 = vunpack.c.l.b16 %v1747
          %v2931 = vunpack.c.h.b16 %v1747
          %v2932 = vunpack.c.l.b16 %v1748
          %v2933 = vunpack.c.h.b16 %v1748
          %v2934 = vunpack.c.l.b16 %v1749
          %v2935 = vunpack.c.h.b16 %v1749
          %v2936 = vunpack.c.l.b16 %v1750
          %v2937 = vunpack.c.h.b16 %v1750
          %v2938 = vunpack.c.l.b16 %v1751
          %v2939 = vunpack.c.h.b16 %v1751
          %v2940 = vunpack.c.l.b16 %v1752
          %v2941 = vunpack.c.h.b16 %v1752
          %v2942 = vunpack.c.l.b16 %v1753
          %v2943 = vunpack.c.h.b16 %v1753
          %v2944 = vunpack.c.l.b16 %v1754
          %v2945 = vunpack.c.h.b16 %v1754
          %v2946 = vunpack.c.l.b16 %v1755
          %v2947 = vunpack.c.h.b16 %v1755
          %v2948 = vunpack.c.l.b16 %v1756
          %v2949 = vunpack.c.h.b16 %v1756
          %v2950 = vunpack.c.l.b16 %v1757
          %v2951 = vunpack.c.h.b16 %v1757
          %v2952 = vunpack.c.l.b16 %v1758
          %v2953 = vunpack.c.h.b16 %v1758
          %v2954 = vunpack.c.l.b16 %v1759
          %v2955 = vunpack.c.h.b16 %v1759
          %v2956 = vunpack.c.l.b16 %v1760
          %v2957 = vunpack.c.h.b16 %v1760
          %v2958 = vunpack.c.l.b16 %v1761
          %v2959 = vunpack.c.h.b16 %v1761
          %v2960 = vunpack.c.l.b16 %v1762
          %v2961 = vunpack.c.h.b16 %v1762
          %v2962 = vunpack.c.l.b16 %v1763
          %v2963 = vunpack.c.h.b16 %v1763
          %v2964 = vunpack.c.l.b16 %v1764
          %v2965 = vunpack.c.h.b16 %v1764
          %v2966 = vunpack.c.l.b16 %v1765
          %v2967 = vunpack.c.h.b16 %v1765
          %v2968 = vunpack.c.l.b16 %v1766
          %v2969 = vunpack.c.h.b16 %v1766
          %v2970 = vunpack.c.l.b16 %v1767
          %v2971 = vunpack.c.h.b16 %v1767
          %v2972 = vunpack.c.l.b16 %v1768
          %v2973 = vunpack.c.h.b16 %v1768
          %v2974 = vunpack.c.l.b16 %v1769
          %v2975 = vunpack.c.h.b16 %v1769
          %v2976 = vunpack.c.l.b16 %v1770
          %v2977 = vunpack.c.h.b16 %v1770
          %v2978 = vunpack.c.l.b16 %v1771
          %v2979 = vunpack.c.h.b16 %v1771
          %v2980 = vunpack.c.l.b16 %v1772
          %v2981 = vunpack.c.h.b16 %v1772
          %v2982 = vunpack.c.l.b16 %v1773
          %v2983 = vunpack.c.h.b16 %v1773
          %v2984 = vunpack.c.l.b16 %v1774
          %v2985 = vunpack.c.h.b16 %v1774
          %v2986 = vunpack.c.l.b16 %v1775
          %v2987 = vunpack.c.h.b16 %v1775
          %v2988 = vunpack.c.l.b16 %v1776
          %v2989 = vunpack.c.h.b16 %v1776
          %v2990 = vunpack.c.l.b16 %v1777
          %v2991 = vunpack.c.h.b16 %v1777
          %v2992 = vunpack.c.l.b16 %v1778
          %v2993 = vunpack.c.h.b16 %v1778
          %v2994 = vunpack.c.l.b16 %v1779
          %v2995 = vunpack.c.h.b16 %v1779
          %v2996 = vunpack.c.l.b16 %v1780
          %v2997 = vunpack.c.h.b16 %v1780
          %v2998 = vunpack.c.l.b16 %v1781
          %v2999 = vunpack.c.h.b16 %v1781
          %v3000 = vunpack.c.l.b16 %v1782
          %v3001 = vunpack.c.h.b16 %v1782
          %v3002 = vunpack.c.l.b16 %v1783
          %v3003 = vunpack.c.h.b16 %v1783
          %v3004 = vunpack.c.l.b16 %v1784
          %v3005 = vunpack.c.h.b16 %v1784
          %v3006 = vunpack.c.l.b16 %v1785
          %v3007 = vunpack.c.h.b16 %v1785
          %v3008 = vunpack.c.l.b16 %v1786
          %v3009 = vunpack.c.h.b16 %v1786
          %v3010 = vunpack.c.l.b16 %v1787
          %v3011 = vunpack.c.h.b16 %v1787
          %v3012 = vunpack.c.l.b16 %v1788
          %v3013 = vunpack.c.h.b16 %v1788
          %v3014 = vunpack.c.l.b16 %v1789
          %v3015 = vunpack.c.h.b16 %v1789
          %v3016 = vunpack.c.l.b16 %v1790
          %v3017 = vunpack.c.h.b16 %v1790
          %v3018 = vunpack.c.l.b16 %v1791
          %v3019 = vunpack.c.h.b16 %v1791
          %v3020 = vunpack.c.l.b16 %v1792
          %v3021 = vunpack.c.h.b16 %v1792
          %v3022 = vunpack.c.l.b16 %v1793
          %v3023 = vunpack.c.h.b16 %v1793
          %v3024 = vunpack.c.l.b16 %v1794
          %v3025 = vunpack.c.h.b16 %v1794
          %v3026 = vunpack.c.l.b16 %v1795
          %v3027 = vunpack.c.h.b16 %v1795
          %v3028 = vunpack.c.l.b16 %v1796
          %v3029 = vunpack.c.h.b16 %v1796
          %v3030 = vunpack.c.l.b16 %v1797
          %v3031 = vunpack.c.h.b16 %v1797
          %v3032 = vunpack.c.l.b16 %v1798
          %v3033 = vunpack.c.h.b16 %v1798
          %v3034 = vunpack.c.l.b16 %v1799
          %v3035 = vunpack.c.h.b16 %v1799
          %v3036 = vunpack.c.l.b16 %v1800
          %v3037 = vunpack.c.h.b16 %v1800
          %v3038 = vunpack.c.l.b16 %v1801
          %v3039 = vunpack.c.h.b16 %v1801
          %v3040 = vunpack.c.l.b16 %v1802
          %v3041 = vunpack.c.h.b16 %v1802
          %v3042 = vunpack.c.l.b16 %v1803
          %v3043 = vunpack.c.h.b16 %v1803
          %v3044 = vunpack.c.l.b16 %v1804
          %v3045 = vunpack.c.h.b16 %v1804
          %v3046 = vunpack.c.l.b16 %v1805
          %v3047 = vunpack.c.h.b16 %v1805
          %v3048 = vunpack.c.l.b16 %v1806
          %v3049 = vunpack.c.h.b16 %v1806
          %v3050 = vunpack.c.l.b16 %v1807
          %v3051 = vunpack.c.h.b16 %v1807
          %v3052 = vunpack.c.l.b16 %v1808
          %v3053 = vunpack.c.h.b16 %v1808
          %v3054 = vunpack.c.l.b16 %v1809
          %v3055 = vunpack.c.h.b16 %v1809
          %v3056 = vunpack.c.l.b16 %v1810
          %v3057 = vunpack.c.h.b16 %v1810
          %v3058 = vunpack.c.l.b16 %v1811
          %v3059 = vunpack.c.h.b16 %v1811
          %v3060 = vunpack.c.l.b16 %v1812
          %v3061 = vunpack.c.h.b16 %v1812
          %v3062 = vunpack.c.l.b16 %v1813
          %v3063 = vunpack.c.h.b16 %v1813
          %v3064 = vunpack.c.l.b16 %v1814
          %v3065 = vunpack.c.h.b16 %v1814
          %v3066 = vunpack.c.l.b16 %v1815
          %v3067 = vunpack.c.h.b16 %v1815
          %v3068 = vunpack.c.l.b16 %v1816
          %v3069 = vunpack.c.h.b16 %v1816
          %v3070 = vunpack.c.l.b16 %v1817
          %v3071 = vunpack.c.h.b16 %v1817
          %v3072 = vunpack.c.l.b16 %v1818
          %v3073 = vunpack.c.h.b16 %v1818
          %v3074 = vunpack.c.l.b16 %v1819
          %v3075 = vunpack.c.h.b16 %v1819
          %v3076 = vunpack.c.l.b16 %v1820
          %v3077 = vunpack.c.h.b16 %v1820
          %v3078 = vunpack.c.l.b16 %v1821
          %v3079 = vunpack.c.h.b16 %v1821
          %v3080 = vunpack.c.l.b16 %v1822
          %v3081 = vunpack.c.h.b16 %v1822
          %v3082 = vunpack.c.l.b16 %v1823
          %v3083 = vunpack.c.h.b16 %v1823
          %v3084 = vunpack.c.l.b16 %v1824
          %v3085 = vunpack.c.h.b16 %v1824
          %v3086 = vunpack.c.l.b16 %v1825
          %v3087 = vunpack.c.h.b16 %v1825
          %v3088 = vunpack.c.l.b16 %v1826
          %v3089 = vunpack.c.h.b16 %v1826
          %v3090 = vunpack.c.l.b16 %v1827
          %v3091 = vunpack.c.h.b16 %v1827
          %v3092 = vunpack.c.l.b16 %v1828
          %v3093 = vunpack.c.h.b16 %v1828
          %v3094 = vunpack.c.l.b16 %v1829
          %v3095 = vunpack.c.h.b16 %v1829
          %v3096 = vunpack.c.l.b16 %v1830
          %v3097 = vunpack.c.h.b16 %v1830
          %v3098 = vunpack.c.l.b16 %v1831
          %v3099 = vunpack.c.h.b16 %v1831
          %v3100 = vunpack.c.l.b16 %v1832
          %v3101 = vunpack.c.h.b16 %v1832
          %v3102 = vunpack.c.l.b16 %v1833
          %v3103 = vunpack.c.h.b16 %v1833
          %v3104 = vunpack.c.l.b16 %v1834
          %v3105 = vunpack.c.h.b16 %v1834
          %v3106 = vunpack.c.l.b16 %v1835
          %v3107 = vunpack.c.h.b16 %v1835
          %v3108 = vunpack.c.l.b16 %v1836
          %v3109 = vunpack.c.h.b16 %v1836
          %v3110 = vunpack.c.l.b16 %v1837
          %v3111 = vunpack.c.h.b16 %v1837
          %v3112 = vunpack.c.l.b16 %v1838
          %v3113 = vunpack.c.h.b16 %v1838
          %v3114 = vunpack.c.l.b16 %v1839
          %v3115 = vunpack.c.h.b16 %v1839
          %v3116 = vunpack.c.l.b16 %v1840
          %v3117 = vunpack.c.h.b16 %v1840
          %v3118 = vunpack.c.l.b16 %v1841
          %v3119 = vunpack.c.h.b16 %v1841
          %v3120 = vunpack.c.l.b16 %v1842
          %v3121 = vunpack.c.h.b16 %v1842
          %v3122 = vunpack.c.l.b16 %v1843
          %v3123 = vunpack.c.h.b16 %v1843
          %v3124 = vunpack.c.l.b16 %v1844
          %v3125 = vunpack.c.h.b16 %v1844
          %v3126 = vunpack.c.l.b16 %v1845
          %v3127 = vunpack.c.h.b16 %v1845
          %v3128 = vunpack.c.l.b16 %v1846
          %v3129 = vunpack.c.h.b16 %v1846
          %v3130 = vunpack.c.l.b16 %v1847
          %v3131 = vunpack.c.h.b16 %v1847
          %v3132 = vunpack.c.l.b16 %v1848
          %v3133 = vunpack.c.h.b16 %v1848
          %v3134 = vunpack.c.l.b16 %v1849
          %v3135 = vunpack.c.h.b16 %v1849
          %v3136 = vunpack.c.l.b16 %v1850
          %v3137 = vunpack.c.h.b16 %v1850
          %v3138 = vunpack.c.l.b16 %v1851
          %v3139 = vunpack.c.h.b16 %v1851
          %v3140 = vunpack.c.l.b16 %v1852
          %v3141 = vunpack.c.h.b16 %v1852
          %v3142 = vunpack.c.l.b16 %v1853
          %v3143 = vunpack.c.h.b16 %v1853
          %v3144 = vunpack.c.l.b16 %v1854
          %v3145 = vunpack.c.h.b16 %v1854
          %v3146 = vunpack.c.l.b16 %v1855
          %v3147 = vunpack.c.h.b16 %v1855
          %v3148 = vunpack.c.l.b16 %v1856
          %v3149 = vunpack.c.h.b16 %v1856
          %v3150 = vunpack.c.l.b16 %v1857
          %v3151 = vunpack.c.h.b16 %v1857
          %v3152 = vunpack.c.l.b16 %v1858
          %v3153 = vunpack.c.h.b16 %v1858
          %v3154 = vunpack.c.l.b16 %v1859
          %v3155 = vunpack.c.h.b16 %v1859
          %v3156 = vunpack.c.l.b16 %v1860
          %v3157 = vunpack.c.h.b16 %v1860
          %v3158 = vunpack.c.l.b16 %v1861
          %v3159 = vunpack.c.h.b16 %v1861
          %v3160 = vunpack.c.l.b16 %v1862
          %v3161 = vunpack.c.h.b16 %v1862
          %v3162 = vunpack.c.l.b16 %v1863
          %v3163 = vunpack.c.h.b16 %v1863
          %v3164 = vunpack.c.l.b16 %v1864
          %v3165 = vunpack.c.h.b16 %v1864
          %v3166 = vunpack.c.l.b16 %v1865
          %v3167 = vunpack.c.h.b16 %v1865
          %v3168 = vunpack.c.l.b16 %v1866
          %v3169 = vunpack.c.h.b16 %v1866
          %v3170 = vunpack.c.l.b16 %v1867
          %v3171 = vunpack.c.h.b16 %v1867
          %v3172 = vunpack.c.l.b16 %v1868
          %v3173 = vunpack.c.h.b16 %v1868
          %v3174 = vunpack.c.l.b16 %v1869
          %v3175 = vunpack.c.h.b16 %v1869
          %v3176 = vunpack.c.l.b16 %v1870
          %v3177 = vunpack.c.h.b16 %v1870
          %v3178 = vunpack.c.l.b16 %v1871
          %v3179 = vunpack.c.h.b16 %v1871
          %v3180 = vunpack.c.l.b16 %v1872
          %v3181 = vunpack.c.h.b16 %v1872
          %v3182 = vunpack.c.l.b16 %v1873
          %v3183 = vunpack.c.h.b16 %v1873
          %v3184 = vunpack.c.l.b16 %v1874
          %v3185 = vunpack.c.h.b16 %v1874
          %v3186 = vunpack.c.l.b16 %v1875
          %v3187 = vunpack.c.h.b16 %v1875
          %v3188 = vunpack.c.l.b16 %v1876
          %v3189 = vunpack.c.h.b16 %v1876
          %v3190 = vunpack.c.l.b16 %v1877
          %v3191 = vunpack.c.h.b16 %v1877
          %v3192 = vunpack.c.l.b16 %v1878
          %v3193 = vunpack.c.h.b16 %v1878
          %v3194 = vunpack.c.l.b16 %v1879
          %v3195 = vunpack.c.h.b16 %v1879
          %v3196 = vunpack.c.l.b16 %v1880
          %v3197 = vunpack.c.h.b16 %v1880
          %v3198 = vunpack.c.l.b16 %v1881
          %v3199 = vunpack.c.h.b16 %v1881
          %v3200 = vunpack.c.l.b16 %v1882
          %v3201 = vunpack.c.h.b16 %v1882
          %v3202 = vunpack.c.l.b16 %v1883
          %v3203 = vunpack.c.h.b16 %v1883
          %v3204 = vunpack.c.l.b16 %v1884
          %v3205 = vunpack.c.h.b16 %v1884
          %v3206 = vunpack.c.l.b16 %v1885
          %v3207 = vunpack.c.h.b16 %v1885
          %v3208 = vunpack.c.l.b16 %v1886
          %v3209 = vunpack.c.h.b16 %v1886
          %v3210 = vunpack.c.l.b16 %v1887
          %v3211 = vunpack.c.h.b16 %v1887
          %v3212 = vunpack.c.l.b16 %v1888
          %v3213 = vunpack.c.h.b16 %v1888
          %v3214 = vunpack.c.l.b16 %v1889
          %v3215 = vunpack.c.h.b16 %v1889
          %v3216 = vunpack.c.l.b16 %v1890
          %v3217 = vunpack.c.h.b16 %v1890
          %v3218 = vunpack.c.l.b16 %v1891
          %v3219 = vunpack.c.h.b16 %v1891
          %v3220 = vunpack.c.l.b16 %v1892
          %v3221 = vunpack.c.h.b16 %v1892
          %v3222 = vunpack.c.l.b16 %v1893
          %v3223 = vunpack.c.h.b16 %v1893
          %v3224 = vunpack.c.l.b16 %v1894
          %v3225 = vunpack.c.h.b16 %v1894
          %v3226 = vunpack.c.l.b16 %v1895
          %v3227 = vunpack.c.h.b16 %v1895
          %v3228 = vunpack.c.l.b16 %v1896
          %v3229 = vunpack.c.h.b16 %v1896
          %v3230 = vunpack.c.l.b16 %v1897
          %v3231 = vunpack.c.h.b16 %v1897
          %v3232 = vunpack.c.l.b16 %v1898
          %v3233 = vunpack.c.h.b16 %v1898
          %v3234 = vunpack.c.l.b16 %v1899
          %v3235 = vunpack.c.h.b16 %v1899
          %v3236 = vunpack.c.l.b16 %v1900
          %v3237 = vunpack.c.h.b16 %v1900
          %v3238 = vunpack.c.l.b16 %v1901
          %v3239 = vunpack.c.h.b16 %v1901
          %v3240 = vunpack.c.l.b16 %v1902
          %v3241 = vunpack.c.h.b16 %v1902
          %v3242 = vunpack.c.l.b16 %v1903
          %v3243 = vunpack.c.h.b16 %v1903
          %v3244 = vunpack.c.l.b16 %v1904
          %v3245 = vunpack.c.h.b16 %v1904
          %v3246 = vunpack.c.l.b16 %v1905
          %v3247 = vunpack.c.h.b16 %v1905
          %v3248 = vunpack.c.l.b16 %v1906
          %v3249 = vunpack.c.h.b16 %v1906
          %v3250 = vunpack.c.l.b16 %v1907
          %v3251 = vunpack.c.h.b16 %v1907
          %v3252 = vunpack.c.l.b16 %v1908
          %v3253 = vunpack.c.h.b16 %v1908
          %v3254 = vunpack.c.l.b16 %v1909
          %v3255 = vunpack.c.h.b16 %v1909
          %v3256 = vunpack.c.l.b16 %v1910
          %v3257 = vunpack.c.h.b16 %v1910
          %v3258 = vunpack.c.l.b16 %v1911
          %v3259 = vunpack.c.h.b16 %v1911
          %v3260 = vunpack.c.l.b16 %v1912
          %v3261 = vunpack.c.h.b16 %v1912
          %v3262 = vunpack.c.l.b16 %v1913
          %v3263 = vunpack.c.h.b16 %v1913
          %v3264 = vunpack.c.l.b16 %v1914
          %v3265 = vunpack.c.h.b16 %v1914
          %v3266 = vunpack.c.l.b16 %v1915
          %v3267 = vunpack.c.h.b16 %v1915
          %v3268 = vunpack.c.l.b16 %v1916
          %v3269 = vunpack.c.h.b16 %v1916
          %v3270 = vunpack.c.l.b16 %v1917
          %v3271 = vunpack.c.h.b16 %v1917
          %v3272 = vunpack.c.l.b16 %v1918
          %v3273 = vunpack.c.h.b16 %v1918
          %v3274 = vunpack.c.l.b16 %v1919
          %v3275 = vunpack.c.h.b16 %v1919
          %v3276 = vunpack.c.l.b16 %v1920
          %v3277 = vunpack.c.h.b16 %v1920
          %v3278 = vunpack.c.l.b16 %v1921
          %v3279 = vunpack.c.h.b16 %v1921
          %v3280 = vunpack.c.l.b16 %v1922
          %v3281 = vunpack.c.h.b16 %v1922
          %v3282 = vunpack.c.l.b16 %v1923
          %v3283 = vunpack.c.h.b16 %v1923
          %v3284 = vunpack.c.l.b16 %v1924
          %v3285 = vunpack.c.h.b16 %v1924
          %v3286 = vunpack.c.l.b16 %v1925
          %v3287 = vunpack.c.h.b16 %v1925
          %v3288 = vunpack.c.l.b16 %v1926
          %v3289 = vunpack.c.h.b16 %v1926
          %v3290 = vunpack.c.l.b16 %v1927
          %v3291 = vunpack.c.h.b16 %v1927
          %v3292 = vunpack.c.l.b16 %v1928
          %v3293 = vunpack.c.h.b16 %v1928
          %v3294 = vunpack.c.l.b16 %v1929
          %v3295 = vunpack.c.h.b16 %v1929
          %v3296 = vunpack.c.l.b16 %v1930
          %v3297 = vunpack.c.h.b16 %v1930
          %v3298 = vunpack.c.l.b16 %v1931
          %v3299 = vunpack.c.h.b16 %v1931
          %v3300 = vunpack.c.l.b16 %v1932
          %v3301 = vunpack.c.h.b16 %v1932
          %v3302 = vunpack.c.l.b16 %v1933
          %v3303 = vunpack.c.h.b16 %v1933
          %v3304 = vunpack.c.l.b16 %v1934
          %v3305 = vunpack.c.h.b16 %v1934
          %v3306 = vunpack.c.l.b16 %v1935
          %v3307 = vunpack.c.h.b16 %v1935
          %v3308 = vunpack.c.l.b16 %v1936
          %v3309 = vunpack.c.h.b16 %v1936
          %v3310 = vunpack.c.l.b16 %v1937
          %v3311 = vunpack.c.h.b16 %v1937
          %v3312 = vunpack.c.l.b16 %v1938
          %v3313 = vunpack.c.h.b16 %v1938
          %v3314 = vunpack.c.l.b16 %v1939
          %v3315 = vunpack.c.h.b16 %v1939
          %v3316 = vunpack.c.l.b16 %v1940
          %v3317 = vunpack.c.h.b16 %v1940
          %v3318 = vunpack.c.l.b16 %v1941
          %v3319 = vunpack.c.h.b16 %v1941
          %v3320 = vunpack.c.l.b16 %v1942
          %v3321 = vunpack.c.h.b16 %v1942
          %v3322 = vunpack.c.l.b16 %v1943
          %v3323 = vunpack.c.h.b16 %v1943
          %v3324 = vunpack.c.l.b16 %v1944
          %v3325 = vunpack.c.h.b16 %v1944
          %v3326 = vunpack.c.l.b16 %v1945
          %v3327 = vunpack.c.h.b16 %v1945
          %v3328 = vunpack.c.l.b16 %v1946
          %v3329 = vunpack.c.h.b16 %v1946
          %v3330 = vunpack.c.l.b16 %v1947
          %v3331 = vunpack.c.h.b16 %v1947
          %v3332 = vunpack.c.l.b16 %v1948
          %v3333 = vunpack.c.h.b16 %v1948
          %v3334 = vunpack.c.l.b16 %v1949
          %v3335 = vunpack.c.h.b16 %v1949
          %v3336 = vunpack.c.l.b16 %v1950
          %v3337 = vunpack.c.h.b16 %v1950
          %v3338 = vunpack.c.l.b16 %v1951
          %v3339 = vunpack.c.h.b16 %v1951
          %v3340 = vunpack.c.l.b16 %v1952
          %v3341 = vunpack.c.h.b16 %v1952
          %v3342 = vunpack.c.l.b16 %v1953
          %v3343 = vunpack.c.h.b16 %v1953
          %v3344 = vunpack.c.l.b16 %v1954
          %v3345 = vunpack.c.h.b16 %v1954
          %v3346 = vunpack.c.l.b16 %v1955
          %v3347 = vunpack.c.h.b16 %v1955
          %v3348 = vunpack.c.l.b16 %v1956
          %v3349 = vunpack.c.h.b16 %v1956
          %v3350 = vunpack.c.l.b16 %v1957
          %v3351 = vunpack.c.h.b16 %v1957
          %v3352 = vunpack.c.l.b16 %v1958
          %v3353 = vunpack.c.h.b16 %v1958
          %v3354 = vunpack.c.l.b16 %v1959
          %v3355 = vunpack.c.h.b16 %v1959
          %v3356 = vunpack.c.l.b16 %v1960
          %v3357 = vunpack.c.h.b16 %v1960
          %v3358 = vunpack.c.l.b16 %v1961
          %v3359 = vunpack.c.h.b16 %v1961
          %v3360 = vunpack.c.l.b16 %v1962
          %v3361 = vunpack.c.h.b16 %v1962
          %v3362 = vunpack.c.l.b16 %v1963
          %v3363 = vunpack.c.h.b16 %v1963
          %v3364 = vunpack.c.l.b16 %v1964
          %v3365 = vunpack.c.h.b16 %v1964
          %v3366 = vunpack.c.l.b16 %v1965
          %v3367 = vunpack.c.h.b16 %v1965
          %v3368 = vunpack.c.l.b16 %v1966
          %v3369 = vunpack.c.h.b16 %v1966
          %v3370 = vunpack.c.l.b16 %v1967
          %v3371 = vunpack.c.h.b16 %v1967
          %v3372 = vunpack.c.l.b16 %v1968
          %v3373 = vunpack.c.h.b16 %v1968
          %v3374 = vunpack.c.l.b16 %v1969
          %v3375 = vunpack.c.h.b16 %v1969
          %v3376 = vunpack.c.l.b16 %v1970
          %v3377 = vunpack.c.h.b16 %v1970
          %v3378 = vunpack.c.l.b16 %v1971
          %v3379 = vunpack.c.h.b16 %v1971
          %v3380 = vunpack.c.l.b16 %v1972
          %v3381 = vunpack.c.h.b16 %v1972
          %v3382 = vunpack.c.l.b16 %v1973
          %v3383 = vunpack.c.h.b16 %v1973
          %v3384 = vunpack.c.l.b16 %v1974
          %v3385 = vunpack.c.h.b16 %v1974
          %v3386 = vunpack.c.l.b16 %v1975
          %v3387 = vunpack.c.h.b16 %v1975
          %v3388 = vunpack.c.l.b16 %v1976
          %v3389 = vunpack.c.h.b16 %v1976
          %v3390 = vunpack.c.l.b16 %v1977
          %v3391 = vunpack.c.h.b16 %v1977
          %v3392 = vunpack.c.l.b16 %v1978
          %v3393 = vunpack.c.h.b16 %v1978
          %v3394 = vunpack.c.l.b16 %v1979
          %v3395 = vunpack.c.h.b16 %v1979
          %v3396 = vunpack.c.l.b16 %v1980
          %v3397 = vunpack.c.h.b16 %v1980
          %v3398 = vunpack.c.l.b16 %v1981
          %v3399 = vunpack.c.h.b16 %v1981
          %v3400 = vunpack.c.l.b16 %v1982
          %v3401 = vunpack.c.h.b16 %v1982
          %v3402 = vunpack.c.l.b16 %v1983
          %v3403 = vunpack.c.h.b16 %v1983
          %v3404 = vunpack.c.l.b16 %v1984
          %v3405 = vunpack.c.h.b16 %v1984
          %v3406 = vunpack.c.l.b16 %v1985
          %v3407 = vunpack.c.h.b16 %v1985
          %v3408 = vunpack.c.l.b16 %v1986
          %v3409 = vunpack.c.h.b16 %v1986
          %v3410 = vunpack.c.l.b16 %v1987
          %v3411 = vunpack.c.h.b16 %v1987
          %v3412 = vunpack.c.l.b16 %v1988
          %v3413 = vunpack.c.h.b16 %v1988
          %v3414 = vunpack.c.l.b16 %v1989
          %v3415 = vunpack.c.h.b16 %v1989
          %v3416 = vunpack.c.l.b16 %v1990
          %v3417 = vunpack.c.h.b16 %v1990
          %v3418 = vunpack.c.l.b16 %v1991
          %v3419 = vunpack.c.h.b16 %v1991
          %v3420 = vunpack.c.l.b16 %v1992
          %v3421 = vunpack.c.h.b16 %v1992
          %v3422 = vunpack.c.l.b16 %v1993
          %v3423 = vunpack.c.h.b16 %v1993
          %v3424 = vunpack.c.l.b16 %v1994
          %v3425 = vunpack.c.h.b16 %v1994
          %v3426 = vunpack.c.l.b16 %v1995
          %v3427 = vunpack.c.h.b16 %v1995
          %v3428 = vunpack.c.l.b16 %v1996
          %v3429 = vunpack.c.h.b16 %v1996
          %v3430 = vunpack.c.l.b16 %v1997
          %v3431 = vunpack.c.h.b16 %v1997
          %v3432 = vunpack.c.l.b16 %v1998
          %v3433 = vunpack.c.h.b16 %v1998
          %v3434 = vunpack.c.l.b16 %v1999
          %v3435 = vunpack.c.h.b16 %v1999
          %v3436 = vunpack.c.l.b16 %v2000
          %v3437 = vunpack.c.h.b16 %v2000
          %v3438 = vunpack.c.l.b16 %v2001
          %v3439 = vunpack.c.h.b16 %v2001
          %v3440 = vunpack.c.l.b16 %v2002
          %v3441 = vunpack.c.h.b16 %v2002
          %v3442 = vunpack.c.l.b16 %v2003
          %v3443 = vunpack.c.h.b16 %v2003
          %v3444 = vunpack.c.l.b16 %v2004
          %v3445 = vunpack.c.h.b16 %v2004
          %v3446 = vunpack.c.l.b16 %v2005
          %v3447 = vunpack.c.h.b16 %v2005
          %v3448 = vunpack.c.l.b16 %v2006
          %v3449 = vunpack.c.h.b16 %v2006
          %v3450 = vunpack.c.l.b16 %v2007
          %v3451 = vunpack.c.h.b16 %v2007
          %v3452 = vunpack.c.l.b16 %v2008
          %v3453 = vunpack.c.h.b16 %v2008
          %v3454 = vunpack.c.l.b16 %v2009
          %v3455 = vunpack.c.h.b16 %v2009
          %v3456 = vunpack.c.l.b16 %v2010
          %v3457 = vunpack.c.h.b16 %v2010
          %v3458 = vunpack.c.l.b16 %v2011
          %v3459 = vunpack.c.h.b16 %v2011
          %v3460 = vunpack.c.l.b16 %v2012
          %v3461 = vunpack.c.h.b16 %v2012
          %v3462 = vunpack.c.l.b16 %v2013
          %v3463 = vunpack.c.h.b16 %v2013
          %v3464 = vunpack.c.l.b16 %v2014
          %v3465 = vunpack.c.h.b16 %v2014
          %v3466 = vunpack.c.l.b16 %v2015
          %v3467 = vunpack.c.h.b16 %v2015
          %v3468 = vunpack.c.l.b16 %v2016
          %v3469 = vunpack.c.h.b16 %v2016
          %v3470 = vunpack.c.l.b16 %v2017
          %v3471 = vunpack.c.h.b16 %v2017
          %v3472 = vunpack.c.l.b16 %v2018
          %v3473 = vunpack.c.h.b16 %v2018
          %v3474 = vunpack.c.l.b16 %v2019
          %v3475 = vunpack.c.h.b16 %v2019
          %v3476 = vunpack.c.l.b16 %v2020
          %v3477 = vunpack.c.h.b16 %v2020
          %v3478 = vunpack.c.l.b16 %v2021
          %v3479 = vunpack.c.h.b16 %v2021
          %v3480 = vunpack.c.l.b16 %v2022
          %v3481 = vunpack.c.h.b16 %v2022
          %v3482 = vunpack.c.l.b16 %v2023
          %v3483 = vunpack.c.h.b16 %v2023
          %v3484 = vunpack.c.l.b16 %v2024
          %v3485 = vunpack.c.h.b16 %v2024
          %v3486 = vunpack.c.l.b16 %v2025
          %v3487 = vunpack.c.h.b16 %v2025
          %v3488 = vunpack.c.l.b16 %v2026
          %v3489 = vunpack.c.h.b16 %v2026
          %v3490 = vunpack.c.l.b16 %v2027
          %v3491 = vunpack.c.h.b16 %v2027
          %v3492 = vunpack.c.l.b16 %v2028
          %v3493 = vunpack.c.h.b16 %v2028
          %v3494 = vunpack.c.l.b16 %v2029
          %v3495 = vunpack.c.h.b16 %v2029
          %v3496 = vunpack.c.l.b16 %v2030
          %v3497 = vunpack.c.h.b16 %v2030
          %v3498 = vunpack.c.l.b16 %v2031
          %v3499 = vunpack.c.h.b16 %v2031
          %v3500 = vunpack.c.l.b16 %v2032
          %v3501 = vunpack.c.h.b16 %v2032
          %v3502 = vunpack.c.l.b16 %v2033
          %v3503 = vunpack.c.h.b16 %v2033
          %v3504 = vunpack.c.l.b16 %v2034
          %v3505 = vunpack.c.h.b16 %v2034
          %v3506 = vunpack.c.l.b16 %v2035
          %v3507 = vunpack.c.h.b16 %v2035
          %v3508 = vunpack.c.l.b16 %v2036
          %v3509 = vunpack.c.h.b16 %v2036
          %v3510 = vunpack.c.l.b16 %v2037
          %v3511 = vunpack.c.h.b16 %v2037
          %v3512 = vunpack.c.l.b16 %v2038
          %v3513 = vunpack.c.h.b16 %v2038
          %v3514 = vunpack.c.l.b16 %v2039
          %v3515 = vunpack.c.h.b16 %v2039
          %v3516 = vunpack.c.l.b16 %v2040
          %v3517 = vunpack.c.h.b16 %v2040
          %v3518 = vunpack.c.l.b16 %v2041
          %v3519 = vunpack.c.h.b16 %v2041
          %v3520 = vunpack.c.l.b16 %v2042
          %v3521 = vunpack.c.h.b16 %v2042
          %v3522 = vunpack.c.l.b16 %v2043
          %v3523 = vunpack.c.h.b16 %v2043
          %v3524 = vunpack.c.l.b16 %v2044
          %v3525 = vunpack.c.h.b16 %v2044
          %v3526 = vunpack.c.l.b16 %v2045
          %v3527 = vunpack.c.h.b16 %v2045
          %v3528 = vunpack.c.l.b16 %v2046
          %v3529 = vunpack.c.h.b16 %v2046
          %v3530 = vunpack.c.l.b16 %v2047
          %v3531 = vunpack.c.h.b16 %v2047
          %v3532 = vunpack.c.l.b16 %v2048
          %v3533 = vunpack.c.h.b16 %v2048
          %v3534 = vunpack.c.l.b16 %v2049
          %v3535 = vunpack.c.h.b16 %v2049
          %v3536 = vunpack.c.l.b16 %v2050
          %v3537 = vunpack.c.h.b16 %v2050
          %v3538 = vunpack.c.l.b16 %v2051
          %v3539 = vunpack.c.h.b16 %v2051
          %v3540 = vunpack.c.l.b16 %v2052
          %v3541 = vunpack.c.h.b16 %v2052
          %v3542 = vunpack.c.l.b16 %v2053
          %v3543 = vunpack.c.h.b16 %v2053
          %v3544 = vunpack.c.l.b16 %v2054
          %v3545 = vunpack.c.h.b16 %v2054
          %v3546 = vunpack.c.l.b16 %v2055
          %v3547 = vunpack.c.h.b16 %v2055
          %v3548 = vunpack.c.l.b16 %v2056
          %v3549 = vunpack.c.h.b16 %v2056
          %v3550 = vunpack.c.l.b16 %v2057
          %v3551 = vunpack.c.h.b16 %v2057
          %v3552 = vunpack.c.l.b16 %v2058
          %v3553 = vunpack.c.h.b16 %v2058
          %v3554 = vunpack.c.l.b16 %v2059
          %v3555 = vunpack.c.h.b16 %v2059
          %v3556 = vunpack.c.l.b16 %v2060
          %v3557 = vunpack.c.h.b16 %v2060
          %v3558 = vunpack.c.l.b16 %v2061
          %v3559 = vunpack.c.h.b16 %v2061
          %v3560 = vunpack.c.l.b16 %v2062
          %v3561 = vunpack.c.h.b16 %v2062
          %v3562 = vunpack.c.l.b16 %v2063
          %v3563 = vunpack.c.h.b16 %v2063
          %v3564 = vunpack.c.l.b16 %v2064
          %v3565 = vunpack.c.h.b16 %v2064
          %v3566 = vunpack.c.l.b16 %v2065
          %v3567 = vunpack.c.h.b16 %v2065
          %v3568 = vunpack.c.l.b16 %v2066
          %v3569 = vunpack.c.h.b16 %v2066
          %v3570 = vunpack.c.l.b16 %v2067
          %v3571 = vunpack.c.h.b16 %v2067
          %v3572 = vunpack.c.l.b16 %v2068
          %v3573 = vunpack.c.h.b16 %v2068
          %v3574 = vunpack.c.l.b16 %v2069
          %v3575 = vunpack.c.h.b16 %v2069
          %v3576 = vunpack.c.l.b16 %v2070
          %v3577 = vunpack.c.h.b16 %v2070
          %v3578 = vunpack.c.l.b16 %v2071
          %v3579 = vunpack.c.h.b16 %v2071
          %v3580 = vunpack.c.l.b16 %v2072
          %v3581 = vunpack.c.h.b16 %v2072
          %v3582 = vunpack.c.l.b16 %v2073
          %v3583 = vunpack.c.h.b16 %v2073
          %v3584 = vunpack.c.l.b16 %v2074
          %v3585 = vunpack.c.h.b16 %v2074
          %v3586 = vunpack.c.l.b16 %v2075
          %v3587 = vunpack.c.h.b16 %v2075
          %v3588 = vunpack.c.l.b16 %v2076
          %v3589 = vunpack.c.h.b16 %v2076
          %v3590 = vunpack.c.l.b16 %v2077
          %v3591 = vunpack.c.h.b16 %v2077
          %v3592 = vunpack.c.l.b16 %v2078
          %v3593 = vunpack.c.h.b16 %v2078
          %v3594 = vunpack.c.l.b16 %v2079
          %v3595 = vunpack.c.h.b16 %v2079
          %v3596 = vunpack.c.l.b16 %v2080
          %v3597 = vunpack.c.h.b16 %v2080
          %v3598 = vunpack.c.l.b16 %v2081
          %v3599 = vunpack.c.h.b16 %v2081
          %v3600 = vunpack.c.l.b16 %v2082
          %v3601 = vunpack.c.h.b16 %v2082
          %v3602 = vunpack.c.l.b16 %v2083
          %v3603 = vunpack.c.h.b16 %v2083
          %v3604 = vunpack.c.l.b16 %v2084
          %v3605 = vunpack.c.h.b16 %v2084
          %v3606 = vunpack.c.l.b16 %v2085
          %v3607 = vunpack.c.h.b16 %v2085
          %v3608 = vunpack.c.l.b16 %v2086
          %v3609 = vunpack.c.h.b16 %v2086
          %v3610 = vunpack.c.l.b16 %v2087
          %v3611 = vunpack.c.h.b16 %v2087
          %v3612 = vunpack.c.l.b16 %v2088
          %v3613 = vunpack.c.h.b16 %v2088
          %v3614 = vunpack.c.l.b16 %v2089
          %v3615 = vunpack.c.h.b16 %v2089
          %v3616 = vunpack.c.l.b16 %v2090
          %v3617 = vunpack.c.h.b16 %v2090
          %v3618 = vunpack.c.l.b16 %v2091
          %v3619 = vunpack.c.h.b16 %v2091
          %v3620 = vunpack.c.l.b16 %v2092
          %v3621 = vunpack.c.h.b16 %v2092
          %v3622 = vunpack.c.l.b16 %v2093
          %v3623 = vunpack.c.h.b16 %v2093
          %v3624 = vunpack.c.l.b16 %v2094
          %v3625 = vunpack.c.h.b16 %v2094
          %v3626 = vunpack.c.l.b16 %v2095
          %v3627 = vunpack.c.h.b16 %v2095
          %v3628 = vunpack.c.l.b16 %v2096
          %v3629 = vunpack.c.h.b16 %v2096
          %v3630 = vunpack.c.l.b16 %v2097
          %v3631 = vunpack.c.h.b16 %v2097
          %v3632 = vunpack.c.l.b16 %v2098
          %v3633 = vunpack.c.h.b16 %v2098
          %v3634 = vunpack.c.l.b16 %v2099
          %v3635 = vunpack.c.h.b16 %v2099
          %v3636 = vunpack.c.l.b16 %v2100
          %v3637 = vunpack.c.h.b16 %v2100
          %v3638 = vunpack.c.l.b16 %v2101
          %v3639 = vunpack.c.h.b16 %v2101
          %v3640 = vunpack.c.l.b16 %v2102
          %v3641 = vunpack.c.h.b16 %v2102
          %v3642 = vunpack.c.l.b16 %v2103
          %v3643 = vunpack.c.h.b16 %v2103
          %v3644 = vunpack.c.l.b16 %v2104
          %v3645 = vunpack.c.h.b16 %v2104
          %v3646 = vunpack.c.l.b16 %v2105
          %v3647 = vunpack.c.h.b16 %v2105
          %v3648 = vunpack.c.l.b16 %v2106
          %v3649 = vunpack.c.h.b16 %v2106
          %v3650 = vunpack.c.l.b16 %v2107
          %v3651 = vunpack.c.h.b16 %v2107
          %v3652 = vunpack.c.l.b16 %v2108
          %v3653 = vunpack.c.h.b16 %v2108
          %v3654 = vunpack.c.l.b16 %v2109
          %v3655 = vunpack.c.h.b16 %v2109
          %v3656 = vunpack.c.l.b16 %v2110
          %v3657 = vunpack.c.h.b16 %v2110
          %v3658 = vunpack.c.l.b16 %v2111
          %v3659 = vunpack.c.h.b16 %v2111
          %v3660 = vunpack.c.l.b16 %v2112
          %v3661 = vunpack.c.h.b16 %v2112
          %v3662 = vunpack.c.l.b16 %v2113
          %v3663 = vunpack.c.h.b16 %v2113
          %v3664 = vunpack.c.l.b16 %v2114
          %v3665 = vunpack.c.h.b16 %v2114
          %v3666 = vunpack.c.l.b16 %v2115
          %v3667 = vunpack.c.h.b16 %v2115
          %v3668 = vunpack.c.l.b16 %v2116
          %v3669 = vunpack.c.h.b16 %v2116
          %v3670 = vunpack.c.l.b16 %v2117
          %v3671 = vunpack.c.h.b16 %v2117
          %v3672 = vunpack.c.l.b16 %v2118
          %v3673 = vunpack.c.h.b16 %v2118
          %v3674 = vunpack.c.l.b16 %v2119
          %v3675 = vunpack.c.h.b16 %v2119
          %v3676 = vunpack.c.l.b16 %v2120
          %v3677 = vunpack.c.h.b16 %v2120
          %v3678 = vunpack.c.l.b16 %v2121
          %v3679 = vunpack.c.h.b16 %v2121
          %v3680 = vpack.c.b16 %v2660, %v2656
          %v3681 = vpack.c.b16 %v2661, %v2657
          %v3682 = vpack.c.b16 %v2662, %v2658
          %v3683 = vpack.c.b16 %v2663, %v2659
          %v3684 = vpack.c.b16 %v2668, %v2664
          %v3685 = vpack.c.b16 %v2669, %v2665
          %v3686 = vpack.c.b16 %v2670, %v2666
          %v3687 = vpack.c.b16 %v2671, %v2667
          %v3688 = vpack.c.b16 %v2676, %v2672
          %v3689 = vpack.c.b16 %v2677, %v2673
          %v3690 = vpack.c.b16 %v2678, %v2674
          %v3691 = vpack.c.b16 %v2679, %v2675
          %v3692 = vpack.c.b16 %v2684, %v2680
          %v3693 = vpack.c.b16 %v2685, %v2681
          %v3694 = vpack.c.b16 %v2686, %v2682
          %v3695 = vpack.c.b16 %v2687, %v2683
          %v3696 = vpack.c.b16 %v2692, %v2688
          %v3697 = vpack.c.b16 %v2693, %v2689
          %v3698 = vpack.c.b16 %v2694, %v2690
          %v3699 = vpack.c.b16 %v2695, %v2691
          %v3700 = vpack.c.b16 %v2700, %v2696
          %v3701 = vpack.c.b16 %v2701, %v2697
          %v3702 = vpack.c.b16 %v2702, %v2698
          %v3703 = vpack.c.b16 %v2703, %v2699
          %v3704 = vpack.c.b16 %v2708, %v2704
          %v3705 = vpack.c.b16 %v2709, %v2705
          %v3706 = vpack.c.b16 %v2710, %v2706
          %v3707 = vpack.c.b16 %v2711, %v2707
          %v3708 = vpack.c.b16 %v2716, %v2712
          %v3709 = vpack.c.b16 %v2717, %v2713
          %v3710 = vpack.c.b16 %v2718, %v2714
          %v3711 = vpack.c.b16 %v2719, %v2715
          %v3712 = vpack.c.b16 %v2724, %v2720
          %v3713 = vpack.c.b16 %v2725, %v2721
          %v3714 = vpack.c.b16 %v2726, %v2722
          %v3715 = vpack.c.b16 %v2727, %v2723
          %v3716 = vpack.c.b16 %v2732, %v2728
          %v3717 = vpack.c.b16 %v2733, %v2729
          %v3718 = vpack.c.b16 %v2734, %v2730
          %v3719 = vpack.c.b16 %v2735, %v2731
          %v3720 = vpack.c.b16 %v2740, %v2736
          %v3721 = vpack.c.b16 %v2741, %v2737
          %v3722 = vpack.c.b16 %v2742, %v2738
          %v3723 = vpack.c.b16 %v2743, %v2739
          %v3724 = vpack.c.b16 %v2748, %v2744
          %v3725 = vpack.c.b16 %v2749, %v2745
          %v3726 = vpack.c.b16 %v2750, %v2746
          %v3727 = vpack.c.b16 %v2751, %v2747
          %v3728 = vpack.c.b16 %v2756, %v2752
          %v3729 = vpack.c.b16 %v2757, %v2753
          %v3730 = vpack.c.b16 %v2758, %v2754
          %v3731 = vpack.c.b16 %v2759, %v2755
          %v3732 = vpack.c.b16 %v2764, %v2760
          %v3733 = vpack.c.b16 %v2765, %v2761
          %v3734 = vpack.c.b16 %v2766, %v2762
          %v3735 = vpack.c.b16 %v2767, %v2763
          %v3736 = vpack.c.b16 %v2772, %v2768
          %v3737 = vpack.c.b16 %v2773, %v2769
          %v3738 = vpack.c.b16 %v2774, %v2770
          %v3739 = vpack.c.b16 %v2775, %v2771
          %v3740 = vpack.c.b16 %v2780, %v2776
          %v3741 = vpack.c.b16 %v2781, %v2777
          %v3742 = vpack.c.b16 %v2782, %v2778
          %v3743 = vpack.c.b16 %v2783, %v2779
          %v3744 = vpack.c.b16 %v2788, %v2784
          %v3745 = vpack.c.b16 %v2789, %v2785
          %v3746 = vpack.c.b16 %v2790, %v2786
          %v3747 = vpack.c.b16 %v2791, %v2787
          %v3748 = vpack.c.b16 %v2796, %v2792
          %v3749 = vpack.c.b16 %v2797, %v2793
          %v3750 = vpack.c.b16 %v2798, %v2794
          %v3751 = vpack.c.b16 %v2799, %v2795
          %v3752 = vpack.c.b16 %v2804, %v2800
          %v3753 = vpack.c.b16 %v2805, %v2801
          %v3754 = vpack.c.b16 %v2806, %v2802
          %v3755 = vpack.c.b16 %v2807, %v2803
          %v3756 = vpack.c.b16 %v2812, %v2808
          %v3757 = vpack.c.b16 %v2813, %v2809
          %v3758 = vpack.c.b16 %v2814, %v2810
          %v3759 = vpack.c.b16 %v2815, %v2811
          %v3760 = vpack.c.b16 %v2820, %v2816
          %v3761 = vpack.c.b16 %v2821, %v2817
          %v3762 = vpack.c.b16 %v2822, %v2818
          %v3763 = vpack.c.b16 %v2823, %v2819
          %v3764 = vpack.c.b16 %v2828, %v2824
          %v3765 = vpack.c.b16 %v2829, %v2825
          %v3766 = vpack.c.b16 %v2830, %v2826
          %v3767 = vpack.c.b16 %v2831, %v2827
          %v3768 = vpack.c.b16 %v2836, %v2832
          %v3769 = vpack.c.b16 %v2837, %v2833
          %v3770 = vpack.c.b16 %v2838, %v2834
          %v3771 = vpack.c.b16 %v2839, %v2835
          %v3772 = vpack.c.b16 %v2844, %v2840
          %v3773 = vpack.c.b16 %v2845, %v2841
          %v3774 = vpack.c.b16 %v2846, %v2842
          %v3775 = vpack.c.b16 %v2847, %v2843
          %v3776 = vpack.c.b16 %v2852, %v2848
          %v3777 = vpack.c.b16 %v2853, %v2849
          %v3778 = vpack.c.b16 %v2854, %v2850
          %v3779 = vpack.c.b16 %v2855, %v2851
          %v3780 = vpack.c.b16 %v2860, %v2856
          %v3781 = vpack.c.b16 %v2861, %v2857
          %v3782 = vpack.c.b16 %v2862, %v2858
          %v3783 = vpack.c.b16 %v2863, %v2859
          %v3784 = vpack.c.b16 %v2868, %v2864
          %v3785 = vpack.c.b16 %v2869, %v2865
          %v3786 = vpack.c.b16 %v2870, %v2866
          %v3787 = vpack.c.b16 %v2871, %v2867
          %v3788 = vpack.c.b16 %v2876, %v2872
          %v3789 = vpack.c.b16 %v2877, %v2873
          %v3790 = vpack.c.b16 %v2878, %v2874
          %v3791 = vpack.c.b16 %v2879, %v2875
          %v3792 = vpack.c.b16 %v2884, %v2880
          %v3793 = vpack.c.b16 %v2885, %v2881
          %v3794 = vpack.c.b16 %v2886, %v2882
          %v3795 = vpack.c.b16 %v2887, %v2883
          %v3796 = vpack.c.b16 %v2892, %v2888
          %v3797 = vpack.c.b16 %v2893, %v2889
          %v3798 = vpack.c.b16 %v2894, %v2890
          %v3799 = vpack.c.b16 %v2895, %v2891
          %v3800 = vpack.c.b16 %v2900, %v2896
          %v3801 = vpack.c.b16 %v2901, %v2897
          %v3802 = vpack.c.b16 %v2902, %v2898
          %v3803 = vpack.c.b16 %v2903, %v2899
          %v3804 = vpack.c.b16 %v2908, %v2904
          %v3805 = vpack.c.b16 %v2909, %v2905
          %v3806 = vpack.c.b16 %v2910, %v2906
          %v3807 = vpack.c.b16 %v2911, %v2907
          %v3808 = vpack.c.b16 %v2916, %v2912
          %v3809 = vpack.c.b16 %v2917, %v2913
          %v3810 = vpack.c.b16 %v2918, %v2914
          %v3811 = vpack.c.b16 %v2919, %v2915
          %v3812 = vpack.c.b16 %v2924, %v2920
          %v3813 = vpack.c.b16 %v2925, %v2921
          %v3814 = vpack.c.b16 %v2926, %v2922
          %v3815 = vpack.c.b16 %v2927, %v2923
          %v3816 = vpack.c.b16 %v2932, %v2928
          %v3817 = vpack.c.b16 %v2933, %v2929
          %v3818 = vpack.c.b16 %v2934, %v2930
          %v3819 = vpack.c.b16 %v2935, %v2931
          %v3820 = vpack.c.b16 %v2940, %v2936
          %v3821 = vpack.c.b16 %v2941, %v2937
          %v3822 = vpack.c.b16 %v2942, %v2938
          %v3823 = vpack.c.b16 %v2943, %v2939
          %v3824 = vpack.c.b16 %v2948, %v2944
          %v3825 = vpack.c.b16 %v2949, %v2945
          %v3826 = vpack.c.b16 %v2950, %v2946
          %v3827 = vpack.c.b16 %v2951, %v2947
          %v3828 = vpack.c.b16 %v2956, %v2952
          %v3829 = vpack.c.b16 %v2957, %v2953
          %v3830 = vpack.c.b16 %v2958, %v2954
          %v3831 = vpack.c.b16 %v2959, %v2955
          %v3832 = vpack.c.b16 %v2964, %v2960
          %v3833 = vpack.c.b16 %v2965, %v2961
          %v3834 = vpack.c.b16 %v2966, %v2962
          %v3835 = vpack.c.b16 %v2967, %v2963
          %v3836 = vpack.c.b16 %v2972, %v2968
          %v3837 = vpack.c.b16 %v2973, %v2969
          %v3838 = vpack.c.b16 %v2974, %v2970
          %v3839 = vpack.c.b16 %v2975, %v2971
          %v3840 = vpack.c.b16 %v2980, %v2976
          %v3841 = vpack.c.b16 %v2981, %v2977
          %v3842 = vpack.c.b16 %v2982, %v2978
          %v3843 = vpack.c.b16 %v2983, %v2979
          %v3844 = vpack.c.b16 %v2988, %v2984
          %v3845 = vpack.c.b16 %v2989, %v2985
          %v3846 = vpack.c.b16 %v2990, %v2986
          %v3847 = vpack.c.b16 %v2991, %v2987
          %v3848 = vpack.c.b16 %v2996, %v2992
          %v3849 = vpack.c.b16 %v2997, %v2993
          %v3850 = vpack.c.b16 %v2998, %v2994
          %v3851 = vpack.c.b16 %v2999, %v2995
          %v3852 = vpack.c.b16 %v3004, %v3000
          %v3853 = vpack.c.b16 %v3005, %v3001
          %v3854 = vpack.c.b16 %v3006, %v3002
          %v3855 = vpack.c.b16 %v3007, %v3003
          %v3856 = vpack.c.b16 %v3012, %v3008
          %v3857 = vpack.c.b16 %v3013, %v3009
          %v3858 = vpack.c.b16 %v3014, %v3010
          %v3859 = vpack.c.b16 %v3015, %v3011
          %v3860 = vpack.c.b16 %v3020, %v3016
          %v3861 = vpack.c.b16 %v3021, %v3017
          %v3862 = vpack.c.b16 %v3022, %v3018
          %v3863 = vpack.c.b16 %v3023, %v3019
          %v3864 = vpack.c.b16 %v3028, %v3024
          %v3865 = vpack.c.b16 %v3029, %v3025
          %v3866 = vpack.c.b16 %v3030, %v3026
          %v3867 = vpack.c.b16 %v3031, %v3027
          %v3868 = vpack.c.b16 %v3036, %v3032
          %v3869 = vpack.c.b16 %v3037, %v3033
          %v3870 = vpack.c.b16 %v3038, %v3034
          %v3871 = vpack.c.b16 %v3039, %v3035
          %v3872 = vpack.c.b16 %v3044, %v3040
          %v3873 = vpack.c.b16 %v3045, %v3041
          %v3874 = vpack.c.b16 %v3046, %v3042
          %v3875 = vpack.c.b16 %v3047, %v3043
          %v3876 = vpack.c.b16 %v3052, %v3048
          %v3877 = vpack.c.b16 %v3053, %v3049
          %v3878 = vpack.c.b16 %v3054, %v3050
          %v3879 = vpack.c.b16 %v3055, %v3051
          %v3880 = vpack.c.b16 %v3060, %v3056
          %v3881 = vpack.c.b16 %v3061, %v3057
          %v3882 = vpack.c.b16 %v3062, %v3058
          %v3883 = vpack.c.b16 %v3063, %v3059
          %v3884 = vpack.c.b16 %v3068, %v3064
          %v3885 = vpack.c.b16 %v3069, %v3065
          %v3886 = vpack.c.b16 %v3070, %v3066
          %v3887 = vpack.c.b16 %v3071, %v3067
          %v3888 = vpack.c.b16 %v3076, %v3072
          %v3889 = vpack.c.b16 %v3077, %v3073
          %v3890 = vpack.c.b16 %v3078, %v3074
          %v3891 = vpack.c.b16 %v3079, %v3075
          %v3892 = vpack.c.b16 %v3084, %v3080
          %v3893 = vpack.c.b16 %v3085, %v3081
          %v3894 = vpack.c.b16 %v3086, %v3082
          %v3895 = vpack.c.b16 %v3087, %v3083
          %v3896 = vpack.c.b16 %v3092, %v3088
          %v3897 = vpack.c.b16 %v3093, %v3089
          %v3898 = vpack.c.b16 %v3094, %v3090
          %v3899 = vpack.c.b16 %v3095, %v3091
          %v3900 = vpack.c.b16 %v3100, %v3096
          %v3901 = vpack.c.b16 %v3101, %v3097
          %v3902 = vpack.c.b16 %v3102, %v3098
          %v3903 = vpack.c.b16 %v3103, %v3099
          %v3904 = vpack.c.b16 %v3108, %v3104
          %v3905 = vpack.c.b16 %v3109, %v3105
          %v3906 = vpack.c.b16 %v3110, %v3106
          %v3907 = vpack.c.b16 %v3111, %v3107
          %v3908 = vpack.c.b16 %v3116, %v3112
          %v3909 = vpack.c.b16 %v3117, %v3113
          %v3910 = vpack.c.b16 %v3118, %v3114
          %v3911 = vpack.c.b16 %v3119, %v3115
          %v3912 = vpack.c.b16 %v3124, %v3120
          %v3913 = vpack.c.b16 %v3125, %v3121
          %v3914 = vpack.c.b16 %v3126, %v3122
          %v3915 = vpack.c.b16 %v3127, %v3123
          %v3916 = vpack.c.b16 %v3132, %v3128
          %v3917 = vpack.c.b16 %v3133, %v3129
          %v3918 = vpack.c.b16 %v3134, %v3130
          %v3919 = vpack.c.b16 %v3135, %v3131
          %v3920 = vpack.c.b16 %v3140, %v3136
          %v3921 = vpack.c.b16 %v3141, %v3137
          %v3922 = vpack.c.b16 %v3142, %v3138
          %v3923 = vpack.c.b16 %v3143, %v3139
          %v3924 = vpack.c.b16 %v3148, %v3144
          %v3925 = vpack.c.b16 %v3149, %v3145
          %v3926 = vpack.c.b16 %v3150, %v3146
          %v3927 = vpack.c.b16 %v3151, %v3147
          %v3928 = vpack.c.b16 %v3156, %v3152
          %v3929 = vpack.c.b16 %v3157, %v3153
          %v3930 = vpack.c.b16 %v3158, %v3154
          %v3931 = vpack.c.b16 %v3159, %v3155
          %v3932 = vpack.c.b16 %v3164, %v3160
          %v3933 = vpack.c.b16 %v3165, %v3161
          %v3934 = vpack.c.b16 %v3166, %v3162
          %v3935 = vpack.c.b16 %v3167, %v3163
          %v3936 = vpack.c.b16 %v3172, %v3168
          %v3937 = vpack.c.b16 %v3173, %v3169
          %v3938 = vpack.c.b16 %v3174, %v3170
          %v3939 = vpack.c.b16 %v3175, %v3171
          %v3940 = vpack.c.b16 %v3180, %v3176
          %v3941 = vpack.c.b16 %v3181, %v3177
          %v3942 = vpack.c.b16 %v3182, %v3178
          %v3943 = vpack.c.b16 %v3183, %v3179
          %v3944 = vpack.c.b16 %v3188, %v3184
          %v3945 = vpack.c.b16 %v3189, %v3185
          %v3946 = vpack.c.b16 %v3190, %v3186
          %v3947 = vpack.c.b16 %v3191, %v3187
          %v3948 = vpack.c.b16 %v3196, %v3192
          %v3949 = vpack.c.b16 %v3197, %v3193
          %v3950 = vpack.c.b16 %v3198, %v3194
          %v3951 = vpack.c.b16 %v3199, %v3195
          %v3952 = vpack.c.b16 %v3204, %v3200
          %v3953 = vpack.c.b16 %v3205, %v3201
          %v3954 = vpack.c.b16 %v3206, %v3202
          %v3955 = vpack.c.b16 %v3207, %v3203
          %v3956 = vpack.c.b16 %v3212, %v3208
          %v3957 = vpack.c.b16 %v3213, %v3209
          %v3958 = vpack.c.b16 %v3214, %v3210
          %v3959 = vpack.c.b16 %v3215, %v3211
          %v3960 = vpack.c.b16 %v3220, %v3216
          %v3961 = vpack.c.b16 %v3221, %v3217
          %v3962 = vpack.c.b16 %v3222, %v3218
          %v3963 = vpack.c.b16 %v3223, %v3219
          %v3964 = vpack.c.b16 %v3228, %v3224
          %v3965 = vpack.c.b16 %v3229, %v3225
          %v3966 = vpack.c.b16 %v3230, %v3226
          %v3967 = vpack.c.b16 %v3231, %v3227
          %v3968 = vpack.c.b16 %v3236, %v3232
          %v3969 = vpack.c.b16 %v3237, %v3233
          %v3970 = vpack.c.b16 %v3238, %v3234
          %v3971 = vpack.c.b16 %v3239, %v3235
          %v3972 = vpack.c.b16 %v3244, %v3240
          %v3973 = vpack.c.b16 %v3245, %v3241
          %v3974 = vpack.c.b16 %v3246, %v3242
          %v3975 = vpack.c.b16 %v3247, %v3243
          %v3976 = vpack.c.b16 %v3252, %v3248
          %v3977 = vpack.c.b16 %v3253, %v3249
          %v3978 = vpack.c.b16 %v3254, %v3250
          %v3979 = vpack.c.b16 %v3255, %v3251
          %v3980 = vpack.c.b16 %v3260, %v3256
          %v3981 = vpack.c.b16 %v3261, %v3257
          %v3982 = vpack.c.b16 %v3262, %v3258
          %v3983 = vpack.c.b16 %v3263, %v3259
          %v3984 = vpack.c.b16 %v3268, %v3264
          %v3985 = vpack.c.b16 %v3269, %v3265
          %v3986 = vpack.c.b16 %v3270, %v3266
          %v3987 = vpack.c.b16 %v3271, %v3267
          %v3988 = vpack.c.b16 %v3276, %v3272
          %v3989 = vpack.c.b16 %v3277, %v3273
          %v3990 = vpack.c.b16 %v3278, %v3274
          %v3991 = vpack.c.b16 %v3279, %v3275
          %v3992 = vpack.c.b16 %v3284, %v3280
          %v3993 = vpack.c.b16 %v3285, %v3281
          %v3994 = vpack.c.b16 %v3286, %v3282
          %v3995 = vpack.c.b16 %v3287, %v3283
          %v3996 = vpack.c.b16 %v3292, %v3288
          %v3997 = vpack.c.b16 %v3293, %v3289
          %v3998 = vpack.c.b16 %v3294, %v3290
          %v3999 = vpack.c.b16 %v3295, %v3291
          %v4000 = vpack.c.b16 %v3300, %v3296
          %v4001 = vpack.c.b16 %v3301, %v3297
          %v4002 = vpack.c.b16 %v3302, %v3298
          %v4003 = vpack.c.b16 %v3303, %v3299
          %v4004 = vpack.c.b16 %v3308, %v3304
          %v4005 = vpack.c.b16 %v3309, %v3305
          %v4006 = vpack.c.b16 %v3310, %v3306
          %v4007 = vpack.c.b16 %v3311, %v3307
          %v4008 = vpack.c.b16 %v3316, %v3312
          %v4009 = vpack.c.b16 %v3317, %v3313
          %v4010 = vpack.c.b16 %v3318, %v3314
          %v4011 = vpack.c.b16 %v3319, %v3315
          %v4012 = vpack.c.b16 %v3324, %v3320
          %v4013 = vpack.c.b16 %v3325, %v3321
          %v4014 = vpack.c.b16 %v3326, %v3322
          %v4015 = vpack.c.b16 %v3327, %v3323
          %v4016 = vpack.c.b16 %v3332, %v3328
          %v4017 = vpack.c.b16 %v3333, %v3329
          %v4018 = vpack.c.b16 %v3334, %v3330
          %v4019 = vpack.c.b16 %v3335, %v3331
          %v4020 = vpack.c.b16 %v3340, %v3336
          %v4021 = vpack.c.b16 %v3341, %v3337
          %v4022 = vpack.c.b16 %v3342, %v3338
          %v4023 = vpack.c.b16 %v3343, %v3339
          %v4024 = vpack.c.b16 %v3348, %v3344
          %v4025 = vpack.c.b16 %v3349, %v3345
          %v4026 = vpack.c.b16 %v3350, %v3346
          %v4027 = vpack.c.b16 %v3351, %v3347
          %v4028 = vpack.c.b16 %v3356, %v3352
          %v4029 = vpack.c.b16 %v3357, %v3353
          %v4030 = vpack.c.b16 %v3358, %v3354
          %v4031 = vpack.c.b16 %v3359, %v3355
          %v4032 = vpack.c.b16 %v3364, %v3360
          %v4033 = vpack.c.b16 %v3365, %v3361
          %v4034 = vpack.c.b16 %v3366, %v3362
          %v4035 = vpack.c.b16 %v3367, %v3363
          %v4036 = vpack.c.b16 %v3372, %v3368
          %v4037 = vpack.c.b16 %v3373, %v3369
          %v4038 = vpack.c.b16 %v3374, %v3370
          %v4039 = vpack.c.b16 %v3375, %v3371
          %v4040 = vpack.c.b16 %v3380, %v3376
          %v4041 = vpack.c.b16 %v3381, %v3377
          %v4042 = vpack.c.b16 %v3382, %v3378
          %v4043 = vpack.c.b16 %v3383, %v3379
          %v4044 = vpack.c.b16 %v3388, %v3384
          %v4045 = vpack.c.b16 %v3389, %v3385
          %v4046 = vpack.c.b16 %v3390, %v3386
          %v4047 = vpack.c.b16 %v3391, %v3387
          %v4048 = vpack.c.b16 %v3396, %v3392
          %v4049 = vpack.c.b16 %v3397, %v3393
          %v4050 = vpack.c.b16 %v3398, %v3394
          %v4051 = vpack.c.b16 %v3399, %v3395
          %v4052 = vpack.c.b16 %v3404, %v3400
          %v4053 = vpack.c.b16 %v3405, %v3401
          %v4054 = vpack.c.b16 %v3406, %v3402
          %v4055 = vpack.c.b16 %v3407, %v3403
          %v4056 = vpack.c.b16 %v3412, %v3408
          %v4057 = vpack.c.b16 %v3413, %v3409
          %v4058 = vpack.c.b16 %v3414, %v3410
          %v4059 = vpack.c.b16 %v3415, %v3411
          %v4060 = vpack.c.b16 %v3420, %v3416
          %v4061 = vpack.c.b16 %v3421, %v3417
          %v4062 = vpack.c.b16 %v3422, %v3418
          %v4063 = vpack.c.b16 %v3423, %v3419
          %v4064 = vpack.c.b16 %v3428, %v3424
          %v4065 = vpack.c.b16 %v3429, %v3425
          %v4066 = vpack.c.b16 %v3430, %v3426
          %v4067 = vpack.c.b16 %v3431, %v3427
          %v4068 = vpack.c.b16 %v3436, %v3432
          %v4069 = vpack.c.b16 %v3437, %v3433
          %v4070 = vpack.c.b16 %v3438, %v3434
          %v4071 = vpack.c.b16 %v3439, %v3435
          %v4072 = vpack.c.b16 %v3444, %v3440
          %v4073 = vpack.c.b16 %v3445, %v3441
          %v4074 = vpack.c.b16 %v3446, %v3442
          %v4075 = vpack.c.b16 %v3447, %v3443
          %v4076 = vpack.c.b16 %v3452, %v3448
          %v4077 = vpack.c.b16 %v3453, %v3449
          %v4078 = vpack.c.b16 %v3454, %v3450
          %v4079 = vpack.c.b16 %v3455, %v3451
          %v4080 = vpack.c.b16 %v3460, %v3456
          %v4081 = vpack.c.b16 %v3461, %v3457
          %v4082 = vpack.c.b16 %v3462, %v3458
          %v4083 = vpack.c.b16 %v3463, %v3459
          %v4084 = vpack.c.b16 %v3468, %v3464
          %v4085 = vpack.c.b16 %v3469, %v3465
          %v4086 = vpack.c.b16 %v3470, %v3466
          %v4087 = vpack.c.b16 %v3471, %v3467
          %v4088 = vpack.c.b16 %v3476, %v3472
          %v4089 = vpack.c.b16 %v3477, %v3473
          %v4090 = vpack.c.b16 %v3478, %v3474
          %v4091 = vpack.c.b16 %v3479, %v3475
          %v4092 = vpack.c.b16 %v3484, %v3480
          %v4093 = vpack.c.b16 %v3485, %v3481
          %v4094 = vpack.c.b16 %v3486, %v3482
          %v4095 = vpack.c.b16 %v3487, %v3483
          %v4096 = vpack.c.b16 %v3492, %v3488
          %v4097 = vpack.c.b16 %v3493, %v3489
          %v4098 = vpack.c.b16 %v3494, %v3490
          %v4099 = vpack.c.b16 %v3495, %v3491
          %v4100 = vpack.c.b16 %v3500, %v3496
          %v4101 = vpack.c.b16 %v3501, %v3497
          %v4102 = vpack.c.b16 %v3502, %v3498
          %v4103 = vpack.c.b16 %v3503, %v3499
          %v4104 = vpack.c.b16 %v3508, %v3504
          %v4105 = vpack.c.b16 %v3509, %v3505
          %v4106 = vpack.c.b16 %v3510, %v3506
          %v4107 = vpack.c.b16 %v3511, %v3507
          %v4108 = vpack.c.b16 %v3516, %v3512
          %v4109 = vpack.c.b16 %v3517, %v3513
          %v4110 = vpack.c.b16 %v3518, %v3514
          %v4111 = vpack.c.b16 %v3519, %v3515
          %v4112 = vpack.c.b16 %v3524, %v3520
          %v4113 = vpack.c.b16 %v3525, %v3521
          %v4114 = vpack.c.b16 %v3526, %v3522
          %v4115 = vpack.c.b16 %v3527, %v3523
          %v4116 = vpack.c.b16 %v3532, %v3528
          %v4117 = vpack.c.b16 %v3533, %v3529
          %v4118 = vpack.c.b16 %v3534, %v3530
          %v4119 = vpack.c.b16 %v3535, %v3531
          %v4120 = vpack.c.b16 %v3540, %v3536
          %v4121 = vpack.c.b16 %v3541, %v3537
          %v4122 = vpack.c.b16 %v3542, %v3538
          %v4123 = vpack.c.b16 %v3543, %v3539
          %v4124 = vpack.c.b16 %v3548, %v3544
          %v4125 = vpack.c.b16 %v3549, %v3545
          %v4126 = vpack.c.b16 %v3550, %v3546
          %v4127 = vpack.c.b16 %v3551, %v3547
          %v4128 = vpack.c.b16 %v3556, %v3552
          %v4129 = vpack.c.b16 %v3557, %v3553
          %v4130 = vpack.c.b16 %v3558, %v3554
          %v4131 = vpack.c.b16 %v3559, %v3555
          %v4132 = vpack.c.b16 %v3564, %v3560
          %v4133 = vpack.c.b16 %v3565, %v3561
          %v4134 = vpack.c.b16 %v3566, %v3562
          %v4135 = vpack.c.b16 %v3567, %v3563
          %v4136 = vpack.c.b16 %v3572, %v3568
          %v4137 = vpack.c.b16 %v3573, %v3569
          %v4138 = vpack.c.b16 %v3574, %v3570
          %v4139 = vpack.c.b16 %v3575, %v3571
          %v4140 = vpack.c.b16 %v3580, %v3576
          %v4141 = vpack.c.b16 %v3581, %v3577
          %v4142 = vpack.c.b16 %v3582, %v3578
          %v4143 = vpack.c.b16 %v3583, %v3579
          %v4144 = vpack.c.b16 %v3588, %v3584
          %v4145 = vpack.c.b16 %v3589, %v3585
          %v4146 = vpack.c.b16 %v3590, %v3586
          %v4147 = vpack.c.b16 %v3591, %v3587
          %v4148 = vpack.c.b16 %v3596, %v3592
          %v4149 = vpack.c.b16 %v3597, %v3593
          %v4150 = vpack.c.b16 %v3598, %v3594
          %v4151 = vpack.c.b16 %v3599, %v3595
          %v4152 = vpack.c.b16 %v3604, %v3600
          %v4153 = vpack.c.b16 %v3605, %v3601
          %v4154 = vpack.c.b16 %v3606, %v3602
          %v4155 = vpack.c.b16 %v3607, %v3603
          %v4156 = vpack.c.b16 %v3612, %v3608
          %v4157 = vpack.c.b16 %v3613, %v3609
          %v4158 = vpack.c.b16 %v3614, %v3610
          %v4159 = vpack.c.b16 %v3615, %v3611
          %v4160 = vpack.c.b16 %v3620, %v3616
          %v4161 = vpack.c.b16 %v3621, %v3617
          %v4162 = vpack.c.b16 %v3622, %v3618
          %v4163 = vpack.c.b16 %v3623, %v3619
          %v4164 = vpack.c.b16 %v3628, %v3624
          %v4165 = vpack.c.b16 %v3629, %v3625
          %v4166 = vpack.c.b16 %v3630, %v3626
          %v4167 = vpack.c.b16 %v3631, %v3627
          %v4168 = vpack.c.b16 %v3636, %v3632
          %v4169 = vpack.c.b16 %v3637, %v3633
          %v4170 = vpack.c.b16 %v3638, %v3634
          %v4171 = vpack.c.b16 %v3639, %v3635
          %v4172 = vpack.c.b16 %v3644, %v3640
          %v4173 = vpack.c.b16 %v3645, %v3641
          %v4174 = vpack.c.b16 %v3646, %v3642
          %v4175 = vpack.c.b16 %v3647, %v3643
          %v4176 = vpack.c.b16 %v3652, %v3648
          %v4177 = vpack.c.b16 %v3653, %v3649
          %v4178 = vpack.c.b16 %v3654, %v3650
          %v4179 = vpack.c.b16 %v3655, %v3651
          %v4180 = vpack.c.b16 %v3660, %v3656
          %v4181 = vpack.c.b16 %v3661, %v3657
          %v4182 = vpack.c.b16 %v3662, %v3658
          %v4183 = vpack.c.b16 %v3663, %v3659
          %v4184 = vpack.c.b16 %v3668, %v3664
          %v4185 = vpack.c.b16 %v3669, %v3665
          %v4186 = vpack.c.b16 %v3670, %v3666
          %v4187 = vpack.c.b16 %v3671, %v3667
          %v4188 = vpack.c.b16 %v3676, %v3672
          %v4189 = vpack.c.b16 %v3677, %v3673
          %v4190 = vpack.c.b16 %v3678, %v3674
          %v4191 = vpack.c.b16 %v3679, %v3675
          %4704 = vmatprep.subr.bf16.mxu0 %v3709
          %4705 = vmatpush1.bf16.msra.mxu0 %v3708
          %4706 = vmatprep.subr.bf16.mxu0 %v3705
          %4707 = vmatpush1.bf16.msra.mxu0 %v3704
          %4708 = vmatprep.subr.bf16.mxu0 %v3701
          %4709 = vmatpush1.bf16.msra.mxu0 %v3700
          %4710 = vmatprep.subr.bf16.mxu0 %v3697
          %4711 = vmatpush1.bf16.msra.mxu0 %v3696
          %4712 = vmatprep.subr.bf16.mxu0 %v3693
          %4713 = vmatpush1.bf16.msra.mxu0 %v3692
          %4714 = vmatprep.subr.bf16.mxu0 %v3689
          %4715 = vmatpush1.bf16.msra.mxu0 %v3688
          %4716 = vmatprep.subr.bf16.mxu0 %v3685
          %4717 = vmatpush1.bf16.msra.mxu0 %v3684
          %4718 = vmatprep.subr.bf16.mxu0 %v3681
          %4719 = vmatpush1.bf16.msra.mxu0 %v3680
          %4720 = vmatprep.subr.bf16.mxu0 %v3741
          %4721 = vmatpush2.bf16.msra.mxu0 %v3740
          %4722 = vmatprep.subr.bf16.mxu0 %v3737
          %4723 = vmatpush2.bf16.msra.mxu0 %v3736
          %4724 = vmatprep.subr.bf16.mxu0 %v3733
          %4725 = vmatpush2.bf16.msra.mxu0 %v3732
          %4726 = vmatprep.subr.bf16.mxu0 %v3729
          %4727 = vmatpush2.bf16.msra.mxu0 %v3728
          %4728 = vmatprep.subr.bf16.mxu0 %v3725
          %4729 = vmatpush2.bf16.msra.mxu0 %v3724
          %4730 = vmatprep.subr.bf16.mxu0 %v3721
          %4731 = vmatpush2.bf16.msra.mxu0 %v3720
          %4732 = vmatprep.subr.bf16.mxu0 %v3717
          %4733 = vmatpush2.bf16.msra.mxu0 %v3716
          %4734 = vmatprep.subr.bf16.mxu0 %v3713
          %4735 = vmatpush2.bf16.msra.mxu0 %v3712
          %4736 = vmatprep.mubr.bf16.mxu0 %v1595
          %4737 = vmatmul.mubr.bf16.gmra.mxu0 %v1594
          %v4738 = vpop.f32.mrf.mxu0
          %v4739 = vadd.f32 %v2127, %v4738
          %v4740 = vpop.f32.mrf.mxu0
          %v4741 = vadd.f32 %v2131, %v4740
          %v4742 = vpop.f32.mrf.mxu0
          %v4743 = vpop.f32.mrf.mxu0
          %4744 = vdwg.mxu0
          %4745 = vmatprep.subr.bf16.mxu0 %v3773
          %4746 = vmatpush1.bf16.msra.mxu0 %v3772
          %4747 = vmatprep.subr.bf16.mxu0 %v3769
          %4748 = vmatpush1.bf16.msra.mxu0 %v3768
          %4749 = vmatprep.subr.bf16.mxu0 %v3765
          %4750 = vmatpush1.bf16.msra.mxu0 %v3764
          %4751 = vmatprep.subr.bf16.mxu0 %v3761
          %4752 = vmatpush1.bf16.msra.mxu0 %v3760
          %4753 = vmatprep.subr.bf16.mxu0 %v3757
          %4754 = vmatpush1.bf16.msra.mxu0 %v3756
          %4755 = vmatprep.subr.bf16.mxu0 %v3753
          %4756 = vmatpush1.bf16.msra.mxu0 %v3752
          %4757 = vmatprep.subr.bf16.mxu0 %v3749
          %4758 = vmatpush1.bf16.msra.mxu0 %v3748
          %4759 = vmatprep.subr.bf16.mxu0 %v3745
          %4760 = vmatpush1.bf16.msra.mxu0 %v3744
          %4761 = vmatprep.subr.bf16.mxu0 %v3805
          %4762 = vmatpush2.bf16.msra.mxu0 %v3804
          %4763 = vmatprep.subr.bf16.mxu0 %v3801
          %4764 = vmatpush2.bf16.msra.mxu0 %v3800
          %4765 = vmatprep.subr.bf16.mxu0 %v3797
          %4766 = vmatpush2.bf16.msra.mxu0 %v3796
          %4767 = vmatprep.subr.bf16.mxu0 %v3793
          %4768 = vmatpush2.bf16.msra.mxu0 %v3792
          %4769 = vmatprep.subr.bf16.mxu0 %v3789
          %4770 = vmatpush2.bf16.msra.mxu0 %v3788
          %4771 = vmatprep.subr.bf16.mxu0 %v3785
          %4772 = vmatpush2.bf16.msra.mxu0 %v3784
          %4773 = vmatprep.subr.bf16.mxu0 %v3781
          %4774 = vmatpush2.bf16.msra.mxu0 %v3780
          %4775 = vmatprep.subr.bf16.mxu0 %v3777
          %4776 = vmatpush2.bf16.msra.mxu0 %v3776
          %4777 = vmatprep.mubr.bf16.mxu0 %v1597
          %4778 = vmatmul.mubr.bf16.gmra.mxu0 %v1596
          %v4779 = vpop.f32.mrf.mxu0
          %v4780 = vadd.f32 %v4739, %v4779
          %v4781 = vpop.f32.mrf.mxu0
          %v4782 = vadd.f32 %v4741, %v4781
          %v4783 = vpop.f32.mrf.mxu0
          %v4784 = vpop.f32.mrf.mxu0
          %4785 = vdwg.mxu0
          %4786 = vmatprep.subr.bf16.mxu0 %v3837
          %4787 = vmatpush1.bf16.msra.mxu0 %v3836
          %4788 = vmatprep.subr.bf16.mxu0 %v3833
          %4789 = vmatpush1.bf16.msra.mxu0 %v3832
          %4790 = vmatprep.subr.bf16.mxu0 %v3829
          %4791 = vmatpush1.bf16.msra.mxu0 %v3828
          %4792 = vmatprep.subr.bf16.mxu0 %v3825
          %4793 = vmatpush1.bf16.msra.mxu0 %v3824
          %4794 = vmatprep.subr.bf16.mxu0 %v3821
          %4795 = vmatpush1.bf16.msra.mxu0 %v3820
          %4796 = vmatprep.subr.bf16.mxu0 %v3817
          %4797 = vmatpush1.bf16.msra.mxu0 %v3816
          %4798 = vmatprep.subr.bf16.mxu0 %v3813
          %4799 = vmatpush1.bf16.msra.mxu0 %v3812
          %4800 = vmatprep.subr.bf16.mxu0 %v3809
          %4801 = vmatpush1.bf16.msra.mxu0 %v3808
          %4802 = vmatprep.subr.bf16.mxu0 %v3869
          %4803 = vmatpush2.bf16.msra.mxu0 %v3868
          %4804 = vmatprep.subr.bf16.mxu0 %v3865
          %4805 = vmatpush2.bf16.msra.mxu0 %v3864
          %4806 = vmatprep.subr.bf16.mxu0 %v3861
          %4807 = vmatpush2.bf16.msra.mxu0 %v3860
          %4808 = vmatprep.subr.bf16.mxu0 %v3857
          %4809 = vmatpush2.bf16.msra.mxu0 %v3856
          %4810 = vmatprep.subr.bf16.mxu0 %v3853
          %4811 = vmatpush2.bf16.msra.mxu0 %v3852
          %4812 = vmatprep.subr.bf16.mxu0 %v3849
          %4813 = vmatpush2.bf16.msra.mxu0 %v3848
          %4814 = vmatprep.subr.bf16.mxu0 %v3845
          %4815 = vmatpush2.bf16.msra.mxu0 %v3844
          %4816 = vmatprep.subr.bf16.mxu0 %v3841
          %4817 = vmatpush2.bf16.msra.mxu0 %v3840
          %4818 = vmatprep.mubr.bf16.mxu0 %v1599
          %4819 = vmatmul.mubr.bf16.gmra.mxu0 %v1598
          %v4820 = vpop.f32.mrf.mxu0
          %v4821 = vadd.f32 %v4780, %v4820
          %v4822 = vpop.f32.mrf.mxu0
          %v4823 = vadd.f32 %v4782, %v4822
          %v4824 = vpop.f32.mrf.mxu0
          %v4825 = vpop.f32.mrf.mxu0
          %4826 = vdwg.mxu0
          %4827 = vmatprep.subr.bf16.mxu0 %v3901
          %4828 = vmatpush1.bf16.msra.mxu0 %v3900
          %4829 = vmatprep.subr.bf16.mxu0 %v3897
          %4830 = vmatpush1.bf16.msra.mxu0 %v3896
          %4831 = vmatprep.subr.bf16.mxu0 %v3893
          %4832 = vmatpush1.bf16.msra.mxu0 %v3892
          %4833 = vmatprep.subr.bf16.mxu0 %v3889
          %4834 = vmatpush1.bf16.msra.mxu0 %v3888
          %4835 = vmatprep.subr.bf16.mxu0 %v3885
          %4836 = vmatpush1.bf16.msra.mxu0 %v3884
          %4837 = vmatprep.subr.bf16.mxu0 %v3881
          %4838 = vmatpush1.bf16.msra.mxu0 %v3880
          %4839 = vmatprep.subr.bf16.mxu0 %v3877
          %4840 = vmatpush1.bf16.msra.mxu0 %v3876
          %4841 = vmatprep.subr.bf16.mxu0 %v3873
          %4842 = vmatpush1.bf16.msra.mxu0 %v3872
          %4843 = vmatprep.subr.bf16.mxu0 %v3933
          %4844 = vmatpush2.bf16.msra.mxu0 %v3932
          %4845 = vmatprep.subr.bf16.mxu0 %v3929
          %4846 = vmatpush2.bf16.msra.mxu0 %v3928
          %4847 = vmatprep.subr.bf16.mxu0 %v3925
          %4848 = vmatpush2.bf16.msra.mxu0 %v3924
          %4849 = vmatprep.subr.bf16.mxu0 %v3921
          %4850 = vmatpush2.bf16.msra.mxu0 %v3920
          %4851 = vmatprep.subr.bf16.mxu0 %v3917
          %4852 = vmatpush2.bf16.msra.mxu0 %v3916
          %4853 = vmatprep.subr.bf16.mxu0 %v3913
          %4854 = vmatpush2.bf16.msra.mxu0 %v3912
          %4855 = vmatprep.subr.bf16.mxu0 %v3909
          %4856 = vmatpush2.bf16.msra.mxu0 %v3908
          %4857 = vmatprep.subr.bf16.mxu0 %v3905
          %4858 = vmatpush2.bf16.msra.mxu0 %v3904
          %4859 = vmatprep.mubr.bf16.mxu0 %v1601
          %4860 = vmatmul.mubr.bf16.gmra.mxu0 %v1600
          %v4861 = vpop.f32.mrf.mxu0
          %v4862 = vadd.f32 %v4821, %v4861
          %v4863 = vpop.f32.mrf.mxu0
          %v4864 = vadd.f32 %v4823, %v4863
          %v4865 = vpop.f32.mrf.mxu0
          %v4866 = vpop.f32.mrf.mxu0
          %4867 = vdwg.mxu0
          %4868 = vmatprep.subr.bf16.mxu0 %v3965
          %4869 = vmatpush1.bf16.msra.mxu0 %v3964
          %4870 = vmatprep.subr.bf16.mxu0 %v3961
          %4871 = vmatpush1.bf16.msra.mxu0 %v3960
          %4872 = vmatprep.subr.bf16.mxu0 %v3957
          %4873 = vmatpush1.bf16.msra.mxu0 %v3956
          %4874 = vmatprep.subr.bf16.mxu0 %v3953
          %4875 = vmatpush1.bf16.msra.mxu0 %v3952
          %4876 = vmatprep.subr.bf16.mxu0 %v3949
          %4877 = vmatpush1.bf16.msra.mxu0 %v3948
          %4878 = vmatprep.subr.bf16.mxu0 %v3945
          %4879 = vmatpush1.bf16.msra.mxu0 %v3944
          %4880 = vmatprep.subr.bf16.mxu0 %v3941
          %4881 = vmatpush1.bf16.msra.mxu0 %v3940
          %4882 = vmatprep.subr.bf16.mxu0 %v3937
          %4883 = vmatpush1.bf16.msra.mxu0 %v3936
          %4884 = vmatprep.subr.bf16.mxu0 %v3997
          %4885 = vmatpush2.bf16.msra.mxu0 %v3996
          %4886 = vmatprep.subr.bf16.mxu0 %v3993
          %4887 = vmatpush2.bf16.msra.mxu0 %v3992
          %4888 = vmatprep.subr.bf16.mxu0 %v3989
          %4889 = vmatpush2.bf16.msra.mxu0 %v3988
          %4890 = vmatprep.subr.bf16.mxu0 %v3985
          %4891 = vmatpush2.bf16.msra.mxu0 %v3984
          %4892 = vmatprep.subr.bf16.mxu0 %v3981
          %4893 = vmatpush2.bf16.msra.mxu0 %v3980
          %4894 = vmatprep.subr.bf16.mxu0 %v3977
          %4895 = vmatpush2.bf16.msra.mxu0 %v3976
          %4896 = vmatprep.subr.bf16.mxu0 %v3973
          %4897 = vmatpush2.bf16.msra.mxu0 %v3972
          %4898 = vmatprep.subr.bf16.mxu0 %v3969
          %4899 = vmatpush2.bf16.msra.mxu0 %v3968
          %4900 = vmatprep.mubr.bf16.mxu0 %v1603
          %4901 = vmatmul.mubr.bf16.gmra.mxu0 %v1602
          %v4902 = vpop.f32.mrf.mxu0
          %v4903 = vadd.f32 %v4862, %v4902
          %v4904 = vpop.f32.mrf.mxu0
          %v4905 = vadd.f32 %v4864, %v4904
          %v4906 = vpop.f32.mrf.mxu0
          %v4907 = vpop.f32.mrf.mxu0
          %4908 = vdwg.mxu0
          %4909 = vmatprep.subr.bf16.mxu0 %v4029
          %4910 = vmatpush1.bf16.msra.mxu0 %v4028
          %4911 = vmatprep.subr.bf16.mxu0 %v4025
          %4912 = vmatpush1.bf16.msra.mxu0 %v4024
          %4913 = vmatprep.subr.bf16.mxu0 %v4021
          %4914 = vmatpush1.bf16.msra.mxu0 %v4020
          %4915 = vmatprep.subr.bf16.mxu0 %v4017
          %4916 = vmatpush1.bf16.msra.mxu0 %v4016
          %4917 = vmatprep.subr.bf16.mxu0 %v4013
          %4918 = vmatpush1.bf16.msra.mxu0 %v4012
          %4919 = vmatprep.subr.bf16.mxu0 %v4009
          %4920 = vmatpush1.bf16.msra.mxu0 %v4008
          %4921 = vmatprep.subr.bf16.mxu0 %v4005
          %4922 = vmatpush1.bf16.msra.mxu0 %v4004
          %4923 = vmatprep.subr.bf16.mxu0 %v4001
          %4924 = vmatpush1.bf16.msra.mxu0 %v4000
          %4925 = vmatprep.subr.bf16.mxu0 %v4061
          %4926 = vmatpush2.bf16.msra.mxu0 %v4060
          %4927 = vmatprep.subr.bf16.mxu0 %v4057
          %4928 = vmatpush2.bf16.msra.mxu0 %v4056
          %4929 = vmatprep.subr.bf16.mxu0 %v4053
          %4930 = vmatpush2.bf16.msra.mxu0 %v4052
          %4931 = vmatprep.subr.bf16.mxu0 %v4049
          %4932 = vmatpush2.bf16.msra.mxu0 %v4048
          %4933 = vmatprep.subr.bf16.mxu0 %v4045
          %4934 = vmatpush2.bf16.msra.mxu0 %v4044
          %4935 = vmatprep.subr.bf16.mxu0 %v4041
          %4936 = vmatpush2.bf16.msra.mxu0 %v4040
          %4937 = vmatprep.subr.bf16.mxu0 %v4037
          %4938 = vmatpush2.bf16.msra.mxu0 %v4036
          %4939 = vmatprep.subr.bf16.mxu0 %v4033
          %4940 = vmatpush2.bf16.msra.mxu0 %v4032
          %4941 = vmatprep.mubr.bf16.mxu0 %v1605
          %4942 = vmatmul.mubr.bf16.gmra.mxu0 %v1604
          %v4943 = vpop.f32.mrf.mxu0
          %v4944 = vadd.f32 %v4903, %v4943
          %v4945 = vpop.f32.mrf.mxu0
          %v4946 = vadd.f32 %v4905, %v4945
          %v4947 = vpop.f32.mrf.mxu0
          %v4948 = vpop.f32.mrf.mxu0
          %4949 = vdwg.mxu0
          %4950 = vmatprep.subr.bf16.mxu0 %v4093
          %4951 = vmatpush1.bf16.msra.mxu0 %v4092
          %4952 = vmatprep.subr.bf16.mxu0 %v4089
          %4953 = vmatpush1.bf16.msra.mxu0 %v4088
          %4954 = vmatprep.subr.bf16.mxu0 %v4085
          %4955 = vmatpush1.bf16.msra.mxu0 %v4084
          %4956 = vmatprep.subr.bf16.mxu0 %v4081
          %4957 = vmatpush1.bf16.msra.mxu0 %v4080
          %4958 = vmatprep.subr.bf16.mxu0 %v4077
          %4959 = vmatpush1.bf16.msra.mxu0 %v4076
          %4960 = vmatprep.subr.bf16.mxu0 %v4073
          %4961 = vmatpush1.bf16.msra.mxu0 %v4072
          %4962 = vmatprep.subr.bf16.mxu0 %v4069
          %4963 = vmatpush1.bf16.msra.mxu0 %v4068
          %4964 = vmatprep.subr.bf16.mxu0 %v4065
          %4965 = vmatpush1.bf16.msra.mxu0 %v4064
          %4966 = vmatprep.subr.bf16.mxu0 %v4125
          %4967 = vmatpush2.bf16.msra.mxu0 %v4124
          %4968 = vmatprep.subr.bf16.mxu0 %v4121
          %4969 = vmatpush2.bf16.msra.mxu0 %v4120
          %4970 = vmatprep.subr.bf16.mxu0 %v4117
          %4971 = vmatpush2.bf16.msra.mxu0 %v4116
          %4972 = vmatprep.subr.bf16.mxu0 %v4113
          %4973 = vmatpush2.bf16.msra.mxu0 %v4112
          %4974 = vmatprep.subr.bf16.mxu0 %v4109
          %4975 = vmatpush2.bf16.msra.mxu0 %v4108
          %4976 = vmatprep.subr.bf16.mxu0 %v4105
          %4977 = vmatpush2.bf16.msra.mxu0 %v4104
          %4978 = vmatprep.subr.bf16.mxu0 %v4101
          %4979 = vmatpush2.bf16.msra.mxu0 %v4100
          %4980 = vmatprep.subr.bf16.mxu0 %v4097
          %4981 = vmatpush2.bf16.msra.mxu0 %v4096
          %4982 = vmatprep.mubr.bf16.mxu0 %v1607
          %4983 = vmatmul.mubr.bf16.gmra.mxu0 %v1606
          %v4984 = vpop.f32.mrf.mxu0
          %v4985 = vadd.f32 %v4944, %v4984
          %v4986 = vpop.f32.mrf.mxu0
          %v4987 = vadd.f32 %v4946, %v4986
          %v4988 = vpop.f32.mrf.mxu0
          %v4989 = vpop.f32.mrf.mxu0
          %4990 = vdwg.mxu0
          %4991 = vmatprep.subr.bf16.mxu0 %v4157
          %4992 = vmatpush1.bf16.msra.mxu0 %v4156
          %4993 = vmatprep.subr.bf16.mxu0 %v4153
          %4994 = vmatpush1.bf16.msra.mxu0 %v4152
          %4995 = vmatprep.subr.bf16.mxu0 %v4149
          %4996 = vmatpush1.bf16.msra.mxu0 %v4148
          %4997 = vmatprep.subr.bf16.mxu0 %v4145
          %4998 = vmatpush1.bf16.msra.mxu0 %v4144
          %4999 = vmatprep.subr.bf16.mxu0 %v4141
          %5000 = vmatpush1.bf16.msra.mxu0 %v4140
          %5001 = vmatprep.subr.bf16.mxu0 %v4137
          %5002 = vmatpush1.bf16.msra.mxu0 %v4136
          %5003 = vmatprep.subr.bf16.mxu0 %v4133
          %5004 = vmatpush1.bf16.msra.mxu0 %v4132
          %5005 = vmatprep.subr.bf16.mxu0 %v4129
          %5006 = vmatpush1.bf16.msra.mxu0 %v4128
          %5007 = vmatprep.subr.bf16.mxu0 %v4189
          %5008 = vmatpush2.bf16.msra.mxu0 %v4188
          %5009 = vmatprep.subr.bf16.mxu0 %v4185
          %5010 = vmatpush2.bf16.msra.mxu0 %v4184
          %5011 = vmatprep.subr.bf16.mxu0 %v4181
          %5012 = vmatpush2.bf16.msra.mxu0 %v4180
          %5013 = vmatprep.subr.bf16.mxu0 %v4177
          %5014 = vmatpush2.bf16.msra.mxu0 %v4176
          %5015 = vmatprep.subr.bf16.mxu0 %v4173
          %5016 = vmatpush2.bf16.msra.mxu0 %v4172
          %5017 = vmatprep.subr.bf16.mxu0 %v4169
          %5018 = vmatpush2.bf16.msra.mxu0 %v4168
          %5019 = vmatprep.subr.bf16.mxu0 %v4165
          %5020 = vmatpush2.bf16.msra.mxu0 %v4164
          %5021 = vmatprep.subr.bf16.mxu0 %v4161
          %5022 = vmatpush2.bf16.msra.mxu0 %v4160
          %5023 = vmatprep.mubr.bf16.mxu0 %v1609
          %5024 = vmatmul.mubr.bf16.gmra.mxu0 %v1608
          %v5025 = vpop.f32.mrf.mxu0
          %v5026 = vadd.f32 %v4985, %v5025
          %v5027 = vpop.f32.mrf.mxu0
          %v5028 = vadd.f32 %v4987, %v5027
          %v5029 = vpop.f32.mrf.mxu0
          %v5030 = vpop.f32.mrf.mxu0
          %5031 = vdwg.mxu0
          %5032 = vmatprep.subr.bf16.mxu0 %v3711
          %5033 = vmatpush1.bf16.msra.mxu0 %v3710
          %5034 = vmatprep.subr.bf16.mxu0 %v3707
          %5035 = vmatpush1.bf16.msra.mxu0 %v3706
          %5036 = vmatprep.subr.bf16.mxu0 %v3703
          %5037 = vmatpush1.bf16.msra.mxu0 %v3702
          %5038 = vmatprep.subr.bf16.mxu0 %v3699
          %5039 = vmatpush1.bf16.msra.mxu0 %v3698
          %5040 = vmatprep.subr.bf16.mxu0 %v3695
          %5041 = vmatpush1.bf16.msra.mxu0 %v3694
          %5042 = vmatprep.subr.bf16.mxu0 %v3691
          %5043 = vmatpush1.bf16.msra.mxu0 %v3690
          %5044 = vmatprep.subr.bf16.mxu0 %v3687
          %5045 = vmatpush1.bf16.msra.mxu0 %v3686
          %5046 = vmatprep.subr.bf16.mxu0 %v3683
          %5047 = vmatpush1.bf16.msra.mxu0 %v3682
          %5048 = vmatprep.subr.bf16.mxu0 %v3743
          %5049 = vmatpush2.bf16.msra.mxu0 %v3742
          %5050 = vmatprep.subr.bf16.mxu0 %v3739
          %5051 = vmatpush2.bf16.msra.mxu0 %v3738
          %5052 = vmatprep.subr.bf16.mxu0 %v3735
          %5053 = vmatpush2.bf16.msra.mxu0 %v3734
          %5054 = vmatprep.subr.bf16.mxu0 %v3731
          %5055 = vmatpush2.bf16.msra.mxu0 %v3730
          %5056 = vmatprep.subr.bf16.mxu0 %v3727
          %5057 = vmatpush2.bf16.msra.mxu0 %v3726
          %5058 = vmatprep.subr.bf16.mxu0 %v3723
          %5059 = vmatpush2.bf16.msra.mxu0 %v3722
          %5060 = vmatprep.subr.bf16.mxu0 %v3719
          %5061 = vmatpush2.bf16.msra.mxu0 %v3718
          %5062 = vmatprep.subr.bf16.mxu0 %v3715
          %5063 = vmatpush2.bf16.msra.mxu0 %v3714
          %5064 = vmatprep.mubr.bf16.mxu0 %v1595
          %5065 = vmatmul.mubr.bf16.gmra.mxu0 %v1594
          %v5066 = vpop.f32.mrf.mxu0
          %v5067 = vadd.f32 %v2135, %v5066
          %v5068 = vpop.f32.mrf.mxu0
          %v5069 = vadd.f32 %v2139, %v5068
          %v5070 = vpop.f32.mrf.mxu0
          %v5071 = vpop.f32.mrf.mxu0
          %5072 = vdwg.mxu0
          %5073 = vmatprep.subr.bf16.mxu0 %v3775
          %5074 = vmatpush1.bf16.msra.mxu0 %v3774
          %5075 = vmatprep.subr.bf16.mxu0 %v3771
          %5076 = vmatpush1.bf16.msra.mxu0 %v3770
          %5077 = vmatprep.subr.bf16.mxu0 %v3767
          %5078 = vmatpush1.bf16.msra.mxu0 %v3766
          %5079 = vmatprep.subr.bf16.mxu0 %v3763
          %5080 = vmatpush1.bf16.msra.mxu0 %v3762
          %5081 = vmatprep.subr.bf16.mxu0 %v3759
          %5082 = vmatpush1.bf16.msra.mxu0 %v3758
          %5083 = vmatprep.subr.bf16.mxu0 %v3755
          %5084 = vmatpush1.bf16.msra.mxu0 %v3754
          %5085 = vmatprep.subr.bf16.mxu0 %v3751
          %5086 = vmatpush1.bf16.msra.mxu0 %v3750
          %5087 = vmatprep.subr.bf16.mxu0 %v3747
          %5088 = vmatpush1.bf16.msra.mxu0 %v3746
          %5089 = vmatprep.subr.bf16.mxu0 %v3807
          %5090 = vmatpush2.bf16.msra.mxu0 %v3806
          %5091 = vmatprep.subr.bf16.mxu0 %v3803
          %5092 = vmatpush2.bf16.msra.mxu0 %v3802
          %5093 = vmatprep.subr.bf16.mxu0 %v3799
          %5094 = vmatpush2.bf16.msra.mxu0 %v3798
          %5095 = vmatprep.subr.bf16.mxu0 %v3795
          %5096 = vmatpush2.bf16.msra.mxu0 %v3794
          %5097 = vmatprep.subr.bf16.mxu0 %v3791
          %5098 = vmatpush2.bf16.msra.mxu0 %v3790
          %5099 = vmatprep.subr.bf16.mxu0 %v3787
          %5100 = vmatpush2.bf16.msra.mxu0 %v3786
          %5101 = vmatprep.subr.bf16.mxu0 %v3783
          %5102 = vmatpush2.bf16.msra.mxu0 %v3782
          %5103 = vmatprep.subr.bf16.mxu0 %v3779
          %5104 = vmatpush2.bf16.msra.mxu0 %v3778
          %5105 = vmatprep.mubr.bf16.mxu0 %v1597
          %5106 = vmatmul.mubr.bf16.gmra.mxu0 %v1596
          %v5107 = vpop.f32.mrf.mxu0
          %v5108 = vadd.f32 %v5067, %v5107
          %v5109 = vpop.f32.mrf.mxu0
          %v5110 = vadd.f32 %v5069, %v5109
          %v5111 = vpop.f32.mrf.mxu0
          %v5112 = vpop.f32.mrf.mxu0
          %5113 = vdwg.mxu0
          %5114 = vmatprep.subr.bf16.mxu0 %v3839
          %5115 = vmatpush1.bf16.msra.mxu0 %v3838
          %5116 = vmatprep.subr.bf16.mxu0 %v3835
          %5117 = vmatpush1.bf16.msra.mxu0 %v3834
          %5118 = vmatprep.subr.bf16.mxu0 %v3831
          %5119 = vmatpush1.bf16.msra.mxu0 %v3830
          %5120 = vmatprep.subr.bf16.mxu0 %v3827
          %5121 = vmatpush1.bf16.msra.mxu0 %v3826
          %5122 = vmatprep.subr.bf16.mxu0 %v3823
          %5123 = vmatpush1.bf16.msra.mxu0 %v3822
          %5124 = vmatprep.subr.bf16.mxu0 %v3819
          %5125 = vmatpush1.bf16.msra.mxu0 %v3818
          %5126 = vmatprep.subr.bf16.mxu0 %v3815
          %5127 = vmatpush1.bf16.msra.mxu0 %v3814
          %5128 = vmatprep.subr.bf16.mxu0 %v3811
          %5129 = vmatpush1.bf16.msra.mxu0 %v3810
          %5130 = vmatprep.subr.bf16.mxu0 %v3871
          %5131 = vmatpush2.bf16.msra.mxu0 %v3870
          %5132 = vmatprep.subr.bf16.mxu0 %v3867
          %5133 = vmatpush2.bf16.msra.mxu0 %v3866
          %5134 = vmatprep.subr.bf16.mxu0 %v3863
          %5135 = vmatpush2.bf16.msra.mxu0 %v3862
          %5136 = vmatprep.subr.bf16.mxu0 %v3859
          %5137 = vmatpush2.bf16.msra.mxu0 %v3858
          %5138 = vmatprep.subr.bf16.mxu0 %v3855
          %5139 = vmatpush2.bf16.msra.mxu0 %v3854
          %5140 = vmatprep.subr.bf16.mxu0 %v3851
          %5141 = vmatpush2.bf16.msra.mxu0 %v3850
          %5142 = vmatprep.subr.bf16.mxu0 %v3847
          %5143 = vmatpush2.bf16.msra.mxu0 %v3846
          %5144 = vmatprep.subr.bf16.mxu0 %v3843
          %5145 = vmatpush2.bf16.msra.mxu0 %v3842
          %5146 = vmatprep.mubr.bf16.mxu0 %v1599
          %5147 = vmatmul.mubr.bf16.gmra.mxu0 %v1598
          %v5148 = vpop.f32.mrf.mxu0
          %v5149 = vadd.f32 %v5108, %v5148
          %v5150 = vpop.f32.mrf.mxu0
          %v5151 = vadd.f32 %v5110, %v5150
          %v5152 = vpop.f32.mrf.mxu0
          %v5153 = vpop.f32.mrf.mxu0
          %5154 = vdwg.mxu0
          %5155 = vmatprep.subr.bf16.mxu0 %v3903
          %5156 = vmatpush1.bf16.msra.mxu0 %v3902
          %5157 = vmatprep.subr.bf16.mxu0 %v3899
          %5158 = vmatpush1.bf16.msra.mxu0 %v3898
          %5159 = vmatprep.subr.bf16.mxu0 %v3895
          %5160 = vmatpush1.bf16.msra.mxu0 %v3894
          %5161 = vmatprep.subr.bf16.mxu0 %v3891
          %5162 = vmatpush1.bf16.msra.mxu0 %v3890
          %5163 = vmatprep.subr.bf16.mxu0 %v3887
          %5164 = vmatpush1.bf16.msra.mxu0 %v3886
          %5165 = vmatprep.subr.bf16.mxu0 %v3883
          %5166 = vmatpush1.bf16.msra.mxu0 %v3882
          %5167 = vmatprep.subr.bf16.mxu0 %v3879
          %5168 = vmatpush1.bf16.msra.mxu0 %v3878
          %5169 = vmatprep.subr.bf16.mxu0 %v3875
          %5170 = vmatpush1.bf16.msra.mxu0 %v3874
          %5171 = vmatprep.subr.bf16.mxu0 %v3935
          %5172 = vmatpush2.bf16.msra.mxu0 %v3934
          %5173 = vmatprep.subr.bf16.mxu0 %v3931
          %5174 = vmatpush2.bf16.msra.mxu0 %v3930
          %5175 = vmatprep.subr.bf16.mxu0 %v3927
          %5176 = vmatpush2.bf16.msra.mxu0 %v3926
          %5177 = vmatprep.subr.bf16.mxu0 %v3923
          %5178 = vmatpush2.bf16.msra.mxu0 %v3922
          %5179 = vmatprep.subr.bf16.mxu0 %v3919
          %5180 = vmatpush2.bf16.msra.mxu0 %v3918
          %5181 = vmatprep.subr.bf16.mxu0 %v3915
          %5182 = vmatpush2.bf16.msra.mxu0 %v3914
          %5183 = vmatprep.subr.bf16.mxu0 %v3911
          %5184 = vmatpush2.bf16.msra.mxu0 %v3910
          %5185 = vmatprep.subr.bf16.mxu0 %v3907
          %5186 = vmatpush2.bf16.msra.mxu0 %v3906
          %5187 = vmatprep.mubr.bf16.mxu0 %v1601
          %5188 = vmatmul.mubr.bf16.gmra.mxu0 %v1600
          %v5189 = vpop.f32.mrf.mxu0
          %v5190 = vadd.f32 %v5149, %v5189
          %v5191 = vpop.f32.mrf.mxu0
          %v5192 = vadd.f32 %v5151, %v5191
          %v5193 = vpop.f32.mrf.mxu0
          %v5194 = vpop.f32.mrf.mxu0
          %5195 = vdwg.mxu0
          %5196 = vmatprep.subr.bf16.mxu0 %v3967
          %5197 = vmatpush1.bf16.msra.mxu0 %v3966
          %5198 = vmatprep.subr.bf16.mxu0 %v3963
          %5199 = vmatpush1.bf16.msra.mxu0 %v3962
          %5200 = vmatprep.subr.bf16.mxu0 %v3959
          %5201 = vmatpush1.bf16.msra.mxu0 %v3958
          %5202 = vmatprep.subr.bf16.mxu0 %v3955
          %5203 = vmatpush1.bf16.msra.mxu0 %v3954
          %5204 = vmatprep.subr.bf16.mxu0 %v3951
          %5205 = vmatpush1.bf16.msra.mxu0 %v3950
          %5206 = vmatprep.subr.bf16.mxu0 %v3947
          %5207 = vmatpush1.bf16.msra.mxu0 %v3946
          %5208 = vmatprep.subr.bf16.mxu0 %v3943
          %5209 = vmatpush1.bf16.msra.mxu0 %v3942
          %5210 = vmatprep.subr.bf16.mxu0 %v3939
          %5211 = vmatpush1.bf16.msra.mxu0 %v3938
          %5212 = vmatprep.subr.bf16.mxu0 %v3999
          %5213 = vmatpush2.bf16.msra.mxu0 %v3998
          %5214 = vmatprep.subr.bf16.mxu0 %v3995
          %5215 = vmatpush2.bf16.msra.mxu0 %v3994
          %5216 = vmatprep.subr.bf16.mxu0 %v3991
          %5217 = vmatpush2.bf16.msra.mxu0 %v3990
          %5218 = vmatprep.subr.bf16.mxu0 %v3987
          %5219 = vmatpush2.bf16.msra.mxu0 %v3986
          %5220 = vmatprep.subr.bf16.mxu0 %v3983
          %5221 = vmatpush2.bf16.msra.mxu0 %v3982
          %5222 = vmatprep.subr.bf16.mxu0 %v3979
          %5223 = vmatpush2.bf16.msra.mxu0 %v3978
          %5224 = vmatprep.subr.bf16.mxu0 %v3975
          %5225 = vmatpush2.bf16.msra.mxu0 %v3974
          %5226 = vmatprep.subr.bf16.mxu0 %v3971
          %5227 = vmatpush2.bf16.msra.mxu0 %v3970
          %5228 = vmatprep.mubr.bf16.mxu0 %v1603
          %5229 = vmatmul.mubr.bf16.gmra.mxu0 %v1602
          %v5230 = vpop.f32.mrf.mxu0
          %v5231 = vadd.f32 %v5190, %v5230
          %v5232 = vpop.f32.mrf.mxu0
          %v5233 = vadd.f32 %v5192, %v5232
          %v5234 = vpop.f32.mrf.mxu0
          %v5235 = vpop.f32.mrf.mxu0
          %5236 = vdwg.mxu0
          %5237 = vmatprep.subr.bf16.mxu0 %v4031
          %5238 = vmatpush1.bf16.msra.mxu0 %v4030
          %5239 = vmatprep.subr.bf16.mxu0 %v4027
          %5240 = vmatpush1.bf16.msra.mxu0 %v4026
          %5241 = vmatprep.subr.bf16.mxu0 %v4023
          %5242 = vmatpush1.bf16.msra.mxu0 %v4022
          %5243 = vmatprep.subr.bf16.mxu0 %v4019
          %5244 = vmatpush1.bf16.msra.mxu0 %v4018
          %5245 = vmatprep.subr.bf16.mxu0 %v4015
          %5246 = vmatpush1.bf16.msra.mxu0 %v4014
          %5247 = vmatprep.subr.bf16.mxu0 %v4011
          %5248 = vmatpush1.bf16.msra.mxu0 %v4010
          %5249 = vmatprep.subr.bf16.mxu0 %v4007
          %5250 = vmatpush1.bf16.msra.mxu0 %v4006
          %5251 = vmatprep.subr.bf16.mxu0 %v4003
          %5252 = vmatpush1.bf16.msra.mxu0 %v4002
          %5253 = vmatprep.subr.bf16.mxu0 %v4063
          %5254 = vmatpush2.bf16.msra.mxu0 %v4062
          %5255 = vmatprep.subr.bf16.mxu0 %v4059
          %5256 = vmatpush2.bf16.msra.mxu0 %v4058
          %5257 = vmatprep.subr.bf16.mxu0 %v4055
          %5258 = vmatpush2.bf16.msra.mxu0 %v4054
          %5259 = vmatprep.subr.bf16.mxu0 %v4051
          %5260 = vmatpush2.bf16.msra.mxu0 %v4050
          %5261 = vmatprep.subr.bf16.mxu0 %v4047
          %5262 = vmatpush2.bf16.msra.mxu0 %v4046
          %5263 = vmatprep.subr.bf16.mxu0 %v4043
          %5264 = vmatpush2.bf16.msra.mxu0 %v4042
          %5265 = vmatprep.subr.bf16.mxu0 %v4039
          %5266 = vmatpush2.bf16.msra.mxu0 %v4038
          %5267 = vmatprep.subr.bf16.mxu0 %v4035
          %5268 = vmatpush2.bf16.msra.mxu0 %v4034
          %5269 = vmatprep.mubr.bf16.mxu0 %v1605
          %5270 = vmatmul.mubr.bf16.gmra.mxu0 %v1604
          %v5271 = vpop.f32.mrf.mxu0
          %v5272 = vadd.f32 %v5231, %v5271
          %v5273 = vpop.f32.mrf.mxu0
          %v5274 = vadd.f32 %v5233, %v5273
          %v5275 = vpop.f32.mrf.mxu0
          %v5276 = vpop.f32.mrf.mxu0
          %5277 = vdwg.mxu0
          %5278 = vmatprep.subr.bf16.mxu0 %v4095
          %5279 = vmatpush1.bf16.msra.mxu0 %v4094
          %5280 = vmatprep.subr.bf16.mxu0 %v4091
          %5281 = vmatpush1.bf16.msra.mxu0 %v4090
          %5282 = vmatprep.subr.bf16.mxu0 %v4087
          %5283 = vmatpush1.bf16.msra.mxu0 %v4086
          %5284 = vmatprep.subr.bf16.mxu0 %v4083
          %5285 = vmatpush1.bf16.msra.mxu0 %v4082
          %5286 = vmatprep.subr.bf16.mxu0 %v4079
          %5287 = vmatpush1.bf16.msra.mxu0 %v4078
          %5288 = vmatprep.subr.bf16.mxu0 %v4075
          %5289 = vmatpush1.bf16.msra.mxu0 %v4074
          %5290 = vmatprep.subr.bf16.mxu0 %v4071
          %5291 = vmatpush1.bf16.msra.mxu0 %v4070
          %5292 = vmatprep.subr.bf16.mxu0 %v4067
          %5293 = vmatpush1.bf16.msra.mxu0 %v4066
          %5294 = vmatprep.subr.bf16.mxu0 %v4127
          %5295 = vmatpush2.bf16.msra.mxu0 %v4126
          %5296 = vmatprep.subr.bf16.mxu0 %v4123
          %5297 = vmatpush2.bf16.msra.mxu0 %v4122
          %5298 = vmatprep.subr.bf16.mxu0 %v4119
          %5299 = vmatpush2.bf16.msra.mxu0 %v4118
          %5300 = vmatprep.subr.bf16.mxu0 %v4115
          %5301 = vmatpush2.bf16.msra.mxu0 %v4114
          %5302 = vmatprep.subr.bf16.mxu0 %v4111
          %5303 = vmatpush2.bf16.msra.mxu0 %v4110
          %5304 = vmatprep.subr.bf16.mxu0 %v4107
          %5305 = vmatpush2.bf16.msra.mxu0 %v4106
          %5306 = vmatprep.subr.bf16.mxu0 %v4103
          %5307 = vmatpush2.bf16.msra.mxu0 %v4102
          %5308 = vmatprep.subr.bf16.mxu0 %v4099
          %5309 = vmatpush2.bf16.msra.mxu0 %v4098
          %5310 = vmatprep.mubr.bf16.mxu0 %v1607
          %5311 = vmatmul.mubr.bf16.gmra.mxu0 %v1606
          %v5312 = vpop.f32.mrf.mxu0
          %v5313 = vadd.f32 %v5272, %v5312
          %v5314 = vpop.f32.mrf.mxu0
          %v5315 = vadd.f32 %v5274, %v5314
          %v5316 = vpop.f32.mrf.mxu0
          %v5317 = vpop.f32.mrf.mxu0
          %5318 = vdwg.mxu0
          %5319 = vmatprep.subr.bf16.mxu0 %v4159
          %5320 = vmatpush1.bf16.msra.mxu0 %v4158
          %5321 = vmatprep.subr.bf16.mxu0 %v4155
          %5322 = vmatpush1.bf16.msra.mxu0 %v4154
          %5323 = vmatprep.subr.bf16.mxu0 %v4151
          %5324 = vmatpush1.bf16.msra.mxu0 %v4150
          %5325 = vmatprep.subr.bf16.mxu0 %v4147
          %5326 = vmatpush1.bf16.msra.mxu0 %v4146
          %5327 = vmatprep.subr.bf16.mxu0 %v4143
          %5328 = vmatpush1.bf16.msra.mxu0 %v4142
          %5329 = vmatprep.subr.bf16.mxu0 %v4139
          %5330 = vmatpush1.bf16.msra.mxu0 %v4138
          %5331 = vmatprep.subr.bf16.mxu0 %v4135
          %5332 = vmatpush1.bf16.msra.mxu0 %v4134
          %5333 = vmatprep.subr.bf16.mxu0 %v4131
          %5334 = vmatpush1.bf16.msra.mxu0 %v4130
          %5335 = vmatprep.subr.bf16.mxu0 %v4191
          %5336 = vmatpush2.bf16.msra.mxu0 %v4190
          %5337 = vmatprep.subr.bf16.mxu0 %v4187
          %5338 = vmatpush2.bf16.msra.mxu0 %v4186
          %5339 = vmatprep.subr.bf16.mxu0 %v4183
          %5340 = vmatpush2.bf16.msra.mxu0 %v4182
          %5341 = vmatprep.subr.bf16.mxu0 %v4179
          %5342 = vmatpush2.bf16.msra.mxu0 %v4178
          %5343 = vmatprep.subr.bf16.mxu0 %v4175
          %5344 = vmatpush2.bf16.msra.mxu0 %v4174
          %5345 = vmatprep.subr.bf16.mxu0 %v4171
          %5346 = vmatpush2.bf16.msra.mxu0 %v4170
          %5347 = vmatprep.subr.bf16.mxu0 %v4167
          %5348 = vmatpush2.bf16.msra.mxu0 %v4166
          %5349 = vmatprep.subr.bf16.mxu0 %v4163
          %5350 = vmatpush2.bf16.msra.mxu0 %v4162
          %5351 = vmatprep.mubr.bf16.mxu0 %v1609
          %5352 = vmatmul.mubr.bf16.gmra.mxu0 %v1608
          %v5353 = vpop.f32.mrf.mxu0
          %v5354 = vadd.f32 %v5313, %v5353
          %v5355 = vpop.f32.mrf.mxu0
          %v5356 = vadd.f32 %v5315, %v5355
          %v5357 = vpop.f32.mrf.mxu0
          %v5358 = vpop.f32.mrf.mxu0
          %5359 = vdwg.mxu0
          %v5360 = vmax.f32 %v5026, 0.0
          %v5361 = vmax.f32 %v5028, 0.0
          %v5362 = vmax.f32 %v5354, 0.0
          %v5363 = vmax.f32 %v5356, 0.0
          %v5364 = vld [vmem:[#allocation12] sm:$0xf]
          %v5366 = vlaneseq
          %v5367 = vshrl.u32 %v5366, 7
          %v5368 = vsub.s32 0, %v5367
          %v5369 = vrot.slane %v5364, %v5368
          %v5370 = vlaneseq
          %v5371 = vshrl.u32 %v5370, 7
          %v5372 = vsub.s32 1, %v5371
          %v5373 = vrot.slane %v5364, %v5372
          %v5374 = vlaneseq
          %v5375 = vshrl.u32 %v5374, 7
          %v5376 = vsub.s32 2, %v5375
          %v5377 = vrot.slane %v5364, %v5376
          %v5378 = vlaneseq
          %v5379 = vshrl.u32 %v5378, 7
          %v5380 = vsub.s32 3, %v5379
          %v5381 = vrot.slane %v5364, %v5380
          %v5386 = vmul.f32 %v5360, %v5369
          %v5387 = vmul.f32 %v5361, %v5373
          %v5388 = vmul.f32 %v5362, %v5377
          %v5389 = vmul.f32 %v5363, %v5381
          %vm5390 = vcmask 1041408
          %v5391 = vsel %vm5390, %v5386, 0.0
          %v5392 = vsel %vm5390, %v5387, 0.0
          %v5393 = vadd.f32 %v5391, %v5392
          %v5394 = vsel %vm5390, %v5388, 0.0
          %v5395 = vadd.f32 %v5393, %v5394
          %v5396 = vsel %vm5390, %v5389, 0.0
          %v5397 = vadd.f32 %v5395, %v5396
          %5398 = vadd.xlane.f32.xlu0 %v5397
          %v5399 = vpop.xlane.xlu0 %5398
          %v5400 = vld [vmem:[#allocation3] sm:$0x1]
          %v5402 = vlaneseq
          %v5403 = vshrl.u32 %v5402, 7
          %v5404 = vsub.s32 0, %v5403
          %v5405 = vrot.slane %v5400, %v5404
          %v5407 = vadd.f32 %v5399, %v5405
          %v5408 = vxor.u32 %v5407, 2147483648
          %v5409 = vmul.f32 %v5408, 1.442695
          %v5410 = vpow.pop %v5409
          %v5411 = vadd.f32 %v5410, 1.0
          %v5412 = vrcp.pop %v5411
          %v5413 = vmul.f32 1.0, %v5412
          %v5414 = vmul.f32 %v5413, 5.0
          %vm5415 = vcmask 1024
          %5416 = vst.msk [vmem:[%s634] sm:$0x3] %vm5415, %v5414
        $region125: #{forward.1} parent=92 // pred_fallthru
          _
        %p5417 = scmp.lt.s32.totalorder %s29, 0
        %s5418 = scalar_select %p5417, %s29, 0
        %s5419 = smul.addr %s5418, 2
        %s5420 = scalar_lea.vmem %s9, %s5419
        // Predicated region
        $region126: #{forward.1} parent=92 // pred_check
          %p5421 = pneg %p263
        $region127: #{forward.1} parent=92 // pred_check_branch
          %5423 = sbr.rel (%p5421) target = $region129
        $region128: #{forward.1} parent=92 // pred_region
          _
        $region129: #{forward.1} parent=92 // pred_fallthru
          _
        // Predicated region
        $region130: #{forward.1} parent=92 // pred_check
          %p5424 = pneg %p263
        $region131: #{forward.1} parent=92 // pred_check_branch
          %5426 = sbr.rel (%p5424) target = $region133
        $region132: #{forward.1} parent=92 // pred_region
          %p5427 = scmp.lt.s32.totalorder %s29, 0
          %s5428 = scalar_select %p5427, %s29, 0
          %s5429 = smul.addr %s5428, 2
          %s5430 = scalar_lea.vmem %s9, %s5429
        $region133: #{forward.1} parent=92 // pred_fallthru
          _
      $region93: #{forward.1} parent=5 // pred_fallthru
        _
      %p5431 = scmp.le.s32.totalorder 2, %s20
      // Predicated region
      $region134: #{forward.1} parent=5 // pred_check
        %p5432 = pneg %p5431
      $region135: #{forward.1} parent=5 // pred_check_branch
        %5434 = sbr.rel (%p5432) target = $region137
      $region136: #{forward.1} parent=5 // pred_region
        %s5435 = ssub.s32 %s20, 2
      $region137: #{forward.1} parent=5 // pred_fallthru
        _
    $region6: #{forward.1} parent=1 // loop_footer
      %s24 = sadd.s32 1, %s20
    $region7: #{forward.1} parent=1 // loop_footer_branch
      %19 = sbr.rel target = $region3
    $region8: #{forward.1} parent=1 // loop_exit
      _
    %5436 = vsyncpa [#allocation6], 1
    %s5437 = scalar_lea.sflag [#allocation6], 1
    %5438 = vsyncpa %s5437, 1
    %5439 = vsyncpa [#allocation8], 1
    %5440 = vsyncpa [#allocation11], 1

</llo_original>
